<compile_context>
chip_gen: v7x
topology: tpu7x:2x2x1
jax: 0.10.0
libtpu: 0.0.40
codegen_flags: <defaults>
</compile_context>

<pallas_src>
from functools import reduce

import jax
import jax.numpy as jnp
from jax.experimental import pallas as pl
from jax.experimental.pallas import tpu as pltpu

# ---------------------------------------------------------------------------
# Synthetic "conf" (small shapes consistent with the module)
# ---------------------------------------------------------------------------
CALO_IMG_SHAPE = (1, 16, 16)                              # conf['mapper']['calo_img_shape']
IMGPIXELS = reduce(lambda a, b: a * b, CALO_IMG_SHAPE)    # 256

H1 = 100                                                  # true hidden widths from the module
H2 = 512
H3 = 256
D_OUT = 1


def _pick_h1p():
    """Pad the 100-wide hidden layer to the MXU width of this chip generation."""
    try:
        kind = jax.devices()[0].device_kind.lower()
    except Exception:
        return 128
    # v6e / v7x: 2x256^2 MXU -> pad to 256 so layer-1 N and layer-2 K fill the array.
    # v5e and older: 128-wide MXU -> 128 is native, padding further would add real work.
    return 256 if ("v6" in kind or "v7" in kind) else 128


H1P = _pick_h1p()                                         # lane-padded hidden (100 -> 128/256)


def _choose_tm(batch):
    """Batch tile: as big as VMEM comfortably allows, but keep the grid >= 2 blocks
    for large batches (v7x megacore) and avoid huge padding waste for small ones."""
    for tm in (1024, 512):
        if batch >= 2 * tm:
            return tm
    return 256


# ---------------------------------------------------------------------------
# Pallas kernel: whole 4-layer MLP for one batch tile
# ---------------------------------------------------------------------------
def _leaky_relu(x, slope=0.2):
    return jnp.where(x > 0, x, slope * x)


def discriminator_kernel(x_ref,
                         w1_ref, b1_ref,
                         w2_ref, b2_ref,
                         w3_ref, b3_ref,
                         w4_ref, b4_ref,
                         o_ref):
    # x arrives as f32; cast to bf16 on the VPU (free slot) for the MXU.
    x = x_ref[...].astype(jnp.bfloat16)                                   # (TM, 256)

    # Linear(256 -> H1P[=100 padded]) + LeakyReLU   (Dropout == identity at inference)
    h = jnp.dot(x, w1_ref[...], preferred_element_type=jnp.float32) + b1_ref[...]
    h = _leaky_relu(h).astype(jnp.bfloat16)                               # (TM, H1P) bf16

    # Linear(H1P -> 512) + LeakyReLU
    h = jnp.dot(h, w2_ref[...], preferred_element_type=jnp.float32) + b2_ref[...]
    h = _leaky_relu(h).astype(jnp.bfloat16)                               # (TM, 512) bf16

    # Linear(512 -> 256) + LeakyReLU
    h = jnp.dot(h, w3_ref[...], preferred_element_type=jnp.float32) + b3_ref[...]
    h = _leaky_relu(h)                                                    # (TM, 256) f32

    # Linear(256 -> 1) + Sigmoid on the VPU/XLU: only one real output column, so a
    # broadcast multiply + lane reduce beats a 99%-zero-padded MXU matmul, and the
    # result is already a lane-dense (1, TM) row.
    logit = jnp.sum(h * w4_ref[...], axis=-1)                             # (TM,) f32
    row = logit[None, :] + b4_ref[...]                                    # (1, TM)
    o_ref[0] = jax.nn.sigmoid(row)                                        # store (1, TM)


# ---------------------------------------------------------------------------
# Wrapper
# ---------------------------------------------------------------------------
def discriminator_forward(x, params):
    """x: (..., *CALO_IMG_SHAPE) or (B, IMGPIXELS) -> (B, 1) float32."""
    (w1, b1), (w2, b2), (w3, b3), (w4, b4) = params

    # mirror `x.view(-1, imgpixels).float()`; no bf16 cast / pad here (done in-kernel).
    x = x.reshape(-1, IMGPIXELS).astype(jnp.float32)
    B = x.shape[0]

    tm = _choose_tm(B)
    G = (B + tm - 1) // tm            # grid length; last tile may be partial (masked)
    Bp = G * tm

    def rep(arr):                     # weight/bias blocks: full array, resident across grid
        nd = arr.ndim
        return pl.BlockSpec(arr.shape, lambda i, _nd=nd: (0,) * _nd)

    flops = 2 * Bp * (IMGPIXELS * H1P + H1P * H2 + H2 * H3) + 2 * Bp * H3
    bytes_accessed = (
        Bp * IMGPIXELS * 4                                            # x (f32)
        + 2 * (IMGPIXELS * H1P + H1P * H2 + H2 * H3)                  # weights (bf16)
        + 4 * (H1P + H2 + H3 + H3 + 1)                                # biases + w4 row (f32)
        + Bp * 4                                                      # output (f32)
    )
    cost = pl.CostEstimate(flops=flops,
                           transcendentals=Bp,                        # sigmoid
                           bytes_accessed=bytes_accessed)

    out = pl.pallas_call(
        discriminator_kernel,
        out_shape=jax.ShapeDtypeStruct((G, 1, tm), jnp.float32),
        grid_spec=pltpu.PrefetchScalarGridSpec(
            num_scalar_prefetch=0,
            grid=(G,),
            in_specs=[
                pl.BlockSpec((tm, IMGPIXELS), lambda i: (i, 0)),      # x tile (f32)
                rep(w1), rep(b1),
                rep(w2), rep(b2),
                rep(w3), rep(b3),
                rep(w4), rep(b4),
            ],
            out_specs=pl.BlockSpec((1, 1, tm), lambda i: (i, 0, 0)),  # lane-dense over batch
        ),
        compiler_params=pltpu.CompilerParams(
            dimension_semantics=("parallel",),
            vmem_limit_bytes=32 * 1024 * 1024),
        cost_estimate=cost,
    )(x, w1, b1, w2, b2, w3, b3, w4, b4)

    # (G, 1, TM) -> (Bp,) -> strip masked/padded rows -> (B, 1)
    return out.reshape(Bp)[:B].reshape(B, D_OUT)


# ---------------------------------------------------------------------------
# Deterministic parameter init (synthetic; mirrors nn.Linear shapes, then padded)
# ---------------------------------------------------------------------------
def init_params(key):
    def uniform(k, shape, bound):
        return jax.random.uniform(k, shape, jnp.float32, -bound, bound)

    (k1w, k1b, k2w, k2b, k3w, k3b, k4w, k4b) = jax.random.split(key, 8)

    # Layer 1: 256 -> 100, output lanes padded to H1P (zero pad => exact math)
    s = 1.0 / (IMGPIXELS ** 0.5)
    w1 = jnp.pad(uniform(k1w, (IMGPIXELS, H1), s),
                 ((0, 0), (0, H1P - H1))).astype(jnp.bfloat16)
    b1 = jnp.pad(uniform(k1b, (1, H1), s), ((0, 0), (0, H1P - H1)))

    # Layer 2: 100 -> 512, input rows padded to H1P (padded activations are exactly 0)
    s = 1.0 / (H1 ** 0.5)
    w2 = jnp.pad(uniform(k2w, (H1, H2), s),
                 ((0, H1P - H1), (0, 0))).astype(jnp.bfloat16)
    b2 = uniform(k2b, (1, H2), s)

    # Layer 3: 512 -> 256
    s = 1.0 / (H2 ** 0.5)
    w3 = uniform(k3w, (H2, H3), s).astype(jnp.bfloat16)
    b3 = uniform(k3b, (1, H3), s)

    # Layer 4: 256 -> 1, stored as an f32 row (1, 256) for the VPU path; scalar bias (1,1)
    s = 1.0 / (H3 ** 0.5)
    w4 = uniform(k4w, (1, H3), s)
    b4 = uniform(k4b, (1, 1), s)

    return [(w1, b1), (w2, b2), (w3, b3), (w4, b4)]


def reference_forward(x, params):
    """Same math as the kernel (bf16 matmul inputs, f32 accumulate, VPU final layer)."""
    (w1, b1), (w2, b2), (w3, b3), (w4, b4) = params
    h = x.reshape(-1, IMGPIXELS).astype(jnp.float32)
    h = jnp.dot(h.astype(jnp.bfloat16), w1, preferred_element_type=jnp.float32) + b1
    h = jnp.where(h > 0, h, 0.2 * h).astype(jnp.bfloat16)
    h = jnp.dot(h, w2, preferred_element_type=jnp.float32) + b2
    h = jnp.where(h > 0, h, 0.2 * h).astype(jnp.bfloat16)
    h = jnp.dot(h, w3, preferred_element_type=jnp.float32) + b3
    h = jnp.where(h > 0, h, 0.2 * h)                                      # f32
    logit = jnp.sum(h * w4, axis=-1, keepdims=True) + b4                  # (B, 1)
    return jax.nn.sigmoid(logit).astype(jnp.float32)


if __name__ == "__main__":
    key = jax.random.PRNGKey(0)
    kx, kx2, kp = jax.random.split(key, 3)
    params = init_params(kp)

    # Small batch of calo images (B, 1, 16, 16), as the module's view(-1, imgpixels) implies.
    B = 2
    x = jax.random.normal(kx, (B, *CALO_IMG_SHAPE), jnp.float32)
    out = jax.block_until_ready(discriminator_forward(x, params))
    ref = reference_forward(x, params)
    assert out.shape == (B, D_OUT), out.shape
    assert out.dtype == jnp.float32
    assert jnp.allclose(out, ref, atol=2e-3, rtol=2e-3), float(jnp.max(jnp.abs(out - ref)))

    # Larger batch: multiple grid steps + a partial (masked) last batch tile.
    B2 = 600
    x2 = jax.random.normal(kx2, (B2, *CALO_IMG_SHAPE), jnp.float32)
    out2 = jax.block_until_ready(discriminator_forward(x2, params))
    ref2 = reference_forward(x2, params)
    assert out2.shape == (B2, D_OUT), out2.shape
    assert jnp.allclose(out2, ref2, atol=2e-3, rtol=2e-3), float(jnp.max(jnp.abs(out2 - ref2)))

    print("KERNEL_OK")
</pallas_src>

<mosaic_0001>
module attributes {stable_mosaic.version = 11 : i64} {
  func.func @discriminator_kernel(%arg0: i32, %arg1: memref<256x256xf32, #tpu.memory_space<vmem>>, %arg2: memref<256x128xbf16, #tpu.memory_space<vmem>>, %arg3: memref<1x128xf32, #tpu.memory_space<vmem>>, %arg4: memref<128x512xbf16, #tpu.memory_space<vmem>>, %arg5: memref<1x512xf32, #tpu.memory_space<vmem>>, %arg6: memref<512x256xbf16, #tpu.memory_space<vmem>>, %arg7: memref<1x256xf32, #tpu.memory_space<vmem>>, %arg8: memref<1x256xf32, #tpu.memory_space<vmem>>, %arg9: memref<1x1xf32, #tpu.memory_space<vmem>>, %arg10: memref<1x1x256xf32, #tpu.memory_space<vmem>>) attributes {dimension_semantics = [#tpu.dimension_semantics<parallel>], iteration_bounds = array<i64: 1>, scalar_prefetch = 0 : i64, scratch_operands = 0 : i64, tpu.core_type = #tpu.core_type<tc>, window_params = [{transform_indices = @transform_0, window_bounds = array<i64: 256, 256>}, {pipeline_mode = #tpu.pipeline_mode<synchronous>, transform_indices = @transform_1, window_bounds = array<i64: 256, 128>}, {pipeline_mode = #tpu.pipeline_mode<synchronous>, transform_indices = @transform_2, window_bounds = array<i64: 1, 128>}, {pipeline_mode = #tpu.pipeline_mode<synchronous>, transform_indices = @transform_3, window_bounds = array<i64: 128, 512>}, {pipeline_mode = #tpu.pipeline_mode<synchronous>, transform_indices = @transform_4, window_bounds = array<i64: 1, 512>}, {pipeline_mode = #tpu.pipeline_mode<synchronous>, transform_indices = @transform_5, window_bounds = array<i64: 512, 256>}, {pipeline_mode = #tpu.pipeline_mode<synchronous>, transform_indices = @transform_6, window_bounds = array<i64: 1, 256>}, {pipeline_mode = #tpu.pipeline_mode<synchronous>, transform_indices = @transform_7, window_bounds = array<i64: 1, 256>}, {pipeline_mode = #tpu.pipeline_mode<synchronous>, transform_indices = @transform_8, window_bounds = array<i64: 1, 1>}, {transform_indices = @transform_9, window_bounds = array<i64: 1, 1, 256>}]} {
    %c0 = arith.constant 0 : index
    %c0_0 = arith.constant 0 : index
    %0 = vector.load %arg1[%c0, %c0_0] : memref<256x256xf32, #tpu.memory_space<vmem>>, vector<256x256xf32>
    %1 = arith.truncf %0 : vector<256x256xf32> to vector<256x256xbf16>
    %c0_1 = arith.constant 0 : index
    %c0_2 = arith.constant 0 : index
    %2 = vector.load %arg2[%c0_1, %c0_2] : memref<256x128xbf16, #tpu.memory_space<vmem>>, vector<256x128xbf16>
    %cst = arith.constant dense<0.000000e+00> : vector<256x128xf32>
    %3 = tpu.matmul %1, %2, %cst {dimension_numbers = #tpu.dot_dimension_numbers<[1], [0], [0], [1], [0, 0, 1, 1], [], []>} : vector<256x256xbf16>, vector<256x128xbf16>, vector<256x128xf32> -> vector<256x128xf32>
    %c0_3 = arith.constant 0 : index
    %c0_4 = arith.constant 0 : index
    %4 = vector.load %arg3[%c0_3, %c0_4] : memref<1x128xf32, #tpu.memory_space<vmem>>, vector<1x128xf32>
    %5 = vector.broadcast %4 : vector<1x128xf32> to vector<256x128xf32>
    %6 = arith.addf %3, %5 : vector<256x128xf32>
    %cst_5 = arith.constant 0.000000e+00 : f32
    %7 = vector.broadcast %cst_5 : f32 to vector<256x128xf32>
    %8 = arith.cmpf ogt, %6, %7 : vector<256x128xf32>
    %cst_6 = arith.constant 2.000000e-01 : f32
    %9 = vector.broadcast %cst_6 : f32 to vector<256x128xf32>
    %10 = arith.mulf %9, %6 : vector<256x128xf32>
    %11 = arith.select %8, %6, %10 : vector<256x128xi1>, vector<256x128xf32>
    %12 = arith.truncf %11 : vector<256x128xf32> to vector<256x128xbf16>
    %c0_7 = arith.constant 0 : index
    %c0_8 = arith.constant 0 : index
    %13 = vector.load %arg4[%c0_7, %c0_8] : memref<128x512xbf16, #tpu.memory_space<vmem>>, vector<128x512xbf16>
    %cst_9 = arith.constant dense<0.000000e+00> : vector<256x512xf32>
    %14 = tpu.matmul %12, %13, %cst_9 {dimension_numbers = #tpu.dot_dimension_numbers<[1], [0], [0], [1], [0, 0, 1, 1], [], []>} : vector<256x128xbf16>, vector<128x512xbf16>, vector<256x512xf32> -> vector<256x512xf32>
    %c0_10 = arith.constant 0 : index
    %c0_11 = arith.constant 0 : index
    %15 = vector.load %arg5[%c0_10, %c0_11] : memref<1x512xf32, #tpu.memory_space<vmem>>, vector<1x512xf32>
    %16 = vector.broadcast %15 : vector<1x512xf32> to vector<256x512xf32>
    %17 = arith.addf %14, %16 : vector<256x512xf32>
    %cst_12 = arith.constant 0.000000e+00 : f32
    %18 = vector.broadcast %cst_12 : f32 to vector<256x512xf32>
    %19 = arith.cmpf ogt, %17, %18 : vector<256x512xf32>
    %cst_13 = arith.constant 2.000000e-01 : f32
    %20 = vector.broadcast %cst_13 : f32 to vector<256x512xf32>
    %21 = arith.mulf %20, %17 : vector<256x512xf32>
    %22 = arith.select %19, %17, %21 : vector<256x512xi1>, vector<256x512xf32>
    %23 = arith.truncf %22 : vector<256x512xf32> to vector<256x512xbf16>
    %c0_14 = arith.constant 0 : index
    %c0_15 = arith.constant 0 : index
    %24 = vector.load %arg6[%c0_14, %c0_15] : memref<512x256xbf16, #tpu.memory_space<vmem>>, vector<512x256xbf16>
    %cst_16 = arith.constant dense<0.000000e+00> : vector<256x256xf32>
    %25 = tpu.matmul %23, %24, %cst_16 {dimension_numbers = #tpu.dot_dimension_numbers<[1], [0], [0], [1], [0, 0, 1, 1], [], []>} : vector<256x512xbf16>, vector<512x256xbf16>, vector<256x256xf32> -> vector<256x256xf32>
    %c0_17 = arith.constant 0 : index
    %c0_18 = arith.constant 0 : index
    %26 = vector.load %arg7[%c0_17, %c0_18] : memref<1x256xf32, #tpu.memory_space<vmem>>, vector<1x256xf32>
    %27 = vector.broadcast %26 : vector<1x256xf32> to vector<256x256xf32>
    %28 = arith.addf %25, %27 : vector<256x256xf32>
    %cst_19 = arith.constant 0.000000e+00 : f32
    %29 = vector.broadcast %cst_19 : f32 to vector<256x256xf32>
    %30 = arith.cmpf ogt, %28, %29 : vector<256x256xf32>
    %cst_20 = arith.constant 2.000000e-01 : f32
    %31 = vector.broadcast %cst_20 : f32 to vector<256x256xf32>
    %32 = arith.mulf %31, %28 : vector<256x256xf32>
    %33 = arith.select %30, %28, %32 : vector<256x256xi1>, vector<256x256xf32>
    %c0_21 = arith.constant 0 : index
    %c0_22 = arith.constant 0 : index
    %34 = vector.load %arg8[%c0_21, %c0_22] : memref<1x256xf32, #tpu.memory_space<vmem>>, vector<1x256xf32>
    %35 = vector.broadcast %34 : vector<1x256xf32> to vector<256x256xf32>
    %36 = arith.mulf %33, %35 : vector<256x256xf32>
    %cst_23 = arith.constant dense<0.000000e+00> : vector<256xf32>
    %37 = vector.multi_reduction <add>, %36, %cst_23 [1] : vector<256x256xf32> to vector<256xf32>
    %38 = vector.shape_cast %37 : vector<256xf32> to vector<1x256xf32>
    %c0_24 = arith.constant 0 : index
    %c0_25 = arith.constant 0 : index
    %39 = vector.load %arg9[%c0_24, %c0_25] : memref<1x1xf32, #tpu.memory_space<vmem>>, vector<1x1xf32>
    %40 = vector.broadcast %39 : vector<1x1xf32> to vector<1x256xf32>
    %41 = arith.addf %38, %40 : vector<1x256xf32>
    %42 = arith.negf %41 : vector<1x256xf32>
    %43 = math.exp %42 : vector<1x256xf32>
    %cst_26 = arith.constant 1.000000e+00 : f32
    %44 = vector.broadcast %cst_26 : f32 to vector<1x256xf32>
    %45 = arith.addf %44, %43 : vector<1x256xf32>
    %46 = arith.divf %44, %45 : vector<1x256xf32>
    %c0_27 = arith.constant 0 : index
    %c0_28 = arith.constant 0 : index
    %c0_29 = arith.constant 0 : index
    %47 = vector.load %arg10[%c0_27, %c0_28, %c0_29] : memref<1x1x256xf32, #tpu.memory_space<vmem>>, vector<1x1x256xf32>
    %48 = vector.shape_cast %47 : vector<1x1x256xf32> to vector<1x256xf32>
    %49 = vector.shape_cast %46 : vector<1x256xf32> to vector<1x1x256xf32>
    tpu.vector_store %arg10[%c0_27, %c0_28, %c0_29], %49 {strides = array<i32>} : memref<1x1x256xf32, #tpu.memory_space<vmem>>, vector<1x1x256xf32>,
    return
  }
  func.func @transform_0(%arg0: i32) -> (i32, i32) {
    %c0_i32 = arith.constant 0 : i32
    %c0_i32_0 = arith.constant 0 : i32
    return %arg0, %c0_i32 : i32, i32
  }
  func.func @transform_1(%arg0: i32) -> (i32, i32) {
    %c0_i32 = arith.constant 0 : i32
    %c0_i32_0 = arith.constant 0 : i32
    %c0_i32_1 = arith.constant 0 : i32
    return %c0_i32, %c0_i32_0 : i32, i32
  }
  func.func @transform_2(%arg0: i32) -> (i32, i32) {
    %c0_i32 = arith.constant 0 : i32
    %c0_i32_0 = arith.constant 0 : i32
    %c0_i32_1 = arith.constant 0 : i32
    return %c0_i32, %c0_i32_0 : i32, i32
  }
  func.func @transform_3(%arg0: i32) -> (i32, i32) {
    %c0_i32 = arith.constant 0 : i32
    %c0_i32_0 = arith.constant 0 : i32
    %c0_i32_1 = arith.constant 0 : i32
    return %c0_i32, %c0_i32_0 : i32, i32
  }
  func.func @transform_4(%arg0: i32) -> (i32, i32) {
    %c0_i32 = arith.constant 0 : i32
    %c0_i32_0 = arith.constant 0 : i32
    %c0_i32_1 = arith.constant 0 : i32
    return %c0_i32, %c0_i32_0 : i32, i32
  }
  func.func @transform_5(%arg0: i32) -> (i32, i32) {
    %c0_i32 = arith.constant 0 : i32
    %c0_i32_0 = arith.constant 0 : i32
    %c0_i32_1 = arith.constant 0 : i32
    return %c0_i32, %c0_i32_0 : i32, i32
  }
  func.func @transform_6(%arg0: i32) -> (i32, i32) {
    %c0_i32 = arith.constant 0 : i32
    %c0_i32_0 = arith.constant 0 : i32
    %c0_i32_1 = arith.constant 0 : i32
    return %c0_i32, %c0_i32_0 : i32, i32
  }
  func.func @transform_7(%arg0: i32) -> (i32, i32) {
    %c0_i32 = arith.constant 0 : i32
    %c0_i32_0 = arith.constant 0 : i32
    %c0_i32_1 = arith.constant 0 : i32
    return %c0_i32, %c0_i32_0 : i32, i32
  }
  func.func @transform_8(%arg0: i32) -> (i32, i32) {
    %c0_i32 = arith.constant 0 : i32
    %c0_i32_0 = arith.constant 0 : i32
    %c0_i32_1 = arith.constant 0 : i32
    return %c0_i32, %c0_i32_0 : i32, i32
  }
  func.func @transform_9(%arg0: i32) -> (i32, i32, i32) {
    %c0_i32 = arith.constant 0 : i32
    %c0_i32_0 = arith.constant 0 : i32
    %c0_i32_1 = arith.constant 0 : i32
    return %arg0, %c0_i32, %c0_i32_0 : i32, i32, i32
  }
}

</mosaic_0001>

<llo_original>
// kernel: tpu_custom_call.1
$region0: #{tpu_custom_call.1}
  #allocation0 [shape = 'u32[]', space=smem, size = 0x4, offset = 0x4, fixed_abs, tag = 'smem constant byte address 0x4 - core index']
  #allocation1 [shape = 'u32[144,128]{1,0:T(1,128)}', space=vmem, size = 0x12000, scoped, tag = 'internal scratch']
  #allocation2 [shape = 'f32[1,1]{1,0:T(1,128)S(1)}', space=vmem, size = 0x200, scoped, tag = 'scoped memory for tpu_custom_call.1']
  %s0 = inlined_call_operand.hbm [shape: f32[2,256], index: 0, kind: input, shape index: {}]
  %s1 = inlined_call_operand.hbm [shape: bf16[256,128], index: 1, kind: input, shape index: {}]
  %s2 = inlined_call_operand.vmem [shape: f32[1,128], index: 2, kind: input, shape index: {}]
  %s3 = inlined_call_operand.hbm [shape: bf16[128,512], index: 3, kind: input, shape index: {}]
  %s4 = inlined_call_operand.vmem [shape: f32[1,512], index: 4, kind: input, shape index: {}]
  %s5 = inlined_call_operand.hbm [shape: bf16[512,256], index: 5, kind: input, shape index: {}]
  %s6 = inlined_call_operand.vmem [shape: f32[1,256], index: 6, kind: input, shape index: {}]
  %s7 = inlined_call_operand.vmem [shape: f32[1,256], index: 7, kind: input, shape index: {}]
  %s8 = inlined_call_operand.<no memory space> [shape: f32[1,1], index: 8, kind: input, shape index: {}]
  %s9 = inlined_call_operand.hbm [shape: f32[1,1,256], index: 9, kind: output, shape index: {}]
  %s10 = sld [smem:[#allocation0]]
  $region62: #{tpu_custom_call.1} parent=0
    _
  %s12 = ssub.s32 1, %s10
  %s13 = scalar_select 0, %s12, %s10
  %v14 = vstv %s8
  %15 = vst [vmem:[#allocation2] sm:$0x1] %v14
  $region1: #{tpu_custom_call.1} parent=0
    #allocation3 [shape = 'u8[262144]{0}', space=vmem, size = 0x40000, scoped, tag = 'input window, operand 0, single buffered']
    #allocation4 [shape = 's32[1]{0}', space=sflag, size = 0x4, scoped, tag = 'scoped memory for tpu_custom_call.1']
    #allocation5 [shape = 's32[1]{0}', space=sflag, size = 0x4, scoped, tag = 'scoped memory for tpu_custom_call.1']
    #allocation6 [shape = 'u8[65536]{0}', space=vmem, size = 0x10000, scoped, tag = 'input window, operand 1, single buffered']
    #allocation7 [shape = 's32[1]{0}', space=sflag, size = 0x4, scoped, tag = 'scoped memory for tpu_custom_call.1']
    #allocation8 [shape = 'u8[131072]{0}', space=vmem, size = 0x20000, scoped, tag = 'input window, operand 3, single buffered']
    #allocation9 [shape = 'u8[262144]{0}', space=vmem, size = 0x40000, scoped, tag = 'input window, operand 5, single buffered']
    #allocation10 [shape = 's32[1]{0}', space=sflag, size = 0x4, scoped, tag = 'scoped memory for tpu_custom_call.1']
    #allocation11 [shape = 'u8[1024]{0}', space=vmem, size = 0x400, scoped, tag = 'output window, operand 0, single buffered']
    %16 = vsyncpa [#allocation4], 0
    %17 = vsyncpa [#allocation7], 0
    %18 = vsyncpa [#allocation10], 0
    %19 = vsyncpa [#allocation5], 0
    // Predicated region
    $region2: #{tpu_custom_call.1} parent=1 // pred_check
      _
    $region3: #{tpu_custom_call.1} parent=1 // pred_check_branch
      %21 = sbr.rel (0) target = $region5
    $region4: #{tpu_custom_call.1} parent=1 // pred_region
      %s23 = ssub.s32 8192, 64
      %24 = vsyncadd [#allocation4], %s23
      %s25 = sshll.u32 [#allocation3], 4
      %s26 = int_to_ptr.vmem [resolvable:$true] %s25
      %31 = dma.hbm_to_vmem [thread:$0]  %s0, 64, %s26, [#allocation4], 64, 64, 4
    $region5: #{tpu_custom_call.1} parent=1 // pred_fallthru
      _
    // Predicated region
    $region6: #{tpu_custom_call.1} parent=1 // pred_check
      _
    $region7: #{tpu_custom_call.1} parent=1 // pred_check_branch
      %33 = sbr.rel (0) target = $region9
    $region8: #{tpu_custom_call.1} parent=1 // pred_region
      %s35 = ssub.s32 2048, 2048
      %36 = vsyncadd [#allocation7], %s35
      %s37 = sshll.u32 [#allocation6], 4
      %s38 = int_to_ptr.vmem [resolvable:$true] %s37
      %43 = dma.hbm_to_vmem [thread:$0]  %s1, 2048, %s38, [#allocation7], 64, 64, 4
    $region9: #{tpu_custom_call.1} parent=1 // pred_fallthru
      _
    // Predicated region
    $region10: #{tpu_custom_call.1} parent=1 // pred_check
      _
    $region11: #{tpu_custom_call.1} parent=1 // pred_check_branch
      %45 = sbr.rel (0) target = $region13
    $region12: #{tpu_custom_call.1} parent=1 // pred_region
      _
    $region13: #{tpu_custom_call.1} parent=1 // pred_fallthru
      _
    // Predicated region
    $region14: #{tpu_custom_call.1} parent=1 // pred_check
      _
    $region15: #{tpu_custom_call.1} parent=1 // pred_check_branch
      %47 = sbr.rel (0) target = $region17
    $region16: #{tpu_custom_call.1} parent=1 // pred_region
      %s49 = ssub.s32 4096, 4096
      %50 = vsyncadd [#allocation7], %s49
      %s51 = sshll.u32 [#allocation8], 4
      %s52 = int_to_ptr.vmem [resolvable:$true] %s51
      %57 = dma.hbm_to_vmem [thread:$0]  %s3, 4096, %s52, [#allocation7], 256, 256, 16
    $region17: #{tpu_custom_call.1} parent=1 // pred_fallthru
      _
    // Predicated region
    $region18: #{tpu_custom_call.1} parent=1 // pred_check
      _
    $region19: #{tpu_custom_call.1} parent=1 // pred_check_branch
      %59 = sbr.rel (0) target = $region21
    $region20: #{tpu_custom_call.1} parent=1 // pred_region
      _
    $region21: #{tpu_custom_call.1} parent=1 // pred_fallthru
      _
    // Predicated region
    $region22: #{tpu_custom_call.1} parent=1 // pred_check
      _
    $region23: #{tpu_custom_call.1} parent=1 // pred_check_branch
      %61 = sbr.rel (0) target = $region25
    $region24: #{tpu_custom_call.1} parent=1 // pred_region
      %s63 = ssub.s32 8192, 8192
      %64 = vsyncadd [#allocation10], %s63
      %s65 = sshll.u32 [#allocation9], 4
      %s66 = int_to_ptr.vmem [resolvable:$true] %s65
      %71 = dma.hbm_to_vmem [thread:$0]  %s5, 8192, %s66, [#allocation10], 128, 128, 8
    $region25: #{tpu_custom_call.1} parent=1 // pred_fallthru
      _
    // Predicated region
    $region26: #{tpu_custom_call.1} parent=1 // pred_check
      _
    $region27: #{tpu_custom_call.1} parent=1 // pred_check_branch
      %73 = sbr.rel (0) target = $region29
    $region28: #{tpu_custom_call.1} parent=1 // pred_region
      _
    $region29: #{tpu_custom_call.1} parent=1 // pred_fallthru
      _
    // Predicated region
    $region30: #{tpu_custom_call.1} parent=1 // pred_check
      _
    $region31: #{tpu_custom_call.1} parent=1 // pred_check_branch
      %75 = sbr.rel (0) target = $region33
    $region32: #{tpu_custom_call.1} parent=1 // pred_region
      _
    $region33: #{tpu_custom_call.1} parent=1 // pred_fallthru
      _
    // Predicated region
    $region34: #{tpu_custom_call.1} parent=1 // pred_check
      _
    $region35: #{tpu_custom_call.1} parent=1 // pred_check_branch
      %77 = sbr.rel (0) target = $region37
    $region36: #{tpu_custom_call.1} parent=1 // pred_region
      _
    $region37: #{tpu_custom_call.1} parent=1 // pred_fallthru
      _
    // Predicated region
    $region38: #{tpu_custom_call.1} parent=1 // pred_check
      _
    $region39: #{tpu_custom_call.1} parent=1 // pred_check_branch
      %79 = sbr.rel (0) target = $region41
    $region40: #{tpu_custom_call.1} parent=1 // pred_region
      %80 = dma.done [#allocation4], 8192
    $region41: #{tpu_custom_call.1} parent=1 // pred_fallthru
      _
    // Predicated region
    $region42: #{tpu_custom_call.1} parent=1 // pred_check
      _
    $region43: #{tpu_custom_call.1} parent=1 // pred_check_branch
      %82 = sbr.rel (0) target = $region45
    $region44: #{tpu_custom_call.1} parent=1 // pred_region
      %83 = dma.done [#allocation7], 2048
    $region45: #{tpu_custom_call.1} parent=1 // pred_fallthru
      _
    // Predicated region
    $region46: #{tpu_custom_call.1} parent=1 // pred_check
      _
    $region47: #{tpu_custom_call.1} parent=1 // pred_check_branch
      %85 = sbr.rel (0) target = $region49
    $region48: #{tpu_custom_call.1} parent=1 // pred_region
      %86 = dma.done [#allocation7], 4096
    $region49: #{tpu_custom_call.1} parent=1 // pred_fallthru
      _
    // Predicated region
    $region50: #{tpu_custom_call.1} parent=1 // pred_check
      _
    $region51: #{tpu_custom_call.1} parent=1 // pred_check_branch
      %88 = sbr.rel (0) target = $region53
    $region52: #{tpu_custom_call.1} parent=1 // pred_region
      %89 = dma.done [#allocation10], 8192
    $region53: #{tpu_custom_call.1} parent=1 // pred_fallthru
      _
    %v91 = vld [vmem:[#allocation3] sm:$0xf]
    %v92 = vld [vmem:[#allocation3 + $0x4] sm:$0xf]
    %v93 = vld [vmem:[#allocation3 + $0x8] sm:$0xf]
    %v94 = vld [vmem:[#allocation3 + $0xc] sm:$0xf]
    %v95 = vld [vmem:[#allocation3 + $0x10] sm:$0xf]
    %v96 = vld [vmem:[#allocation3 + $0x14] sm:$0xf]
    %v97 = vld [vmem:[#allocation3 + $0x18] sm:$0xf]
    %v98 = vld [vmem:[#allocation3 + $0x1c] sm:$0xf]
    %v99 = vld [vmem:[#allocation3 + $0x20] sm:$0xf]
    %v100 = vld [vmem:[#allocation3 + $0x24] sm:$0xf]
    %v101 = vld [vmem:[#allocation3 + $0x28] sm:$0xf]
    %v102 = vld [vmem:[#allocation3 + $0x2c] sm:$0xf]
    %v103 = vld [vmem:[#allocation3 + $0x30] sm:$0xf]
    %v104 = vld [vmem:[#allocation3 + $0x34] sm:$0xf]
    %v105 = vld [vmem:[#allocation3 + $0x38] sm:$0xf]
    %v106 = vld [vmem:[#allocation3 + $0x3c] sm:$0xf]
    %v107 = vld [vmem:[#allocation3 + $0x40] sm:$0xf]
    %v108 = vld [vmem:[#allocation3 + $0x44] sm:$0xf]
    %v109 = vld [vmem:[#allocation3 + $0x48] sm:$0xf]
    %v110 = vld [vmem:[#allocation3 + $0x4c] sm:$0xf]
    %v111 = vld [vmem:[#allocation3 + $0x50] sm:$0xf]
    %v112 = vld [vmem:[#allocation3 + $0x54] sm:$0xf]
    %v113 = vld [vmem:[#allocation3 + $0x58] sm:$0xf]
    %v114 = vld [vmem:[#allocation3 + $0x5c] sm:$0xf]
    %v115 = vld [vmem:[#allocation3 + $0x60] sm:$0xf]
    %v116 = vld [vmem:[#allocation3 + $0x64] sm:$0xf]
    %v117 = vld [vmem:[#allocation3 + $0x68] sm:$0xf]
    %v118 = vld [vmem:[#allocation3 + $0x6c] sm:$0xf]
    %v119 = vld [vmem:[#allocation3 + $0x70] sm:$0xf]
    %v120 = vld [vmem:[#allocation3 + $0x74] sm:$0xf]
    %v121 = vld [vmem:[#allocation3 + $0x78] sm:$0xf]
    %v122 = vld [vmem:[#allocation3 + $0x7c] sm:$0xf]
    %v123 = vld [vmem:[#allocation3 + $0x80] sm:$0xf]
    %v124 = vld [vmem:[#allocation3 + $0x84] sm:$0xf]
    %v125 = vld [vmem:[#allocation3 + $0x88] sm:$0xf]
    %v126 = vld [vmem:[#allocation3 + $0x8c] sm:$0xf]
    %v127 = vld [vmem:[#allocation3 + $0x90] sm:$0xf]
    %v128 = vld [vmem:[#allocation3 + $0x94] sm:$0xf]
    %v129 = vld [vmem:[#allocation3 + $0x98] sm:$0xf]
    %v130 = vld [vmem:[#allocation3 + $0x9c] sm:$0xf]
    %v131 = vld [vmem:[#allocation3 + $0xa0] sm:$0xf]
    %v132 = vld [vmem:[#allocation3 + $0xa4] sm:$0xf]
    %v133 = vld [vmem:[#allocation3 + $0xa8] sm:$0xf]
    %v134 = vld [vmem:[#allocation3 + $0xac] sm:$0xf]
    %v135 = vld [vmem:[#allocation3 + $0xb0] sm:$0xf]
    %v136 = vld [vmem:[#allocation3 + $0xb4] sm:$0xf]
    %v137 = vld [vmem:[#allocation3 + $0xb8] sm:$0xf]
    %v138 = vld [vmem:[#allocation3 + $0xbc] sm:$0xf]
    %v139 = vld [vmem:[#allocation3 + $0xc0] sm:$0xf]
    %v140 = vld [vmem:[#allocation3 + $0xc4] sm:$0xf]
    %v141 = vld [vmem:[#allocation3 + $0xc8] sm:$0xf]
    %v142 = vld [vmem:[#allocation3 + $0xcc] sm:$0xf]
    %v143 = vld [vmem:[#allocation3 + $0xd0] sm:$0xf]
    %v144 = vld [vmem:[#allocation3 + $0xd4] sm:$0xf]
    %v145 = vld [vmem:[#allocation3 + $0xd8] sm:$0xf]
    %v146 = vld [vmem:[#allocation3 + $0xdc] sm:$0xf]
    %v147 = vld [vmem:[#allocation3 + $0xe0] sm:$0xf]
    %v148 = vld [vmem:[#allocation3 + $0xe4] sm:$0xf]
    %v149 = vld [vmem:[#allocation3 + $0xe8] sm:$0xf]
    %v150 = vld [vmem:[#allocation3 + $0xec] sm:$0xf]
    %v151 = vld [vmem:[#allocation3 + $0xf0] sm:$0xf]
    %v152 = vld [vmem:[#allocation3 + $0xf4] sm:$0xf]
    %v153 = vld [vmem:[#allocation3 + $0xf8] sm:$0xf]
    %v154 = vld [vmem:[#allocation3 + $0xfc] sm:$0xf]
    %v155 = vld [vmem:[#allocation3 + $0x100] sm:$0xf]
    %v156 = vld [vmem:[#allocation3 + $0x104] sm:$0xf]
    %v157 = vld [vmem:[#allocation3 + $0x108] sm:$0xf]
    %v158 = vld [vmem:[#allocation3 + $0x10c] sm:$0xf]
    %v159 = vld [vmem:[#allocation3 + $0x110] sm:$0xf]
    %v160 = vld [vmem:[#allocation3 + $0x114] sm:$0xf]
    %v161 = vld [vmem:[#allocation3 + $0x118] sm:$0xf]
    %v162 = vld [vmem:[#allocation3 + $0x11c] sm:$0xf]
    %v163 = vld [vmem:[#allocation3 + $0x120] sm:$0xf]
    %v164 = vld [vmem:[#allocation3 + $0x124] sm:$0xf]
    %v165 = vld [vmem:[#allocation3 + $0x128] sm:$0xf]
    %v166 = vld [vmem:[#allocation3 + $0x12c] sm:$0xf]
    %v167 = vld [vmem:[#allocation3 + $0x130] sm:$0xf]
    %v168 = vld [vmem:[#allocation3 + $0x134] sm:$0xf]
    %v169 = vld [vmem:[#allocation3 + $0x138] sm:$0xf]
    %v170 = vld [vmem:[#allocation3 + $0x13c] sm:$0xf]
    %v171 = vld [vmem:[#allocation3 + $0x140] sm:$0xf]
    %v172 = vld [vmem:[#allocation3 + $0x144] sm:$0xf]
    %v173 = vld [vmem:[#allocation3 + $0x148] sm:$0xf]
    %v174 = vld [vmem:[#allocation3 + $0x14c] sm:$0xf]
    %v175 = vld [vmem:[#allocation3 + $0x150] sm:$0xf]
    %v176 = vld [vmem:[#allocation3 + $0x154] sm:$0xf]
    %v177 = vld [vmem:[#allocation3 + $0x158] sm:$0xf]
    %v178 = vld [vmem:[#allocation3 + $0x15c] sm:$0xf]
    %v179 = vld [vmem:[#allocation3 + $0x160] sm:$0xf]
    %v180 = vld [vmem:[#allocation3 + $0x164] sm:$0xf]
    %v181 = vld [vmem:[#allocation3 + $0x168] sm:$0xf]
    %v182 = vld [vmem:[#allocation3 + $0x16c] sm:$0xf]
    %v183 = vld [vmem:[#allocation3 + $0x170] sm:$0xf]
    %v184 = vld [vmem:[#allocation3 + $0x174] sm:$0xf]
    %v185 = vld [vmem:[#allocation3 + $0x178] sm:$0xf]
    %v186 = vld [vmem:[#allocation3 + $0x17c] sm:$0xf]
    %v187 = vld [vmem:[#allocation3 + $0x180] sm:$0xf]
    %v188 = vld [vmem:[#allocation3 + $0x184] sm:$0xf]
    %v189 = vld [vmem:[#allocation3 + $0x188] sm:$0xf]
    %v190 = vld [vmem:[#allocation3 + $0x18c] sm:$0xf]
    %v191 = vld [vmem:[#allocation3 + $0x190] sm:$0xf]
    %v192 = vld [vmem:[#allocation3 + $0x194] sm:$0xf]
    %v193 = vld [vmem:[#allocation3 + $0x198] sm:$0xf]
    %v194 = vld [vmem:[#allocation3 + $0x19c] sm:$0xf]
    %v195 = vld [vmem:[#allocation3 + $0x1a0] sm:$0xf]
    %v196 = vld [vmem:[#allocation3 + $0x1a4] sm:$0xf]
    %v197 = vld [vmem:[#allocation3 + $0x1a8] sm:$0xf]
    %v198 = vld [vmem:[#allocation3 + $0x1ac] sm:$0xf]
    %v199 = vld [vmem:[#allocation3 + $0x1b0] sm:$0xf]
    %v200 = vld [vmem:[#allocation3 + $0x1b4] sm:$0xf]
    %v201 = vld [vmem:[#allocation3 + $0x1b8] sm:$0xf]
    %v202 = vld [vmem:[#allocation3 + $0x1bc] sm:$0xf]
    %v203 = vld [vmem:[#allocation3 + $0x1c0] sm:$0xf]
    %v204 = vld [vmem:[#allocation3 + $0x1c4] sm:$0xf]
    %v205 = vld [vmem:[#allocation3 + $0x1c8] sm:$0xf]
    %v206 = vld [vmem:[#allocation3 + $0x1cc] sm:$0xf]
    %v207 = vld [vmem:[#allocation3 + $0x1d0] sm:$0xf]
    %v208 = vld [vmem:[#allocation3 + $0x1d4] sm:$0xf]
    %v209 = vld [vmem:[#allocation3 + $0x1d8] sm:$0xf]
    %v210 = vld [vmem:[#allocation3 + $0x1dc] sm:$0xf]
    %v211 = vld [vmem:[#allocation3 + $0x1e0] sm:$0xf]
    %v212 = vld [vmem:[#allocation3 + $0x1e4] sm:$0xf]
    %v213 = vld [vmem:[#allocation3 + $0x1e8] sm:$0xf]
    %v214 = vld [vmem:[#allocation3 + $0x1ec] sm:$0xf]
    %v215 = vld [vmem:[#allocation3 + $0x1f0] sm:$0xf]
    %v216 = vld [vmem:[#allocation3 + $0x1f4] sm:$0xf]
    %v217 = vld [vmem:[#allocation3 + $0x1f8] sm:$0xf]
    %v218 = vld [vmem:[#allocation3 + $0x1fc] sm:$0xf]
    %v347 = vcombine.low %v91, %v92
    %v348 = vcombine.low %v93, %v94
    %v350 = vunpack.c.l.s4 1983009808
    %v351 = vunpack.c.0.s8 %v350
    %v352 = vlaneseq
    %v353 = vshrl.u32 %v352, 7
    %v354 = vsub.s32 %v351, %v353
    %v355 = vrot.slane %v347, %v354
    %v357 = vunpack.c.l.s4 1983009808
    %v358 = vunpack.c.0.s8 %v357
    %v359 = vlaneseq
    %v360 = vshrl.u32 %v359, 7
    %v361 = vsub.s32 %v358, %v360
    %v362 = vrot.slane %v348, %v361
    %v363 = vcombine.low %v355, %v362
    %v364 = vcombine.high %v355, %v362
    %v365 = vcombine.low %v95, %v96
    %v366 = vcombine.low %v97, %v98
    %v368 = vunpack.c.l.s4 1983009808
    %v369 = vunpack.c.0.s8 %v368
    %v370 = vlaneseq
    %v371 = vshrl.u32 %v370, 7
    %v372 = vsub.s32 %v369, %v371
    %v373 = vrot.slane %v365, %v372
    %v375 = vunpack.c.l.s4 1983009808
    %v376 = vunpack.c.0.s8 %v375
    %v377 = vlaneseq
    %v378 = vshrl.u32 %v377, 7
    %v379 = vsub.s32 %v376, %v378
    %v380 = vrot.slane %v366, %v379
    %v381 = vcombine.low %v373, %v380
    %v382 = vcombine.high %v373, %v380
    %v383 = vcombine.low %v99, %v100
    %v384 = vcombine.low %v101, %v102
    %v386 = vunpack.c.l.s4 1983009808
    %v387 = vunpack.c.0.s8 %v386
    %v388 = vlaneseq
    %v389 = vshrl.u32 %v388, 7
    %v390 = vsub.s32 %v387, %v389
    %v391 = vrot.slane %v383, %v390
    %v393 = vunpack.c.l.s4 1983009808
    %v394 = vunpack.c.0.s8 %v393
    %v395 = vlaneseq
    %v396 = vshrl.u32 %v395, 7
    %v397 = vsub.s32 %v394, %v396
    %v398 = vrot.slane %v384, %v397
    %v399 = vcombine.low %v391, %v398
    %v400 = vcombine.high %v391, %v398
    %v401 = vcombine.low %v103, %v104
    %v402 = vcombine.low %v105, %v106
    %v404 = vunpack.c.l.s4 1983009808
    %v405 = vunpack.c.0.s8 %v404
    %v406 = vlaneseq
    %v407 = vshrl.u32 %v406, 7
    %v408 = vsub.s32 %v405, %v407
    %v409 = vrot.slane %v401, %v408
    %v411 = vunpack.c.l.s4 1983009808
    %v412 = vunpack.c.0.s8 %v411
    %v413 = vlaneseq
    %v414 = vshrl.u32 %v413, 7
    %v415 = vsub.s32 %v412, %v414
    %v416 = vrot.slane %v402, %v415
    %v417 = vcombine.low %v409, %v416
    %v418 = vcombine.high %v409, %v416
    %v419 = vcombine.low %v107, %v108
    %v420 = vcombine.low %v109, %v110
    %v422 = vunpack.c.l.s4 1983009808
    %v423 = vunpack.c.0.s8 %v422
    %v424 = vlaneseq
    %v425 = vshrl.u32 %v424, 7
    %v426 = vsub.s32 %v423, %v425
    %v427 = vrot.slane %v419, %v426
    %v429 = vunpack.c.l.s4 1983009808
    %v430 = vunpack.c.0.s8 %v429
    %v431 = vlaneseq
    %v432 = vshrl.u32 %v431, 7
    %v433 = vsub.s32 %v430, %v432
    %v434 = vrot.slane %v420, %v433
    %v435 = vcombine.low %v427, %v434
    %v436 = vcombine.high %v427, %v434
    %v437 = vcombine.low %v111, %v112
    %v438 = vcombine.low %v113, %v114
    %v440 = vunpack.c.l.s4 1983009808
    %v441 = vunpack.c.0.s8 %v440
    %v442 = vlaneseq
    %v443 = vshrl.u32 %v442, 7
    %v444 = vsub.s32 %v441, %v443
    %v445 = vrot.slane %v437, %v444
    %v447 = vunpack.c.l.s4 1983009808
    %v448 = vunpack.c.0.s8 %v447
    %v449 = vlaneseq
    %v450 = vshrl.u32 %v449, 7
    %v451 = vsub.s32 %v448, %v450
    %v452 = vrot.slane %v438, %v451
    %v453 = vcombine.low %v445, %v452
    %v454 = vcombine.high %v445, %v452
    %v455 = vcombine.low %v115, %v116
    %v456 = vcombine.low %v117, %v118
    %v458 = vunpack.c.l.s4 1983009808
    %v459 = vunpack.c.0.s8 %v458
    %v460 = vlaneseq
    %v461 = vshrl.u32 %v460, 7
    %v462 = vsub.s32 %v459, %v461
    %v463 = vrot.slane %v455, %v462
    %v465 = vunpack.c.l.s4 1983009808
    %v466 = vunpack.c.0.s8 %v465
    %v467 = vlaneseq
    %v468 = vshrl.u32 %v467, 7
    %v469 = vsub.s32 %v466, %v468
    %v470 = vrot.slane %v456, %v469
    %v471 = vcombine.low %v463, %v470
    %v472 = vcombine.high %v463, %v470
    %v473 = vcombine.low %v119, %v120
    %v474 = vcombine.low %v121, %v122
    %v476 = vunpack.c.l.s4 1983009808
    %v477 = vunpack.c.0.s8 %v476
    %v478 = vlaneseq
    %v479 = vshrl.u32 %v478, 7
    %v480 = vsub.s32 %v477, %v479
    %v481 = vrot.slane %v473, %v480
    %v483 = vunpack.c.l.s4 1983009808
    %v484 = vunpack.c.0.s8 %v483
    %v485 = vlaneseq
    %v486 = vshrl.u32 %v485, 7
    %v487 = vsub.s32 %v484, %v486
    %v488 = vrot.slane %v474, %v487
    %v489 = vcombine.low %v481, %v488
    %v490 = vcombine.high %v481, %v488
    %v491 = vcombine.low %v123, %v124
    %v492 = vcombine.low %v125, %v126
    %v494 = vunpack.c.l.s4 1983009808
    %v495 = vunpack.c.0.s8 %v494
    %v496 = vlaneseq
    %v497 = vshrl.u32 %v496, 7
    %v498 = vsub.s32 %v495, %v497
    %v499 = vrot.slane %v491, %v498
    %v501 = vunpack.c.l.s4 1983009808
    %v502 = vunpack.c.0.s8 %v501
    %v503 = vlaneseq
    %v504 = vshrl.u32 %v503, 7
    %v505 = vsub.s32 %v502, %v504
    %v506 = vrot.slane %v492, %v505
    %v507 = vcombine.low %v499, %v506
    %v508 = vcombine.high %v499, %v506
    %v509 = vcombine.low %v127, %v128
    %v510 = vcombine.low %v129, %v130
    %v512 = vunpack.c.l.s4 1983009808
    %v513 = vunpack.c.0.s8 %v512
    %v514 = vlaneseq
    %v515 = vshrl.u32 %v514, 7
    %v516 = vsub.s32 %v513, %v515
    %v517 = vrot.slane %v509, %v516
    %v519 = vunpack.c.l.s4 1983009808
    %v520 = vunpack.c.0.s8 %v519
    %v521 = vlaneseq
    %v522 = vshrl.u32 %v521, 7
    %v523 = vsub.s32 %v520, %v522
    %v524 = vrot.slane %v510, %v523
    %v525 = vcombine.low %v517, %v524
    %v526 = vcombine.high %v517, %v524
    %v527 = vcombine.low %v131, %v132
    %v528 = vcombine.low %v133, %v134
    %v530 = vunpack.c.l.s4 1983009808
    %v531 = vunpack.c.0.s8 %v530
    %v532 = vlaneseq
    %v533 = vshrl.u32 %v532, 7
    %v534 = vsub.s32 %v531, %v533
    %v535 = vrot.slane %v527, %v534
    %v537 = vunpack.c.l.s4 1983009808
    %v538 = vunpack.c.0.s8 %v537
    %v539 = vlaneseq
    %v540 = vshrl.u32 %v539, 7
    %v541 = vsub.s32 %v538, %v540
    %v542 = vrot.slane %v528, %v541
    %v543 = vcombine.low %v535, %v542
    %v544 = vcombine.high %v535, %v542
    %v545 = vcombine.low %v135, %v136
    %v546 = vcombine.low %v137, %v138
    %v548 = vunpack.c.l.s4 1983009808
    %v549 = vunpack.c.0.s8 %v548
    %v550 = vlaneseq
    %v551 = vshrl.u32 %v550, 7
    %v552 = vsub.s32 %v549, %v551
    %v553 = vrot.slane %v545, %v552
    %v555 = vunpack.c.l.s4 1983009808
    %v556 = vunpack.c.0.s8 %v555
    %v557 = vlaneseq
    %v558 = vshrl.u32 %v557, 7
    %v559 = vsub.s32 %v556, %v558
    %v560 = vrot.slane %v546, %v559
    %v561 = vcombine.low %v553, %v560
    %v562 = vcombine.high %v553, %v560
    %v563 = vcombine.low %v139, %v140
    %v564 = vcombine.low %v141, %v142
    %v566 = vunpack.c.l.s4 1983009808
    %v567 = vunpack.c.0.s8 %v566
    %v568 = vlaneseq
    %v569 = vshrl.u32 %v568, 7
    %v570 = vsub.s32 %v567, %v569
    %v571 = vrot.slane %v563, %v570
    %v573 = vunpack.c.l.s4 1983009808
    %v574 = vunpack.c.0.s8 %v573
    %v575 = vlaneseq
    %v576 = vshrl.u32 %v575, 7
    %v577 = vsub.s32 %v574, %v576
    %v578 = vrot.slane %v564, %v577
    %v579 = vcombine.low %v571, %v578
    %v580 = vcombine.high %v571, %v578
    %v581 = vcombine.low %v143, %v144
    %v582 = vcombine.low %v145, %v146
    %v584 = vunpack.c.l.s4 1983009808
    %v585 = vunpack.c.0.s8 %v584
    %v586 = vlaneseq
    %v587 = vshrl.u32 %v586, 7
    %v588 = vsub.s32 %v585, %v587
    %v589 = vrot.slane %v581, %v588
    %v591 = vunpack.c.l.s4 1983009808
    %v592 = vunpack.c.0.s8 %v591
    %v593 = vlaneseq
    %v594 = vshrl.u32 %v593, 7
    %v595 = vsub.s32 %v592, %v594
    %v596 = vrot.slane %v582, %v595
    %v597 = vcombine.low %v589, %v596
    %v598 = vcombine.high %v589, %v596
    %v599 = vcombine.low %v147, %v148
    %v600 = vcombine.low %v149, %v150
    %v602 = vunpack.c.l.s4 1983009808
    %v603 = vunpack.c.0.s8 %v602
    %v604 = vlaneseq
    %v605 = vshrl.u32 %v604, 7
    %v606 = vsub.s32 %v603, %v605
    %v607 = vrot.slane %v599, %v606
    %v609 = vunpack.c.l.s4 1983009808
    %v610 = vunpack.c.0.s8 %v609
    %v611 = vlaneseq
    %v612 = vshrl.u32 %v611, 7
    %v613 = vsub.s32 %v610, %v612
    %v614 = vrot.slane %v600, %v613
    %v615 = vcombine.low %v607, %v614
    %v616 = vcombine.high %v607, %v614
    %v617 = vcombine.low %v151, %v152
    %v618 = vcombine.low %v153, %v154
    %v620 = vunpack.c.l.s4 1983009808
    %v621 = vunpack.c.0.s8 %v620
    %v622 = vlaneseq
    %v623 = vshrl.u32 %v622, 7
    %v624 = vsub.s32 %v621, %v623
    %v625 = vrot.slane %v617, %v624
    %v627 = vunpack.c.l.s4 1983009808
    %v628 = vunpack.c.0.s8 %v627
    %v629 = vlaneseq
    %v630 = vshrl.u32 %v629, 7
    %v631 = vsub.s32 %v628, %v630
    %v632 = vrot.slane %v618, %v631
    %v633 = vcombine.low %v625, %v632
    %v634 = vcombine.high %v625, %v632
    %v635 = vcombine.low %v155, %v156
    %v636 = vcombine.low %v157, %v158
    %v638 = vunpack.c.l.s4 1983009808
    %v639 = vunpack.c.0.s8 %v638
    %v640 = vlaneseq
    %v641 = vshrl.u32 %v640, 7
    %v642 = vsub.s32 %v639, %v641
    %v643 = vrot.slane %v635, %v642
    %v645 = vunpack.c.l.s4 1983009808
    %v646 = vunpack.c.0.s8 %v645
    %v647 = vlaneseq
    %v648 = vshrl.u32 %v647, 7
    %v649 = vsub.s32 %v646, %v648
    %v650 = vrot.slane %v636, %v649
    %v651 = vcombine.low %v643, %v650
    %v652 = vcombine.high %v643, %v650
    %v653 = vcombine.low %v159, %v160
    %v654 = vcombine.low %v161, %v162
    %v656 = vunpack.c.l.s4 1983009808
    %v657 = vunpack.c.0.s8 %v656
    %v658 = vlaneseq
    %v659 = vshrl.u32 %v658, 7
    %v660 = vsub.s32 %v657, %v659
    %v661 = vrot.slane %v653, %v660
    %v663 = vunpack.c.l.s4 1983009808
    %v664 = vunpack.c.0.s8 %v663
    %v665 = vlaneseq
    %v666 = vshrl.u32 %v665, 7
    %v667 = vsub.s32 %v664, %v666
    %v668 = vrot.slane %v654, %v667
    %v669 = vcombine.low %v661, %v668
    %v670 = vcombine.high %v661, %v668
    %v671 = vcombine.low %v163, %v164
    %v672 = vcombine.low %v165, %v166
    %v674 = vunpack.c.l.s4 1983009808
    %v675 = vunpack.c.0.s8 %v674
    %v676 = vlaneseq
    %v677 = vshrl.u32 %v676, 7
    %v678 = vsub.s32 %v675, %v677
    %v679 = vrot.slane %v671, %v678
    %v681 = vunpack.c.l.s4 1983009808
    %v682 = vunpack.c.0.s8 %v681
    %v683 = vlaneseq
    %v684 = vshrl.u32 %v683, 7
    %v685 = vsub.s32 %v682, %v684
    %v686 = vrot.slane %v672, %v685
    %v687 = vcombine.low %v679, %v686
    %v688 = vcombine.high %v679, %v686
    %v689 = vcombine.low %v167, %v168
    %v690 = vcombine.low %v169, %v170
    %v692 = vunpack.c.l.s4 1983009808
    %v693 = vunpack.c.0.s8 %v692
    %v694 = vlaneseq
    %v695 = vshrl.u32 %v694, 7
    %v696 = vsub.s32 %v693, %v695
    %v697 = vrot.slane %v689, %v696
    %v699 = vunpack.c.l.s4 1983009808
    %v700 = vunpack.c.0.s8 %v699
    %v701 = vlaneseq
    %v702 = vshrl.u32 %v701, 7
    %v703 = vsub.s32 %v700, %v702
    %v704 = vrot.slane %v690, %v703
    %v705 = vcombine.low %v697, %v704
    %v706 = vcombine.high %v697, %v704
    %v707 = vcombine.low %v171, %v172
    %v708 = vcombine.low %v173, %v174
    %v710 = vunpack.c.l.s4 1983009808
    %v711 = vunpack.c.0.s8 %v710
    %v712 = vlaneseq
    %v713 = vshrl.u32 %v712, 7
    %v714 = vsub.s32 %v711, %v713
    %v715 = vrot.slane %v707, %v714
    %v717 = vunpack.c.l.s4 1983009808
    %v718 = vunpack.c.0.s8 %v717
    %v719 = vlaneseq
    %v720 = vshrl.u32 %v719, 7
    %v721 = vsub.s32 %v718, %v720
    %v722 = vrot.slane %v708, %v721
    %v723 = vcombine.low %v715, %v722
    %v724 = vcombine.high %v715, %v722
    %v725 = vcombine.low %v175, %v176
    %v726 = vcombine.low %v177, %v178
    %v728 = vunpack.c.l.s4 1983009808
    %v729 = vunpack.c.0.s8 %v728
    %v730 = vlaneseq
    %v731 = vshrl.u32 %v730, 7
    %v732 = vsub.s32 %v729, %v731
    %v733 = vrot.slane %v725, %v732
    %v735 = vunpack.c.l.s4 1983009808
    %v736 = vunpack.c.0.s8 %v735
    %v737 = vlaneseq
    %v738 = vshrl.u32 %v737, 7
    %v739 = vsub.s32 %v736, %v738
    %v740 = vrot.slane %v726, %v739
    %v741 = vcombine.low %v733, %v740
    %v742 = vcombine.high %v733, %v740
    %v743 = vcombine.low %v179, %v180
    %v744 = vcombine.low %v181, %v182
    %v746 = vunpack.c.l.s4 1983009808
    %v747 = vunpack.c.0.s8 %v746
    %v748 = vlaneseq
    %v749 = vshrl.u32 %v748, 7
    %v750 = vsub.s32 %v747, %v749
    %v751 = vrot.slane %v743, %v750
    %v753 = vunpack.c.l.s4 1983009808
    %v754 = vunpack.c.0.s8 %v753
    %v755 = vlaneseq
    %v756 = vshrl.u32 %v755, 7
    %v757 = vsub.s32 %v754, %v756
    %v758 = vrot.slane %v744, %v757
    %v759 = vcombine.low %v751, %v758
    %v760 = vcombine.high %v751, %v758
    %v761 = vcombine.low %v183, %v184
    %v762 = vcombine.low %v185, %v186
    %v764 = vunpack.c.l.s4 1983009808
    %v765 = vunpack.c.0.s8 %v764
    %v766 = vlaneseq
    %v767 = vshrl.u32 %v766, 7
    %v768 = vsub.s32 %v765, %v767
    %v769 = vrot.slane %v761, %v768
    %v771 = vunpack.c.l.s4 1983009808
    %v772 = vunpack.c.0.s8 %v771
    %v773 = vlaneseq
    %v774 = vshrl.u32 %v773, 7
    %v775 = vsub.s32 %v772, %v774
    %v776 = vrot.slane %v762, %v775
    %v777 = vcombine.low %v769, %v776
    %v778 = vcombine.high %v769, %v776
    %v779 = vcombine.low %v187, %v188
    %v780 = vcombine.low %v189, %v190
    %v782 = vunpack.c.l.s4 1983009808
    %v783 = vunpack.c.0.s8 %v782
    %v784 = vlaneseq
    %v785 = vshrl.u32 %v784, 7
    %v786 = vsub.s32 %v783, %v785
    %v787 = vrot.slane %v779, %v786
    %v789 = vunpack.c.l.s4 1983009808
    %v790 = vunpack.c.0.s8 %v789
    %v791 = vlaneseq
    %v792 = vshrl.u32 %v791, 7
    %v793 = vsub.s32 %v790, %v792
    %v794 = vrot.slane %v780, %v793
    %v795 = vcombine.low %v787, %v794
    %v796 = vcombine.high %v787, %v794
    %v797 = vcombine.low %v191, %v192
    %v798 = vcombine.low %v193, %v194
    %v800 = vunpack.c.l.s4 1983009808
    %v801 = vunpack.c.0.s8 %v800
    %v802 = vlaneseq
    %v803 = vshrl.u32 %v802, 7
    %v804 = vsub.s32 %v801, %v803
    %v805 = vrot.slane %v797, %v804
    %v807 = vunpack.c.l.s4 1983009808
    %v808 = vunpack.c.0.s8 %v807
    %v809 = vlaneseq
    %v810 = vshrl.u32 %v809, 7
    %v811 = vsub.s32 %v808, %v810
    %v812 = vrot.slane %v798, %v811
    %v813 = vcombine.low %v805, %v812
    %v814 = vcombine.high %v805, %v812
    %v815 = vcombine.low %v195, %v196
    %v816 = vcombine.low %v197, %v198
    %v818 = vunpack.c.l.s4 1983009808
    %v819 = vunpack.c.0.s8 %v818
    %v820 = vlaneseq
    %v821 = vshrl.u32 %v820, 7
    %v822 = vsub.s32 %v819, %v821
    %v823 = vrot.slane %v815, %v822
    %v825 = vunpack.c.l.s4 1983009808
    %v826 = vunpack.c.0.s8 %v825
    %v827 = vlaneseq
    %v828 = vshrl.u32 %v827, 7
    %v829 = vsub.s32 %v826, %v828
    %v830 = vrot.slane %v816, %v829
    %v831 = vcombine.low %v823, %v830
    %v832 = vcombine.high %v823, %v830
    %v833 = vcombine.low %v199, %v200
    %v834 = vcombine.low %v201, %v202
    %v836 = vunpack.c.l.s4 1983009808
    %v837 = vunpack.c.0.s8 %v836
    %v838 = vlaneseq
    %v839 = vshrl.u32 %v838, 7
    %v840 = vsub.s32 %v837, %v839
    %v841 = vrot.slane %v833, %v840
    %v843 = vunpack.c.l.s4 1983009808
    %v844 = vunpack.c.0.s8 %v843
    %v845 = vlaneseq
    %v846 = vshrl.u32 %v845, 7
    %v847 = vsub.s32 %v844, %v846
    %v848 = vrot.slane %v834, %v847
    %v849 = vcombine.low %v841, %v848
    %v850 = vcombine.high %v841, %v848
    %v851 = vcombine.low %v203, %v204
    %v852 = vcombine.low %v205, %v206
    %v854 = vunpack.c.l.s4 1983009808
    %v855 = vunpack.c.0.s8 %v854
    %v856 = vlaneseq
    %v857 = vshrl.u32 %v856, 7
    %v858 = vsub.s32 %v855, %v857
    %v859 = vrot.slane %v851, %v858
    %v861 = vunpack.c.l.s4 1983009808
    %v862 = vunpack.c.0.s8 %v861
    %v863 = vlaneseq
    %v864 = vshrl.u32 %v863, 7
    %v865 = vsub.s32 %v862, %v864
    %v866 = vrot.slane %v852, %v865
    %v867 = vcombine.low %v859, %v866
    %v868 = vcombine.high %v859, %v866
    %v869 = vcombine.low %v207, %v208
    %v870 = vcombine.low %v209, %v210
    %v872 = vunpack.c.l.s4 1983009808
    %v873 = vunpack.c.0.s8 %v872
    %v874 = vlaneseq
    %v875 = vshrl.u32 %v874, 7
    %v876 = vsub.s32 %v873, %v875
    %v877 = vrot.slane %v869, %v876
    %v879 = vunpack.c.l.s4 1983009808
    %v880 = vunpack.c.0.s8 %v879
    %v881 = vlaneseq
    %v882 = vshrl.u32 %v881, 7
    %v883 = vsub.s32 %v880, %v882
    %v884 = vrot.slane %v870, %v883
    %v885 = vcombine.low %v877, %v884
    %v886 = vcombine.high %v877, %v884
    %v887 = vcombine.low %v211, %v212
    %v888 = vcombine.low %v213, %v214
    %v890 = vunpack.c.l.s4 1983009808
    %v891 = vunpack.c.0.s8 %v890
    %v892 = vlaneseq
    %v893 = vshrl.u32 %v892, 7
    %v894 = vsub.s32 %v891, %v893
    %v895 = vrot.slane %v887, %v894
    %v897 = vunpack.c.l.s4 1983009808
    %v898 = vunpack.c.0.s8 %v897
    %v899 = vlaneseq
    %v900 = vshrl.u32 %v899, 7
    %v901 = vsub.s32 %v898, %v900
    %v902 = vrot.slane %v888, %v901
    %v903 = vcombine.low %v895, %v902
    %v904 = vcombine.high %v895, %v902
    %v905 = vcombine.low %v215, %v216
    %v906 = vcombine.low %v217, %v218
    %v908 = vunpack.c.l.s4 1983009808
    %v909 = vunpack.c.0.s8 %v908
    %v910 = vlaneseq
    %v911 = vshrl.u32 %v910, 7
    %v912 = vsub.s32 %v909, %v911
    %v913 = vrot.slane %v905, %v912
    %v915 = vunpack.c.l.s4 1983009808
    %v916 = vunpack.c.0.s8 %v915
    %v917 = vlaneseq
    %v918 = vshrl.u32 %v917, 7
    %v919 = vsub.s32 %v916, %v918
    %v920 = vrot.slane %v906, %v919
    %v921 = vcombine.low %v913, %v920
    %v922 = vcombine.high %v913, %v920
    %v987 = vpack.c.bf16 %v381, %v363
    %v988 = vpack.c.bf16 %v382, %v364
    %v989 = vpack.c.bf16 %v417, %v399
    %v990 = vpack.c.bf16 %v418, %v400
    %v991 = vpack.c.bf16 %v453, %v435
    %v992 = vpack.c.bf16 %v454, %v436
    %v993 = vpack.c.bf16 %v489, %v471
    %v994 = vpack.c.bf16 %v490, %v472
    %v995 = vpack.c.bf16 %v525, %v507
    %v996 = vpack.c.bf16 %v526, %v508
    %v997 = vpack.c.bf16 %v561, %v543
    %v998 = vpack.c.bf16 %v562, %v544
    %v999 = vpack.c.bf16 %v597, %v579
    %v1000 = vpack.c.bf16 %v598, %v580
    %v1001 = vpack.c.bf16 %v633, %v615
    %v1002 = vpack.c.bf16 %v634, %v616
    %v1003 = vpack.c.bf16 %v669, %v651
    %v1004 = vpack.c.bf16 %v670, %v652
    %v1005 = vpack.c.bf16 %v705, %v687
    %v1006 = vpack.c.bf16 %v706, %v688
    %v1007 = vpack.c.bf16 %v741, %v723
    %v1008 = vpack.c.bf16 %v742, %v724
    %v1009 = vpack.c.bf16 %v777, %v759
    %v1010 = vpack.c.bf16 %v778, %v760
    %v1011 = vpack.c.bf16 %v813, %v795
    %v1012 = vpack.c.bf16 %v814, %v796
    %v1013 = vpack.c.bf16 %v849, %v831
    %v1014 = vpack.c.bf16 %v850, %v832
    %v1015 = vpack.c.bf16 %v885, %v867
    %v1016 = vpack.c.bf16 %v886, %v868
    %v1017 = vpack.c.bf16 %v921, %v903
    %v1018 = vpack.c.bf16 %v922, %v904
    %v1019 = vld [vmem:[#allocation6] sm:$0xf]
    %v1020 = vld [vmem:[#allocation6 + $0x4] sm:$0xf]
    %v1021 = vld [vmem:[#allocation6 + $0x8] sm:$0xf]
    %v1022 = vld [vmem:[#allocation6 + $0xc] sm:$0xf]
    %v1023 = vld [vmem:[#allocation6 + $0x10] sm:$0xf]
    %v1024 = vld [vmem:[#allocation6 + $0x14] sm:$0xf]
    %v1025 = vld [vmem:[#allocation6 + $0x18] sm:$0xf]
    %v1026 = vld [vmem:[#allocation6 + $0x1c] sm:$0xf]
    %v1027 = vld [vmem:[#allocation6 + $0x20] sm:$0xf]
    %v1028 = vld [vmem:[#allocation6 + $0x24] sm:$0xf]
    %v1029 = vld [vmem:[#allocation6 + $0x28] sm:$0xf]
    %v1030 = vld [vmem:[#allocation6 + $0x2c] sm:$0xf]
    %v1031 = vld [vmem:[#allocation6 + $0x30] sm:$0xf]
    %v1032 = vld [vmem:[#allocation6 + $0x34] sm:$0xf]
    %v1033 = vld [vmem:[#allocation6 + $0x38] sm:$0xf]
    %v1034 = vld [vmem:[#allocation6 + $0x3c] sm:$0xf]
    %v1035 = vld [vmem:[#allocation6 + $0x40] sm:$0xf]
    %v1036 = vld [vmem:[#allocation6 + $0x44] sm:$0xf]
    %v1037 = vld [vmem:[#allocation6 + $0x48] sm:$0xf]
    %v1038 = vld [vmem:[#allocation6 + $0x4c] sm:$0xf]
    %v1039 = vld [vmem:[#allocation6 + $0x50] sm:$0xf]
    %v1040 = vld [vmem:[#allocation6 + $0x54] sm:$0xf]
    %v1041 = vld [vmem:[#allocation6 + $0x58] sm:$0xf]
    %v1042 = vld [vmem:[#allocation6 + $0x5c] sm:$0xf]
    %v1043 = vld [vmem:[#allocation6 + $0x60] sm:$0xf]
    %v1044 = vld [vmem:[#allocation6 + $0x64] sm:$0xf]
    %v1045 = vld [vmem:[#allocation6 + $0x68] sm:$0xf]
    %v1046 = vld [vmem:[#allocation6 + $0x6c] sm:$0xf]
    %v1047 = vld [vmem:[#allocation6 + $0x70] sm:$0xf]
    %v1048 = vld [vmem:[#allocation6 + $0x74] sm:$0xf]
    %v1049 = vld [vmem:[#allocation6 + $0x78] sm:$0xf]
    %v1050 = vld [vmem:[#allocation6 + $0x7c] sm:$0xf]
    %v1051 = vld [vmem:[%s2] sm:$0x1]
    %v1053 = vlaneseq
    %v1054 = vshrl.u32 %v1053, 7
    %v1055 = vsub.s32 0, %v1054
    %v1056 = vrot.slane %v1051, %v1055
    %v1090 = vunpack.c.l.b16 %v1019
    %v1091 = vunpack.c.l.b16 %v1020
    %v1092 = vunpack.c.l.b16 %v1021
    %v1093 = vunpack.c.l.b16 %v1022
    %v1094 = vunpack.c.l.b16 %v1023
    %v1095 = vunpack.c.l.b16 %v1024
    %v1096 = vunpack.c.l.b16 %v1025
    %v1097 = vunpack.c.l.b16 %v1026
    %v1098 = vunpack.c.l.b16 %v1027
    %v1099 = vunpack.c.l.b16 %v1028
    %v1100 = vunpack.c.l.b16 %v1029
    %v1101 = vunpack.c.l.b16 %v1030
    %v1102 = vunpack.c.l.b16 %v1031
    %v1103 = vunpack.c.l.b16 %v1032
    %v1104 = vunpack.c.l.b16 %v1033
    %v1105 = vunpack.c.l.b16 %v1034
    %v1106 = vunpack.c.l.b16 %v1035
    %v1107 = vunpack.c.l.b16 %v1036
    %v1108 = vunpack.c.l.b16 %v1037
    %v1109 = vunpack.c.l.b16 %v1038
    %v1110 = vunpack.c.l.b16 %v1039
    %v1111 = vunpack.c.l.b16 %v1040
    %v1112 = vunpack.c.l.b16 %v1041
    %v1113 = vunpack.c.l.b16 %v1042
    %v1114 = vunpack.c.l.b16 %v1043
    %v1115 = vunpack.c.l.b16 %v1044
    %v1116 = vunpack.c.l.b16 %v1045
    %v1117 = vunpack.c.l.b16 %v1046
    %v1118 = vunpack.c.l.b16 %v1047
    %v1119 = vunpack.c.l.b16 %v1048
    %v1120 = vunpack.c.l.b16 %v1049
    %v1121 = vunpack.c.l.b16 %v1050
    %v1122 = vpack.c.b16 %v1091, %v1090
    %v1123 = vpack.c.b16 %v1093, %v1092
    %v1124 = vpack.c.b16 %v1095, %v1094
    %v1125 = vpack.c.b16 %v1097, %v1096
    %v1126 = vpack.c.b16 %v1099, %v1098
    %v1127 = vpack.c.b16 %v1101, %v1100
    %v1128 = vpack.c.b16 %v1103, %v1102
    %v1129 = vpack.c.b16 %v1105, %v1104
    %v1130 = vpack.c.b16 %v1107, %v1106
    %v1131 = vpack.c.b16 %v1109, %v1108
    %v1132 = vpack.c.b16 %v1111, %v1110
    %v1133 = vpack.c.b16 %v1113, %v1112
    %v1134 = vpack.c.b16 %v1115, %v1114
    %v1135 = vpack.c.b16 %v1117, %v1116
    %v1136 = vpack.c.b16 %v1119, %v1118
    %v1137 = vpack.c.b16 %v1121, %v1120
    %1154 = vmatprep.subr.bf16.mxu0 0
    %1155 = vmatpush1.bf16.msra.mxu0 %v1122
    %1156 = vmatprep.subr.bf16.mxu0 0
    %1157 = vmatpush1.bf16.msra.mxu0 %v1123
    %1158 = vmatprep.subr.bf16.mxu0 0
    %1159 = vmatpush1.bf16.msra.mxu0 %v1124
    %1160 = vmatprep.subr.bf16.mxu0 0
    %1161 = vmatpush1.bf16.msra.mxu0 %v1125
    %1162 = vmatprep.subr.bf16.mxu0 0
    %1163 = vmatpush1.bf16.msra.mxu0 %v1126
    %1164 = vmatprep.subr.bf16.mxu0 0
    %1165 = vmatpush1.bf16.msra.mxu0 %v1127
    %1166 = vmatprep.subr.bf16.mxu0 0
    %1167 = vmatpush1.bf16.msra.mxu0 %v1128
    %1168 = vmatprep.subr.bf16.mxu0 0
    %1169 = vmatpush1.bf16.msra.mxu0 %v1129
    %1170 = vmatprep.subr.bf16.mxu0 0
    %1171 = vmatpush1.bf16.msra.mxu0 %v1130
    %1172 = vmatprep.subr.bf16.mxu0 0
    %1173 = vmatpush1.bf16.msra.mxu0 %v1131
    %1174 = vmatprep.subr.bf16.mxu0 0
    %1175 = vmatpush1.bf16.msra.mxu0 %v1132
    %1176 = vmatprep.subr.bf16.mxu0 0
    %1177 = vmatpush1.bf16.msra.mxu0 %v1133
    %1178 = vmatprep.subr.bf16.mxu0 0
    %1179 = vmatpush1.bf16.msra.mxu0 %v1134
    %1180 = vmatprep.subr.bf16.mxu0 0
    %1181 = vmatpush1.bf16.msra.mxu0 %v1135
    %1182 = vmatprep.subr.bf16.mxu0 0
    %1183 = vmatpush1.bf16.msra.mxu0 %v1136
    %1184 = vmatprep.subr.bf16.mxu0 0
    %1185 = vmatpush1.bf16.msra.mxu0 %v1137
    %1186 = vmatprep.mubr.bf16.mxu0 %v988
    %1187 = vmatmul.mubr.bf16.gmra.mrb[0].mxu0 %v987
    %v1188 = vpop.f32.mrb[0].mxu0
    %v1189 = vadd.f32 %v1056, %v1188
    %v1190 = vpop.f32.mrb[0].mxu0
    %v1191 = vpop.f32.mrb[0].mxu0
    %v1192 = vadd.f32 %v1056, %v1191
    %v1193 = vpop.f32.mrb[0].mxu0
    %1194 = vmatprep.mubr.bf16.mxu0 %v990
    %1195 = vmatmul.mubr.bf16.gmra.mrb[0].mxu0 %v989
    %v1196 = vpop.f32.mrb[0].mxu0
    %v1197 = vadd.f32 %v1056, %v1196
    %v1198 = vpop.f32.mrb[0].mxu0
    %v1199 = vpop.f32.mrb[0].mxu0
    %v1200 = vadd.f32 %v1056, %v1199
    %v1201 = vpop.f32.mrb[0].mxu0
    %1202 = vmatprep.mubr.bf16.mxu0 %v992
    %1203 = vmatmul.mubr.bf16.gmra.mrb[0].mxu0 %v991
    %v1204 = vpop.f32.mrb[0].mxu0
    %v1205 = vadd.f32 %v1056, %v1204
    %v1206 = vpop.f32.mrb[0].mxu0
    %v1207 = vpop.f32.mrb[0].mxu0
    %v1208 = vadd.f32 %v1056, %v1207
    %v1209 = vpop.f32.mrb[0].mxu0
    %1210 = vmatprep.mubr.bf16.mxu0 %v994
    %1211 = vmatmul.mubr.bf16.gmra.mrb[0].mxu0 %v993
    %v1212 = vpop.f32.mrb[0].mxu0
    %v1213 = vadd.f32 %v1056, %v1212
    %v1214 = vpop.f32.mrb[0].mxu0
    %v1215 = vpop.f32.mrb[0].mxu0
    %v1216 = vadd.f32 %v1056, %v1215
    %v1217 = vpop.f32.mrb[0].mxu0
    %1218 = vmatprep.mubr.bf16.mxu0 %v996
    %1219 = vmatmul.mubr.bf16.gmra.mrb[0].mxu0 %v995
    %v1220 = vpop.f32.mrb[0].mxu0
    %v1221 = vadd.f32 %v1056, %v1220
    %v1222 = vpop.f32.mrb[0].mxu0
    %v1223 = vpop.f32.mrb[0].mxu0
    %v1224 = vadd.f32 %v1056, %v1223
    %v1225 = vpop.f32.mrb[0].mxu0
    %1226 = vmatprep.mubr.bf16.mxu0 %v998
    %1227 = vmatmul.mubr.bf16.gmra.mrb[0].mxu0 %v997
    %v1228 = vpop.f32.mrb[0].mxu0
    %v1229 = vadd.f32 %v1056, %v1228
    %v1230 = vpop.f32.mrb[0].mxu0
    %v1231 = vpop.f32.mrb[0].mxu0
    %v1232 = vadd.f32 %v1056, %v1231
    %v1233 = vpop.f32.mrb[0].mxu0
    %1234 = vmatprep.mubr.bf16.mxu0 %v1000
    %1235 = vmatmul.mubr.bf16.gmra.mrb[0].mxu0 %v999
    %v1236 = vpop.f32.mrb[0].mxu0
    %v1237 = vadd.f32 %v1056, %v1236
    %v1238 = vpop.f32.mrb[0].mxu0
    %v1239 = vpop.f32.mrb[0].mxu0
    %v1240 = vadd.f32 %v1056, %v1239
    %v1241 = vpop.f32.mrb[0].mxu0
    %1242 = vmatprep.mubr.bf16.mxu0 %v1002
    %1243 = vmatmul.mubr.bf16.gmra.mrb[0].mxu0 %v1001
    %v1244 = vpop.f32.mrb[0].mxu0
    %v1245 = vadd.f32 %v1056, %v1244
    %v1246 = vpop.f32.mrb[0].mxu0
    %v1247 = vpop.f32.mrb[0].mxu0
    %v1248 = vadd.f32 %v1056, %v1247
    %v1249 = vpop.f32.mrb[0].mxu0
    %1250 = vmatprep.mubr.bf16.mxu0 %v1004
    %1251 = vmatmul.mubr.bf16.gmra.mrb[0].mxu0 %v1003
    %v1252 = vpop.f32.mrb[0].mxu0
    %v1253 = vadd.f32 %v1056, %v1252
    %v1254 = vpop.f32.mrb[0].mxu0
    %v1255 = vpop.f32.mrb[0].mxu0
    %v1256 = vadd.f32 %v1056, %v1255
    %v1257 = vpop.f32.mrb[0].mxu0
    %1258 = vmatprep.mubr.bf16.mxu0 %v1006
    %1259 = vmatmul.mubr.bf16.gmra.mrb[0].mxu0 %v1005
    %v1260 = vpop.f32.mrb[0].mxu0
    %v1261 = vadd.f32 %v1056, %v1260
    %v1262 = vpop.f32.mrb[0].mxu0
    %v1263 = vpop.f32.mrb[0].mxu0
    %v1264 = vadd.f32 %v1056, %v1263
    %v1265 = vpop.f32.mrb[0].mxu0
    %1266 = vmatprep.mubr.bf16.mxu0 %v1008
    %1267 = vmatmul.mubr.bf16.gmra.mrb[0].mxu0 %v1007
    %v1268 = vpop.f32.mrb[0].mxu0
    %v1269 = vadd.f32 %v1056, %v1268
    %v1270 = vpop.f32.mrb[0].mxu0
    %v1271 = vpop.f32.mrb[0].mxu0
    %v1272 = vadd.f32 %v1056, %v1271
    %v1273 = vpop.f32.mrb[0].mxu0
    %1274 = vmatprep.mubr.bf16.mxu0 %v1010
    %1275 = vmatmul.mubr.bf16.gmra.mrb[0].mxu0 %v1009
    %v1276 = vpop.f32.mrb[0].mxu0
    %v1277 = vadd.f32 %v1056, %v1276
    %v1278 = vpop.f32.mrb[0].mxu0
    %v1279 = vpop.f32.mrb[0].mxu0
    %v1280 = vadd.f32 %v1056, %v1279
    %v1281 = vpop.f32.mrb[0].mxu0
    %1282 = vmatprep.mubr.bf16.mxu0 %v1012
    %1283 = vmatmul.mubr.bf16.gmra.mrb[0].mxu0 %v1011
    %v1284 = vpop.f32.mrb[0].mxu0
    %v1285 = vadd.f32 %v1056, %v1284
    %v1286 = vpop.f32.mrb[0].mxu0
    %v1287 = vpop.f32.mrb[0].mxu0
    %v1288 = vadd.f32 %v1056, %v1287
    %v1289 = vpop.f32.mrb[0].mxu0
    %1290 = vmatprep.mubr.bf16.mxu0 %v1014
    %1291 = vmatmul.mubr.bf16.gmra.mrb[0].mxu0 %v1013
    %v1292 = vpop.f32.mrb[0].mxu0
    %v1293 = vadd.f32 %v1056, %v1292
    %v1294 = vpop.f32.mrb[0].mxu0
    %v1295 = vpop.f32.mrb[0].mxu0
    %v1296 = vadd.f32 %v1056, %v1295
    %v1297 = vpop.f32.mrb[0].mxu0
    %1298 = vmatprep.mubr.bf16.mxu0 %v1016
    %1299 = vmatmul.mubr.bf16.gmra.mrb[0].mxu0 %v1015
    %v1300 = vpop.f32.mrb[0].mxu0
    %v1301 = vadd.f32 %v1056, %v1300
    %v1302 = vpop.f32.mrb[0].mxu0
    %v1303 = vpop.f32.mrb[0].mxu0
    %v1304 = vadd.f32 %v1056, %v1303
    %v1305 = vpop.f32.mrb[0].mxu0
    %1306 = vmatprep.mubr.bf16.mxu0 %v1018
    %1307 = vmatmul.mubr.bf16.gmra.mrb[0].mxu0 %v1017
    %v1308 = vpop.f32.mrb[0].mxu0
    %v1309 = vadd.f32 %v1056, %v1308
    %v1310 = vpop.f32.mrb[0].mxu0
    %v1311 = vpop.f32.mrb[0].mxu0
    %v1312 = vadd.f32 %v1056, %v1311
    %v1313 = vpop.f32.mrb[0].mxu0
    %1314 = vdwg.mxu0
    %vm1315 = vcmp.gt.f32.partialorder %v1189, 0.0
    %vm1316 = vcmp.gt.f32.partialorder %v1192, 0.0
    %vm1317 = vcmp.gt.f32.partialorder %v1197, 0.0
    %vm1318 = vcmp.gt.f32.partialorder %v1200, 0.0
    %vm1319 = vcmp.gt.f32.partialorder %v1205, 0.0
    %vm1320 = vcmp.gt.f32.partialorder %v1208, 0.0
    %vm1321 = vcmp.gt.f32.partialorder %v1213, 0.0
    %vm1322 = vcmp.gt.f32.partialorder %v1216, 0.0
    %vm1323 = vcmp.gt.f32.partialorder %v1221, 0.0
    %vm1324 = vcmp.gt.f32.partialorder %v1224, 0.0
    %vm1325 = vcmp.gt.f32.partialorder %v1229, 0.0
    %vm1326 = vcmp.gt.f32.partialorder %v1232, 0.0
    %vm1327 = vcmp.gt.f32.partialorder %v1237, 0.0
    %vm1328 = vcmp.gt.f32.partialorder %v1240, 0.0
    %vm1329 = vcmp.gt.f32.partialorder %v1245, 0.0
    %vm1330 = vcmp.gt.f32.partialorder %v1248, 0.0
    %vm1331 = vcmp.gt.f32.partialorder %v1253, 0.0
    %vm1332 = vcmp.gt.f32.partialorder %v1256, 0.0
    %vm1333 = vcmp.gt.f32.partialorder %v1261, 0.0
    %vm1334 = vcmp.gt.f32.partialorder %v1264, 0.0
    %vm1335 = vcmp.gt.f32.partialorder %v1269, 0.0
    %vm1336 = vcmp.gt.f32.partialorder %v1272, 0.0
    %vm1337 = vcmp.gt.f32.partialorder %v1277, 0.0
    %vm1338 = vcmp.gt.f32.partialorder %v1280, 0.0
    %vm1339 = vcmp.gt.f32.partialorder %v1285, 0.0
    %vm1340 = vcmp.gt.f32.partialorder %v1288, 0.0
    %vm1341 = vcmp.gt.f32.partialorder %v1293, 0.0
    %vm1342 = vcmp.gt.f32.partialorder %v1296, 0.0
    %vm1343 = vcmp.gt.f32.partialorder %v1301, 0.0
    %vm1344 = vcmp.gt.f32.partialorder %v1304, 0.0
    %vm1345 = vcmp.gt.f32.partialorder %v1309, 0.0
    %vm1346 = vcmp.gt.f32.partialorder %v1312, 0.0
    %v1347 = vmul.f32 %v1189, 0.2
    %v1348 = vmul.f32 %v1192, 0.2
    %v1349 = vmul.f32 %v1197, 0.2
    %v1350 = vmul.f32 %v1200, 0.2
    %v1351 = vmul.f32 %v1205, 0.2
    %v1352 = vmul.f32 %v1208, 0.2
    %v1353 = vmul.f32 %v1213, 0.2
    %v1354 = vmul.f32 %v1216, 0.2
    %v1355 = vmul.f32 %v1221, 0.2
    %v1356 = vmul.f32 %v1224, 0.2
    %v1357 = vmul.f32 %v1229, 0.2
    %v1358 = vmul.f32 %v1232, 0.2
    %v1359 = vmul.f32 %v1237, 0.2
    %v1360 = vmul.f32 %v1240, 0.2
    %v1361 = vmul.f32 %v1245, 0.2
    %v1362 = vmul.f32 %v1248, 0.2
    %v1363 = vmul.f32 %v1253, 0.2
    %v1364 = vmul.f32 %v1256, 0.2
    %v1365 = vmul.f32 %v1261, 0.2
    %v1366 = vmul.f32 %v1264, 0.2
    %v1367 = vmul.f32 %v1269, 0.2
    %v1368 = vmul.f32 %v1272, 0.2
    %v1369 = vmul.f32 %v1277, 0.2
    %v1370 = vmul.f32 %v1280, 0.2
    %v1371 = vmul.f32 %v1285, 0.2
    %v1372 = vmul.f32 %v1288, 0.2
    %v1373 = vmul.f32 %v1293, 0.2
    %v1374 = vmul.f32 %v1296, 0.2
    %v1375 = vmul.f32 %v1301, 0.2
    %v1376 = vmul.f32 %v1304, 0.2
    %v1377 = vmul.f32 %v1309, 0.2
    %v1378 = vmul.f32 %v1312, 0.2
    %v1379 = vsel %vm1315, %v1189, %v1347
    %v1380 = vsel %vm1316, %v1192, %v1348
    %v1381 = vsel %vm1317, %v1197, %v1349
    %v1382 = vsel %vm1318, %v1200, %v1350
    %v1383 = vsel %vm1319, %v1205, %v1351
    %v1384 = vsel %vm1320, %v1208, %v1352
    %v1385 = vsel %vm1321, %v1213, %v1353
    %v1386 = vsel %vm1322, %v1216, %v1354
    %v1387 = vsel %vm1323, %v1221, %v1355
    %v1388 = vsel %vm1324, %v1224, %v1356
    %v1389 = vsel %vm1325, %v1229, %v1357
    %v1390 = vsel %vm1326, %v1232, %v1358
    %v1391 = vsel %vm1327, %v1237, %v1359
    %v1392 = vsel %vm1328, %v1240, %v1360
    %v1393 = vsel %vm1329, %v1245, %v1361
    %v1394 = vsel %vm1330, %v1248, %v1362
    %v1395 = vsel %vm1331, %v1253, %v1363
    %v1396 = vsel %vm1332, %v1256, %v1364
    %v1397 = vsel %vm1333, %v1261, %v1365
    %v1398 = vsel %vm1334, %v1264, %v1366
    %v1399 = vsel %vm1335, %v1269, %v1367
    %v1400 = vsel %vm1336, %v1272, %v1368
    %v1401 = vsel %vm1337, %v1277, %v1369
    %v1402 = vsel %vm1338, %v1280, %v1370
    %v1403 = vsel %vm1339, %v1285, %v1371
    %v1404 = vsel %vm1340, %v1288, %v1372
    %v1405 = vsel %vm1341, %v1293, %v1373
    %v1406 = vsel %vm1342, %v1296, %v1374
    %v1407 = vsel %vm1343, %v1301, %v1375
    %v1408 = vsel %vm1344, %v1304, %v1376
    %v1409 = vsel %vm1345, %v1309, %v1377
    %v1410 = vsel %vm1346, %v1312, %v1378
    %v1411 = vpack.c.bf16 %v1380, %v1379
    %v1412 = vpack.c.bf16 %v1382, %v1381
    %v1413 = vpack.c.bf16 %v1384, %v1383
    %v1414 = vpack.c.bf16 %v1386, %v1385
    %v1415 = vpack.c.bf16 %v1388, %v1387
    %v1416 = vpack.c.bf16 %v1390, %v1389
    %v1417 = vpack.c.bf16 %v1392, %v1391
    %v1418 = vpack.c.bf16 %v1394, %v1393
    %v1419 = vpack.c.bf16 %v1396, %v1395
    %v1420 = vpack.c.bf16 %v1398, %v1397
    %v1421 = vpack.c.bf16 %v1400, %v1399
    %v1422 = vpack.c.bf16 %v1402, %v1401
    %v1423 = vpack.c.bf16 %v1404, %v1403
    %v1424 = vpack.c.bf16 %v1406, %v1405
    %v1425 = vpack.c.bf16 %v1408, %v1407
    %v1426 = vpack.c.bf16 %v1410, %v1409
    %v1427 = vld [vmem:[#allocation8] sm:$0xff]
    %v1428 = vld [vmem:[#allocation8 + $0x8] sm:$0xff]
    %v1429 = vld [vmem:[#allocation8 + $0x10] sm:$0xff]
    %v1430 = vld [vmem:[#allocation8 + $0x18] sm:$0xff]
    %v1431 = vld [vmem:[#allocation8 + $0x20] sm:$0xff]
    %v1432 = vld [vmem:[#allocation8 + $0x28] sm:$0xff]
    %v1433 = vld [vmem:[#allocation8 + $0x30] sm:$0xff]
    %v1434 = vld [vmem:[#allocation8 + $0x38] sm:$0xff]
    %v1435 = vld [vmem:[#allocation8 + $0x40] sm:$0xff]
    %v1436 = vld [vmem:[#allocation8 + $0x48] sm:$0xff]
    %v1437 = vld [vmem:[#allocation8 + $0x50] sm:$0xff]
    %v1438 = vld [vmem:[#allocation8 + $0x58] sm:$0xff]
    %v1439 = vld [vmem:[#allocation8 + $0x60] sm:$0xff]
    %v1440 = vld [vmem:[#allocation8 + $0x68] sm:$0xff]
    %v1441 = vld [vmem:[#allocation8 + $0x70] sm:$0xff]
    %v1442 = vld [vmem:[#allocation8 + $0x78] sm:$0xff]
    %v1443 = vld [vmem:[#allocation8 + $0x80] sm:$0xff]
    %v1444 = vld [vmem:[#allocation8 + $0x88] sm:$0xff]
    %v1445 = vld [vmem:[#allocation8 + $0x90] sm:$0xff]
    %v1446 = vld [vmem:[#allocation8 + $0x98] sm:$0xff]
    %v1447 = vld [vmem:[#allocation8 + $0xa0] sm:$0xff]
    %v1448 = vld [vmem:[#allocation8 + $0xa8] sm:$0xff]
    %v1449 = vld [vmem:[#allocation8 + $0xb0] sm:$0xff]
    %v1450 = vld [vmem:[#allocation8 + $0xb8] sm:$0xff]
    %v1451 = vld [vmem:[#allocation8 + $0xc0] sm:$0xff]
    %v1452 = vld [vmem:[#allocation8 + $0xc8] sm:$0xff]
    %v1453 = vld [vmem:[#allocation8 + $0xd0] sm:$0xff]
    %v1454 = vld [vmem:[#allocation8 + $0xd8] sm:$0xff]
    %v1455 = vld [vmem:[#allocation8 + $0xe0] sm:$0xff]
    %v1456 = vld [vmem:[#allocation8 + $0xe8] sm:$0xff]
    %v1457 = vld [vmem:[#allocation8 + $0xf0] sm:$0xff]
    %v1458 = vld [vmem:[#allocation8 + $0xf8] sm:$0xff]
    %v1459 = vld [vmem:[%s4] sm:$0xf]
    %v1461 = vlaneseq
    %v1462 = vshrl.u32 %v1461, 7
    %v1463 = vsub.s32 0, %v1462
    %v1464 = vrot.slane %v1459, %v1463
    %v1465 = vlaneseq
    %v1466 = vshrl.u32 %v1465, 7
    %v1467 = vsub.s32 1, %v1466
    %v1468 = vrot.slane %v1459, %v1467
    %v1469 = vlaneseq
    %v1470 = vshrl.u32 %v1469, 7
    %v1471 = vsub.s32 2, %v1470
    %v1472 = vrot.slane %v1459, %v1471
    %v1473 = vlaneseq
    %v1474 = vshrl.u32 %v1473, 7
    %v1475 = vsub.s32 3, %v1474
    %v1476 = vrot.slane %v1459, %v1475
    %v1513 = vunpack.c.l.b16 %v1427
    %v1514 = vunpack.c.h.b16 %v1427
    %v1515 = vunpack.c.l.b16 %v1428
    %v1516 = vunpack.c.h.b16 %v1428
    %v1517 = vunpack.c.l.b16 %v1429
    %v1518 = vunpack.c.h.b16 %v1429
    %v1519 = vunpack.c.l.b16 %v1430
    %v1520 = vunpack.c.h.b16 %v1430
    %v1521 = vunpack.c.l.b16 %v1431
    %v1522 = vunpack.c.h.b16 %v1431
    %v1523 = vunpack.c.l.b16 %v1432
    %v1524 = vunpack.c.h.b16 %v1432
    %v1525 = vunpack.c.l.b16 %v1433
    %v1526 = vunpack.c.h.b16 %v1433
    %v1527 = vunpack.c.l.b16 %v1434
    %v1528 = vunpack.c.h.b16 %v1434
    %v1529 = vunpack.c.l.b16 %v1435
    %v1530 = vunpack.c.h.b16 %v1435
    %v1531 = vunpack.c.l.b16 %v1436
    %v1532 = vunpack.c.h.b16 %v1436
    %v1533 = vunpack.c.l.b16 %v1437
    %v1534 = vunpack.c.h.b16 %v1437
    %v1535 = vunpack.c.l.b16 %v1438
    %v1536 = vunpack.c.h.b16 %v1438
    %v1537 = vunpack.c.l.b16 %v1439
    %v1538 = vunpack.c.h.b16 %v1439
    %v1539 = vunpack.c.l.b16 %v1440
    %v1540 = vunpack.c.h.b16 %v1440
    %v1541 = vunpack.c.l.b16 %v1441
    %v1542 = vunpack.c.h.b16 %v1441
    %v1543 = vunpack.c.l.b16 %v1442
    %v1544 = vunpack.c.h.b16 %v1442
    %v1545 = vunpack.c.l.b16 %v1443
    %v1546 = vunpack.c.h.b16 %v1443
    %v1547 = vunpack.c.l.b16 %v1444
    %v1548 = vunpack.c.h.b16 %v1444
    %v1549 = vunpack.c.l.b16 %v1445
    %v1550 = vunpack.c.h.b16 %v1445
    %v1551 = vunpack.c.l.b16 %v1446
    %v1552 = vunpack.c.h.b16 %v1446
    %v1553 = vunpack.c.l.b16 %v1447
    %v1554 = vunpack.c.h.b16 %v1447
    %v1555 = vunpack.c.l.b16 %v1448
    %v1556 = vunpack.c.h.b16 %v1448
    %v1557 = vunpack.c.l.b16 %v1449
    %v1558 = vunpack.c.h.b16 %v1449
    %v1559 = vunpack.c.l.b16 %v1450
    %v1560 = vunpack.c.h.b16 %v1450
    %v1561 = vunpack.c.l.b16 %v1451
    %v1562 = vunpack.c.h.b16 %v1451
    %v1563 = vunpack.c.l.b16 %v1452
    %v1564 = vunpack.c.h.b16 %v1452
    %v1565 = vunpack.c.l.b16 %v1453
    %v1566 = vunpack.c.h.b16 %v1453
    %v1567 = vunpack.c.l.b16 %v1454
    %v1568 = vunpack.c.h.b16 %v1454
    %v1569 = vunpack.c.l.b16 %v1455
    %v1570 = vunpack.c.h.b16 %v1455
    %v1571 = vunpack.c.l.b16 %v1456
    %v1572 = vunpack.c.h.b16 %v1456
    %v1573 = vunpack.c.l.b16 %v1457
    %v1574 = vunpack.c.h.b16 %v1457
    %v1575 = vunpack.c.l.b16 %v1458
    %v1576 = vunpack.c.h.b16 %v1458
    %v1577 = vpack.c.b16 %v1517, %v1513
    %v1578 = vpack.c.b16 %v1518, %v1514
    %v1579 = vpack.c.b16 %v1519, %v1515
    %v1580 = vpack.c.b16 %v1520, %v1516
    %v1581 = vpack.c.b16 %v1525, %v1521
    %v1582 = vpack.c.b16 %v1526, %v1522
    %v1583 = vpack.c.b16 %v1527, %v1523
    %v1584 = vpack.c.b16 %v1528, %v1524
    %v1585 = vpack.c.b16 %v1533, %v1529
    %v1586 = vpack.c.b16 %v1534, %v1530
    %v1587 = vpack.c.b16 %v1535, %v1531
    %v1588 = vpack.c.b16 %v1536, %v1532
    %v1589 = vpack.c.b16 %v1541, %v1537
    %v1590 = vpack.c.b16 %v1542, %v1538
    %v1591 = vpack.c.b16 %v1543, %v1539
    %v1592 = vpack.c.b16 %v1544, %v1540
    %v1593 = vpack.c.b16 %v1549, %v1545
    %v1594 = vpack.c.b16 %v1550, %v1546
    %v1595 = vpack.c.b16 %v1551, %v1547
    %v1596 = vpack.c.b16 %v1552, %v1548
    %v1597 = vpack.c.b16 %v1557, %v1553
    %v1598 = vpack.c.b16 %v1558, %v1554
    %v1599 = vpack.c.b16 %v1559, %v1555
    %v1600 = vpack.c.b16 %v1560, %v1556
    %v1601 = vpack.c.b16 %v1565, %v1561
    %v1602 = vpack.c.b16 %v1566, %v1562
    %v1603 = vpack.c.b16 %v1567, %v1563
    %v1604 = vpack.c.b16 %v1568, %v1564
    %v1605 = vpack.c.b16 %v1573, %v1569
    %v1606 = vpack.c.b16 %v1574, %v1570
    %v1607 = vpack.c.b16 %v1575, %v1571
    %v1608 = vpack.c.b16 %v1576, %v1572
    %1641 = vmatprep.subr.bf16.mxu0 %v1578
    %1642 = vmatpush1.bf16.msra.mxu0 %v1577
    %1643 = vmatprep.subr.bf16.mxu0 %v1582
    %1644 = vmatpush1.bf16.msra.mxu0 %v1581
    %1645 = vmatprep.subr.bf16.mxu0 %v1586
    %1646 = vmatpush1.bf16.msra.mxu0 %v1585
    %1647 = vmatprep.subr.bf16.mxu0 %v1590
    %1648 = vmatpush1.bf16.msra.mxu0 %v1589
    %1649 = vmatprep.subr.bf16.mxu0 %v1594
    %1650 = vmatpush1.bf16.msra.mxu0 %v1593
    %1651 = vmatprep.subr.bf16.mxu0 %v1598
    %1652 = vmatpush1.bf16.msra.mxu0 %v1597
    %1653 = vmatprep.subr.bf16.mxu0 %v1602
    %1654 = vmatpush1.bf16.msra.mxu0 %v1601
    %1655 = vmatprep.subr.bf16.mxu0 %v1606
    %1656 = vmatpush1.bf16.msra.mxu0 %v1605
    %1657 = vmatprep.subr.bf16.mxu0 0
    %1658 = vmatpush1.bf16.msra.mxu0 0
    %1659 = vmatprep.subr.bf16.mxu0 0
    %1660 = vmatpush1.bf16.msra.mxu0 0
    %1661 = vmatprep.subr.bf16.mxu0 0
    %1662 = vmatpush1.bf16.msra.mxu0 0
    %1663 = vmatprep.subr.bf16.mxu0 0
    %1664 = vmatpush1.bf16.msra.mxu0 0
    %1665 = vmatprep.subr.bf16.mxu0 0
    %1666 = vmatpush1.bf16.msra.mxu0 0
    %1667 = vmatprep.subr.bf16.mxu0 0
    %1668 = vmatpush1.bf16.msra.mxu0 0
    %1669 = vmatprep.subr.bf16.mxu0 0
    %1670 = vmatpush1.bf16.msra.mxu0 0
    %1671 = vmatprep.subr.bf16.mxu0 0
    %1672 = vmatpush1.bf16.msra.mxu0 0
    %1673 = vmatprep.mubr.bf16.mxu0 0
    %1674 = vmatmul.mubr.bf16.gmra.mrb[0].mxu0 %v1411
    %v1675 = vpop.f32.mrb[0].mxu0
    %v1676 = vadd.f32 %v1464, %v1675
    %v1677 = vpop.f32.mrb[0].mxu0
    %v1678 = vadd.f32 %v1468, %v1677
    %v1679 = vpop.f32.mrb[0].mxu0
    %v1680 = vadd.f32 %v1464, %v1679
    %v1681 = vpop.f32.mrb[0].mxu0
    %v1682 = vadd.f32 %v1468, %v1681
    %1683 = vmatprep.mubr.bf16.mxu0 0
    %1684 = vmatmul.mubr.bf16.gmra.mrb[0].mxu0 %v1412
    %v1685 = vpop.f32.mrb[0].mxu0
    %v1686 = vadd.f32 %v1464, %v1685
    %v1687 = vpop.f32.mrb[0].mxu0
    %v1688 = vadd.f32 %v1468, %v1687
    %v1689 = vpop.f32.mrb[0].mxu0
    %v1690 = vadd.f32 %v1464, %v1689
    %v1691 = vpop.f32.mrb[0].mxu0
    %v1692 = vadd.f32 %v1468, %v1691
    %1693 = vmatprep.mubr.bf16.mxu0 0
    %1694 = vmatmul.mubr.bf16.gmra.mrb[0].mxu0 %v1413
    %v1695 = vpop.f32.mrb[0].mxu0
    %v1696 = vadd.f32 %v1464, %v1695
    %v1697 = vpop.f32.mrb[0].mxu0
    %v1698 = vadd.f32 %v1468, %v1697
    %v1699 = vpop.f32.mrb[0].mxu0
    %v1700 = vadd.f32 %v1464, %v1699
    %v1701 = vpop.f32.mrb[0].mxu0
    %v1702 = vadd.f32 %v1468, %v1701
    %1703 = vmatprep.mubr.bf16.mxu0 0
    %1704 = vmatmul.mubr.bf16.gmra.mrb[0].mxu0 %v1414
    %v1705 = vpop.f32.mrb[0].mxu0
    %v1706 = vadd.f32 %v1464, %v1705
    %v1707 = vpop.f32.mrb[0].mxu0
    %v1708 = vadd.f32 %v1468, %v1707
    %v1709 = vpop.f32.mrb[0].mxu0
    %v1710 = vadd.f32 %v1464, %v1709
    %v1711 = vpop.f32.mrb[0].mxu0
    %v1712 = vadd.f32 %v1468, %v1711
    %1713 = vmatprep.mubr.bf16.mxu0 0
    %1714 = vmatmul.mubr.bf16.gmra.mrb[0].mxu0 %v1415
    %v1715 = vpop.f32.mrb[0].mxu0
    %v1716 = vadd.f32 %v1464, %v1715
    %v1717 = vpop.f32.mrb[0].mxu0
    %v1718 = vadd.f32 %v1468, %v1717
    %v1719 = vpop.f32.mrb[0].mxu0
    %v1720 = vadd.f32 %v1464, %v1719
    %v1721 = vpop.f32.mrb[0].mxu0
    %v1722 = vadd.f32 %v1468, %v1721
    %1723 = vmatprep.mubr.bf16.mxu0 0
    %1724 = vmatmul.mubr.bf16.gmra.mrb[0].mxu0 %v1416
    %v1725 = vpop.f32.mrb[0].mxu0
    %v1726 = vadd.f32 %v1464, %v1725
    %v1727 = vpop.f32.mrb[0].mxu0
    %v1728 = vadd.f32 %v1468, %v1727
    %v1729 = vpop.f32.mrb[0].mxu0
    %v1730 = vadd.f32 %v1464, %v1729
    %v1731 = vpop.f32.mrb[0].mxu0
    %v1732 = vadd.f32 %v1468, %v1731
    %1733 = vmatprep.mubr.bf16.mxu0 0
    %1734 = vmatmul.mubr.bf16.gmra.mrb[0].mxu0 %v1417
    %v1735 = vpop.f32.mrb[0].mxu0
    %v1736 = vadd.f32 %v1464, %v1735
    %v1737 = vpop.f32.mrb[0].mxu0
    %v1738 = vadd.f32 %v1468, %v1737
    %v1739 = vpop.f32.mrb[0].mxu0
    %v1740 = vadd.f32 %v1464, %v1739
    %v1741 = vpop.f32.mrb[0].mxu0
    %v1742 = vadd.f32 %v1468, %v1741
    %1743 = vmatprep.mubr.bf16.mxu0 0
    %1744 = vmatmul.mubr.bf16.gmra.mrb[0].mxu0 %v1418
    %v1745 = vpop.f32.mrb[0].mxu0
    %v1746 = vadd.f32 %v1464, %v1745
    %v1747 = vpop.f32.mrb[0].mxu0
    %v1748 = vadd.f32 %v1468, %v1747
    %v1749 = vpop.f32.mrb[0].mxu0
    %v1750 = vadd.f32 %v1464, %v1749
    %v1751 = vpop.f32.mrb[0].mxu0
    %v1752 = vadd.f32 %v1468, %v1751
    %1753 = vmatprep.mubr.bf16.mxu0 0
    %1754 = vmatmul.mubr.bf16.gmra.mrb[0].mxu0 %v1419
    %v1755 = vpop.f32.mrb[0].mxu0
    %v1756 = vadd.f32 %v1464, %v1755
    %v1757 = vpop.f32.mrb[0].mxu0
    %v1758 = vadd.f32 %v1468, %v1757
    %v1759 = vpop.f32.mrb[0].mxu0
    %v1760 = vadd.f32 %v1464, %v1759
    %v1761 = vpop.f32.mrb[0].mxu0
    %v1762 = vadd.f32 %v1468, %v1761
    %1763 = vmatprep.mubr.bf16.mxu0 0
    %1764 = vmatmul.mubr.bf16.gmra.mrb[0].mxu0 %v1420
    %v1765 = vpop.f32.mrb[0].mxu0
    %v1766 = vadd.f32 %v1464, %v1765
    %v1767 = vpop.f32.mrb[0].mxu0
    %v1768 = vadd.f32 %v1468, %v1767
    %v1769 = vpop.f32.mrb[0].mxu0
    %v1770 = vadd.f32 %v1464, %v1769
    %v1771 = vpop.f32.mrb[0].mxu0
    %v1772 = vadd.f32 %v1468, %v1771
    %1773 = vmatprep.mubr.bf16.mxu0 0
    %1774 = vmatmul.mubr.bf16.gmra.mrb[0].mxu0 %v1421
    %v1775 = vpop.f32.mrb[0].mxu0
    %v1776 = vadd.f32 %v1464, %v1775
    %v1777 = vpop.f32.mrb[0].mxu0
    %v1778 = vadd.f32 %v1468, %v1777
    %v1779 = vpop.f32.mrb[0].mxu0
    %v1780 = vadd.f32 %v1464, %v1779
    %v1781 = vpop.f32.mrb[0].mxu0
    %v1782 = vadd.f32 %v1468, %v1781
    %1783 = vmatprep.mubr.bf16.mxu0 0
    %1784 = vmatmul.mubr.bf16.gmra.mrb[0].mxu0 %v1422
    %v1785 = vpop.f32.mrb[0].mxu0
    %v1786 = vadd.f32 %v1464, %v1785
    %v1787 = vpop.f32.mrb[0].mxu0
    %v1788 = vadd.f32 %v1468, %v1787
    %v1789 = vpop.f32.mrb[0].mxu0
    %v1790 = vadd.f32 %v1464, %v1789
    %v1791 = vpop.f32.mrb[0].mxu0
    %v1792 = vadd.f32 %v1468, %v1791
    %1793 = vmatprep.mubr.bf16.mxu0 0
    %1794 = vmatmul.mubr.bf16.gmra.mrb[0].mxu0 %v1423
    %v1795 = vpop.f32.mrb[0].mxu0
    %v1796 = vadd.f32 %v1464, %v1795
    %v1797 = vpop.f32.mrb[0].mxu0
    %v1798 = vadd.f32 %v1468, %v1797
    %v1799 = vpop.f32.mrb[0].mxu0
    %v1800 = vadd.f32 %v1464, %v1799
    %v1801 = vpop.f32.mrb[0].mxu0
    %v1802 = vadd.f32 %v1468, %v1801
    %1803 = vmatprep.mubr.bf16.mxu0 0
    %1804 = vmatmul.mubr.bf16.gmra.mrb[0].mxu0 %v1424
    %v1805 = vpop.f32.mrb[0].mxu0
    %v1806 = vadd.f32 %v1464, %v1805
    %v1807 = vpop.f32.mrb[0].mxu0
    %v1808 = vadd.f32 %v1468, %v1807
    %v1809 = vpop.f32.mrb[0].mxu0
    %v1810 = vadd.f32 %v1464, %v1809
    %v1811 = vpop.f32.mrb[0].mxu0
    %v1812 = vadd.f32 %v1468, %v1811
    %1813 = vmatprep.mubr.bf16.mxu0 0
    %1814 = vmatmul.mubr.bf16.gmra.mrb[0].mxu0 %v1425
    %v1815 = vpop.f32.mrb[0].mxu0
    %v1816 = vadd.f32 %v1464, %v1815
    %v1817 = vpop.f32.mrb[0].mxu0
    %v1818 = vadd.f32 %v1468, %v1817
    %v1819 = vpop.f32.mrb[0].mxu0
    %v1820 = vadd.f32 %v1464, %v1819
    %v1821 = vpop.f32.mrb[0].mxu0
    %v1822 = vadd.f32 %v1468, %v1821
    %1823 = vmatprep.mubr.bf16.mxu0 0
    %1824 = vmatmul.mubr.bf16.gmra.mrb[0].mxu0 %v1426
    %v1825 = vpop.f32.mrb[0].mxu0
    %v1826 = vadd.f32 %v1464, %v1825
    %v1827 = vpop.f32.mrb[0].mxu0
    %v1828 = vadd.f32 %v1468, %v1827
    %v1829 = vpop.f32.mrb[0].mxu0
    %v1830 = vadd.f32 %v1464, %v1829
    %v1831 = vpop.f32.mrb[0].mxu0
    %v1832 = vadd.f32 %v1468, %v1831
    %1833 = vdwg.mxu0
    %1834 = vmatprep.subr.bf16.mxu0 %v1580
    %1835 = vmatpush1.bf16.msra.mxu0 %v1579
    %1836 = vmatprep.subr.bf16.mxu0 %v1584
    %1837 = vmatpush1.bf16.msra.mxu0 %v1583
    %1838 = vmatprep.subr.bf16.mxu0 %v1588
    %1839 = vmatpush1.bf16.msra.mxu0 %v1587
    %1840 = vmatprep.subr.bf16.mxu0 %v1592
    %1841 = vmatpush1.bf16.msra.mxu0 %v1591
    %1842 = vmatprep.subr.bf16.mxu0 %v1596
    %1843 = vmatpush1.bf16.msra.mxu0 %v1595
    %1844 = vmatprep.subr.bf16.mxu0 %v1600
    %1845 = vmatpush1.bf16.msra.mxu0 %v1599
    %1846 = vmatprep.subr.bf16.mxu0 %v1604
    %1847 = vmatpush1.bf16.msra.mxu0 %v1603
    %1848 = vmatprep.subr.bf16.mxu0 %v1608
    %1849 = vmatpush1.bf16.msra.mxu0 %v1607
    %1850 = vmatprep.subr.bf16.mxu0 0
    %1851 = vmatpush1.bf16.msra.mxu0 0
    %1852 = vmatprep.subr.bf16.mxu0 0
    %1853 = vmatpush1.bf16.msra.mxu0 0
    %1854 = vmatprep.subr.bf16.mxu0 0
    %1855 = vmatpush1.bf16.msra.mxu0 0
    %1856 = vmatprep.subr.bf16.mxu0 0
    %1857 = vmatpush1.bf16.msra.mxu0 0
    %1858 = vmatprep.subr.bf16.mxu0 0
    %1859 = vmatpush1.bf16.msra.mxu0 0
    %1860 = vmatprep.subr.bf16.mxu0 0
    %1861 = vmatpush1.bf16.msra.mxu0 0
    %1862 = vmatprep.subr.bf16.mxu0 0
    %1863 = vmatpush1.bf16.msra.mxu0 0
    %1864 = vmatprep.subr.bf16.mxu0 0
    %1865 = vmatpush1.bf16.msra.mxu0 0
    %1866 = vmatprep.mubr.bf16.mxu0 0
    %1867 = vmatmul.mubr.bf16.gmra.mrb[0].mxu0 %v1411
    %v1868 = vpop.f32.mrb[0].mxu0
    %v1869 = vadd.f32 %v1472, %v1868
    %v1870 = vpop.f32.mrb[0].mxu0
    %v1871 = vadd.f32 %v1476, %v1870
    %v1872 = vpop.f32.mrb[0].mxu0
    %v1873 = vadd.f32 %v1472, %v1872
    %v1874 = vpop.f32.mrb[0].mxu0
    %v1875 = vadd.f32 %v1476, %v1874
    %1876 = vmatprep.mubr.bf16.mxu0 0
    %1877 = vmatmul.mubr.bf16.gmra.mrb[0].mxu0 %v1412
    %v1878 = vpop.f32.mrb[0].mxu0
    %v1879 = vadd.f32 %v1472, %v1878
    %v1880 = vpop.f32.mrb[0].mxu0
    %v1881 = vadd.f32 %v1476, %v1880
    %v1882 = vpop.f32.mrb[0].mxu0
    %v1883 = vadd.f32 %v1472, %v1882
    %v1884 = vpop.f32.mrb[0].mxu0
    %v1885 = vadd.f32 %v1476, %v1884
    %1886 = vmatprep.mubr.bf16.mxu0 0
    %1887 = vmatmul.mubr.bf16.gmra.mrb[0].mxu0 %v1413
    %v1888 = vpop.f32.mrb[0].mxu0
    %v1889 = vadd.f32 %v1472, %v1888
    %v1890 = vpop.f32.mrb[0].mxu0
    %v1891 = vadd.f32 %v1476, %v1890
    %v1892 = vpop.f32.mrb[0].mxu0
    %v1893 = vadd.f32 %v1472, %v1892
    %v1894 = vpop.f32.mrb[0].mxu0
    %v1895 = vadd.f32 %v1476, %v1894
    %1896 = vmatprep.mubr.bf16.mxu0 0
    %1897 = vmatmul.mubr.bf16.gmra.mrb[0].mxu0 %v1414
    %v1898 = vpop.f32.mrb[0].mxu0
    %v1899 = vadd.f32 %v1472, %v1898
    %v1900 = vpop.f32.mrb[0].mxu0
    %v1901 = vadd.f32 %v1476, %v1900
    %v1902 = vpop.f32.mrb[0].mxu0
    %v1903 = vadd.f32 %v1472, %v1902
    %v1904 = vpop.f32.mrb[0].mxu0
    %v1905 = vadd.f32 %v1476, %v1904
    %1906 = vmatprep.mubr.bf16.mxu0 0
    %1907 = vmatmul.mubr.bf16.gmra.mrb[0].mxu0 %v1415
    %v1908 = vpop.f32.mrb[0].mxu0
    %v1909 = vadd.f32 %v1472, %v1908
    %v1910 = vpop.f32.mrb[0].mxu0
    %v1911 = vadd.f32 %v1476, %v1910
    %v1912 = vpop.f32.mrb[0].mxu0
    %v1913 = vadd.f32 %v1472, %v1912
    %v1914 = vpop.f32.mrb[0].mxu0
    %v1915 = vadd.f32 %v1476, %v1914
    %1916 = vmatprep.mubr.bf16.mxu0 0
    %1917 = vmatmul.mubr.bf16.gmra.mrb[0].mxu0 %v1416
    %v1918 = vpop.f32.mrb[0].mxu0
    %v1919 = vadd.f32 %v1472, %v1918
    %v1920 = vpop.f32.mrb[0].mxu0
    %v1921 = vadd.f32 %v1476, %v1920
    %v1922 = vpop.f32.mrb[0].mxu0
    %v1923 = vadd.f32 %v1472, %v1922
    %v1924 = vpop.f32.mrb[0].mxu0
    %v1925 = vadd.f32 %v1476, %v1924
    %1926 = vmatprep.mubr.bf16.mxu0 0
    %1927 = vmatmul.mubr.bf16.gmra.mrb[0].mxu0 %v1417
    %v1928 = vpop.f32.mrb[0].mxu0
    %v1929 = vadd.f32 %v1472, %v1928
    %v1930 = vpop.f32.mrb[0].mxu0
    %v1931 = vadd.f32 %v1476, %v1930
    %v1932 = vpop.f32.mrb[0].mxu0
    %v1933 = vadd.f32 %v1472, %v1932
    %v1934 = vpop.f32.mrb[0].mxu0
    %v1935 = vadd.f32 %v1476, %v1934
    %1936 = vmatprep.mubr.bf16.mxu0 0
    %1937 = vmatmul.mubr.bf16.gmra.mrb[0].mxu0 %v1418
    %v1938 = vpop.f32.mrb[0].mxu0
    %v1939 = vadd.f32 %v1472, %v1938
    %v1940 = vpop.f32.mrb[0].mxu0
    %v1941 = vadd.f32 %v1476, %v1940
    %v1942 = vpop.f32.mrb[0].mxu0
    %v1943 = vadd.f32 %v1472, %v1942
    %v1944 = vpop.f32.mrb[0].mxu0
    %v1945 = vadd.f32 %v1476, %v1944
    %1946 = vmatprep.mubr.bf16.mxu0 0
    %1947 = vmatmul.mubr.bf16.gmra.mrb[0].mxu0 %v1419
    %v1948 = vpop.f32.mrb[0].mxu0
    %v1949 = vadd.f32 %v1472, %v1948
    %v1950 = vpop.f32.mrb[0].mxu0
    %v1951 = vadd.f32 %v1476, %v1950
    %v1952 = vpop.f32.mrb[0].mxu0
    %v1953 = vadd.f32 %v1472, %v1952
    %v1954 = vpop.f32.mrb[0].mxu0
    %v1955 = vadd.f32 %v1476, %v1954
    %1956 = vmatprep.mubr.bf16.mxu0 0
    %1957 = vmatmul.mubr.bf16.gmra.mrb[0].mxu0 %v1420
    %v1958 = vpop.f32.mrb[0].mxu0
    %v1959 = vadd.f32 %v1472, %v1958
    %v1960 = vpop.f32.mrb[0].mxu0
    %v1961 = vadd.f32 %v1476, %v1960
    %v1962 = vpop.f32.mrb[0].mxu0
    %v1963 = vadd.f32 %v1472, %v1962
    %v1964 = vpop.f32.mrb[0].mxu0
    %v1965 = vadd.f32 %v1476, %v1964
    %1966 = vmatprep.mubr.bf16.mxu0 0
    %1967 = vmatmul.mubr.bf16.gmra.mrb[0].mxu0 %v1421
    %v1968 = vpop.f32.mrb[0].mxu0
    %v1969 = vadd.f32 %v1472, %v1968
    %v1970 = vpop.f32.mrb[0].mxu0
    %v1971 = vadd.f32 %v1476, %v1970
    %v1972 = vpop.f32.mrb[0].mxu0
    %v1973 = vadd.f32 %v1472, %v1972
    %v1974 = vpop.f32.mrb[0].mxu0
    %v1975 = vadd.f32 %v1476, %v1974
    %1976 = vmatprep.mubr.bf16.mxu0 0
    %1977 = vmatmul.mubr.bf16.gmra.mrb[0].mxu0 %v1422
    %v1978 = vpop.f32.mrb[0].mxu0
    %v1979 = vadd.f32 %v1472, %v1978
    %v1980 = vpop.f32.mrb[0].mxu0
    %v1981 = vadd.f32 %v1476, %v1980
    %v1982 = vpop.f32.mrb[0].mxu0
    %v1983 = vadd.f32 %v1472, %v1982
    %v1984 = vpop.f32.mrb[0].mxu0
    %v1985 = vadd.f32 %v1476, %v1984
    %1986 = vmatprep.mubr.bf16.mxu0 0
    %1987 = vmatmul.mubr.bf16.gmra.mrb[0].mxu0 %v1423
    %v1988 = vpop.f32.mrb[0].mxu0
    %v1989 = vadd.f32 %v1472, %v1988
    %v1990 = vpop.f32.mrb[0].mxu0
    %v1991 = vadd.f32 %v1476, %v1990
    %v1992 = vpop.f32.mrb[0].mxu0
    %v1993 = vadd.f32 %v1472, %v1992
    %v1994 = vpop.f32.mrb[0].mxu0
    %v1995 = vadd.f32 %v1476, %v1994
    %1996 = vmatprep.mubr.bf16.mxu0 0
    %1997 = vmatmul.mubr.bf16.gmra.mrb[0].mxu0 %v1424
    %v1998 = vpop.f32.mrb[0].mxu0
    %v1999 = vadd.f32 %v1472, %v1998
    %v2000 = vpop.f32.mrb[0].mxu0
    %v2001 = vadd.f32 %v1476, %v2000
    %v2002 = vpop.f32.mrb[0].mxu0
    %v2003 = vadd.f32 %v1472, %v2002
    %v2004 = vpop.f32.mrb[0].mxu0
    %v2005 = vadd.f32 %v1476, %v2004
    %2006 = vmatprep.mubr.bf16.mxu0 0
    %2007 = vmatmul.mubr.bf16.gmra.mrb[0].mxu0 %v1425
    %v2008 = vpop.f32.mrb[0].mxu0
    %v2009 = vadd.f32 %v1472, %v2008
    %v2010 = vpop.f32.mrb[0].mxu0
    %v2011 = vadd.f32 %v1476, %v2010
    %v2012 = vpop.f32.mrb[0].mxu0
    %v2013 = vadd.f32 %v1472, %v2012
    %v2014 = vpop.f32.mrb[0].mxu0
    %v2015 = vadd.f32 %v1476, %v2014
    %2016 = vmatprep.mubr.bf16.mxu0 0
    %2017 = vmatmul.mubr.bf16.gmra.mrb[0].mxu0 %v1426
    %v2018 = vpop.f32.mrb[0].mxu0
    %v2019 = vadd.f32 %v1472, %v2018
    %v2020 = vpop.f32.mrb[0].mxu0
    %v2021 = vadd.f32 %v1476, %v2020
    %v2022 = vpop.f32.mrb[0].mxu0
    %v2023 = vadd.f32 %v1472, %v2022
    %v2024 = vpop.f32.mrb[0].mxu0
    %v2025 = vadd.f32 %v1476, %v2024
    %2026 = vdwg.mxu0
    %vm2027 = vcmp.gt.f32.partialorder %v1676, 0.0
    %vm2028 = vcmp.gt.f32.partialorder %v1678, 0.0
    %vm2029 = vcmp.gt.f32.partialorder %v1869, 0.0
    %vm2030 = vcmp.gt.f32.partialorder %v1871, 0.0
    %vm2031 = vcmp.gt.f32.partialorder %v1680, 0.0
    %vm2032 = vcmp.gt.f32.partialorder %v1682, 0.0
    %vm2033 = vcmp.gt.f32.partialorder %v1873, 0.0
    %vm2034 = vcmp.gt.f32.partialorder %v1875, 0.0
    %vm2035 = vcmp.gt.f32.partialorder %v1686, 0.0
    %vm2036 = vcmp.gt.f32.partialorder %v1688, 0.0
    %vm2037 = vcmp.gt.f32.partialorder %v1879, 0.0
    %vm2038 = vcmp.gt.f32.partialorder %v1881, 0.0
    %vm2039 = vcmp.gt.f32.partialorder %v1690, 0.0
    %vm2040 = vcmp.gt.f32.partialorder %v1692, 0.0
    %vm2041 = vcmp.gt.f32.partialorder %v1883, 0.0
    %vm2042 = vcmp.gt.f32.partialorder %v1885, 0.0
    %vm2043 = vcmp.gt.f32.partialorder %v1696, 0.0
    %vm2044 = vcmp.gt.f32.partialorder %v1698, 0.0
    %vm2045 = vcmp.gt.f32.partialorder %v1889, 0.0
    %vm2046 = vcmp.gt.f32.partialorder %v1891, 0.0
    %vm2047 = vcmp.gt.f32.partialorder %v1700, 0.0
    %vm2048 = vcmp.gt.f32.partialorder %v1702, 0.0
    %vm2049 = vcmp.gt.f32.partialorder %v1893, 0.0
    %vm2050 = vcmp.gt.f32.partialorder %v1895, 0.0
    %vm2051 = vcmp.gt.f32.partialorder %v1706, 0.0
    %vm2052 = vcmp.gt.f32.partialorder %v1708, 0.0
    %vm2053 = vcmp.gt.f32.partialorder %v1899, 0.0
    %vm2054 = vcmp.gt.f32.partialorder %v1901, 0.0
    %vm2055 = vcmp.gt.f32.partialorder %v1710, 0.0
    %vm2056 = vcmp.gt.f32.partialorder %v1712, 0.0
    %vm2057 = vcmp.gt.f32.partialorder %v1903, 0.0
    %vm2058 = vcmp.gt.f32.partialorder %v1905, 0.0
    %vm2059 = vcmp.gt.f32.partialorder %v1716, 0.0
    %vm2060 = vcmp.gt.f32.partialorder %v1718, 0.0
    %vm2061 = vcmp.gt.f32.partialorder %v1909, 0.0
    %vm2062 = vcmp.gt.f32.partialorder %v1911, 0.0
    %vm2063 = vcmp.gt.f32.partialorder %v1720, 0.0
    %vm2064 = vcmp.gt.f32.partialorder %v1722, 0.0
    %vm2065 = vcmp.gt.f32.partialorder %v1913, 0.0
    %vm2066 = vcmp.gt.f32.partialorder %v1915, 0.0
    %vm2067 = vcmp.gt.f32.partialorder %v1726, 0.0
    %vm2068 = vcmp.gt.f32.partialorder %v1728, 0.0
    %vm2069 = vcmp.gt.f32.partialorder %v1919, 0.0
    %vm2070 = vcmp.gt.f32.partialorder %v1921, 0.0
    %vm2071 = vcmp.gt.f32.partialorder %v1730, 0.0
    %vm2072 = vcmp.gt.f32.partialorder %v1732, 0.0
    %vm2073 = vcmp.gt.f32.partialorder %v1923, 0.0
    %vm2074 = vcmp.gt.f32.partialorder %v1925, 0.0
    %vm2075 = vcmp.gt.f32.partialorder %v1736, 0.0
    %vm2076 = vcmp.gt.f32.partialorder %v1738, 0.0
    %vm2077 = vcmp.gt.f32.partialorder %v1929, 0.0
    %vm2078 = vcmp.gt.f32.partialorder %v1931, 0.0
    %vm2079 = vcmp.gt.f32.partialorder %v1740, 0.0
    %vm2080 = vcmp.gt.f32.partialorder %v1742, 0.0
    %vm2081 = vcmp.gt.f32.partialorder %v1933, 0.0
    %vm2082 = vcmp.gt.f32.partialorder %v1935, 0.0
    %vm2083 = vcmp.gt.f32.partialorder %v1746, 0.0
    %vm2084 = vcmp.gt.f32.partialorder %v1748, 0.0
    %vm2085 = vcmp.gt.f32.partialorder %v1939, 0.0
    %vm2086 = vcmp.gt.f32.partialorder %v1941, 0.0
    %vm2087 = vcmp.gt.f32.partialorder %v1750, 0.0
    %vm2088 = vcmp.gt.f32.partialorder %v1752, 0.0
    %vm2089 = vcmp.gt.f32.partialorder %v1943, 0.0
    %vm2090 = vcmp.gt.f32.partialorder %v1945, 0.0
    %vm2091 = vcmp.gt.f32.partialorder %v1756, 0.0
    %vm2092 = vcmp.gt.f32.partialorder %v1758, 0.0
    %vm2093 = vcmp.gt.f32.partialorder %v1949, 0.0
    %vm2094 = vcmp.gt.f32.partialorder %v1951, 0.0
    %vm2095 = vcmp.gt.f32.partialorder %v1760, 0.0
    %vm2096 = vcmp.gt.f32.partialorder %v1762, 0.0
    %vm2097 = vcmp.gt.f32.partialorder %v1953, 0.0
    %vm2098 = vcmp.gt.f32.partialorder %v1955, 0.0
    %vm2099 = vcmp.gt.f32.partialorder %v1766, 0.0
    %vm2100 = vcmp.gt.f32.partialorder %v1768, 0.0
    %vm2101 = vcmp.gt.f32.partialorder %v1959, 0.0
    %vm2102 = vcmp.gt.f32.partialorder %v1961, 0.0
    %vm2103 = vcmp.gt.f32.partialorder %v1770, 0.0
    %vm2104 = vcmp.gt.f32.partialorder %v1772, 0.0
    %vm2105 = vcmp.gt.f32.partialorder %v1963, 0.0
    %vm2106 = vcmp.gt.f32.partialorder %v1965, 0.0
    %vm2107 = vcmp.gt.f32.partialorder %v1776, 0.0
    %vm2108 = vcmp.gt.f32.partialorder %v1778, 0.0
    %vm2109 = vcmp.gt.f32.partialorder %v1969, 0.0
    %vm2110 = vcmp.gt.f32.partialorder %v1971, 0.0
    %vm2111 = vcmp.gt.f32.partialorder %v1780, 0.0
    %vm2112 = vcmp.gt.f32.partialorder %v1782, 0.0
    %vm2113 = vcmp.gt.f32.partialorder %v1973, 0.0
    %vm2114 = vcmp.gt.f32.partialorder %v1975, 0.0
    %vm2115 = vcmp.gt.f32.partialorder %v1786, 0.0
    %vm2116 = vcmp.gt.f32.partialorder %v1788, 0.0
    %vm2117 = vcmp.gt.f32.partialorder %v1979, 0.0
    %vm2118 = vcmp.gt.f32.partialorder %v1981, 0.0
    %vm2119 = vcmp.gt.f32.partialorder %v1790, 0.0
    %vm2120 = vcmp.gt.f32.partialorder %v1792, 0.0
    %vm2121 = vcmp.gt.f32.partialorder %v1983, 0.0
    %vm2122 = vcmp.gt.f32.partialorder %v1985, 0.0
    %vm2123 = vcmp.gt.f32.partialorder %v1796, 0.0
    %vm2124 = vcmp.gt.f32.partialorder %v1798, 0.0
    %vm2125 = vcmp.gt.f32.partialorder %v1989, 0.0
    %vm2126 = vcmp.gt.f32.partialorder %v1991, 0.0
    %vm2127 = vcmp.gt.f32.partialorder %v1800, 0.0
    %vm2128 = vcmp.gt.f32.partialorder %v1802, 0.0
    %vm2129 = vcmp.gt.f32.partialorder %v1993, 0.0
    %vm2130 = vcmp.gt.f32.partialorder %v1995, 0.0
    %vm2131 = vcmp.gt.f32.partialorder %v1806, 0.0
    %vm2132 = vcmp.gt.f32.partialorder %v1808, 0.0
    %vm2133 = vcmp.gt.f32.partialorder %v1999, 0.0
    %vm2134 = vcmp.gt.f32.partialorder %v2001, 0.0
    %vm2135 = vcmp.gt.f32.partialorder %v1810, 0.0
    %vm2136 = vcmp.gt.f32.partialorder %v1812, 0.0
    %vm2137 = vcmp.gt.f32.partialorder %v2003, 0.0
    %vm2138 = vcmp.gt.f32.partialorder %v2005, 0.0
    %vm2139 = vcmp.gt.f32.partialorder %v1816, 0.0
    %vm2140 = vcmp.gt.f32.partialorder %v1818, 0.0
    %vm2141 = vcmp.gt.f32.partialorder %v2009, 0.0
    %vm2142 = vcmp.gt.f32.partialorder %v2011, 0.0
    %vm2143 = vcmp.gt.f32.partialorder %v1820, 0.0
    %vm2144 = vcmp.gt.f32.partialorder %v1822, 0.0
    %vm2145 = vcmp.gt.f32.partialorder %v2013, 0.0
    %vm2146 = vcmp.gt.f32.partialorder %v2015, 0.0
    %vm2147 = vcmp.gt.f32.partialorder %v1826, 0.0
    %vm2148 = vcmp.gt.f32.partialorder %v1828, 0.0
    %vm2149 = vcmp.gt.f32.partialorder %v2019, 0.0
    %vm2150 = vcmp.gt.f32.partialorder %v2021, 0.0
    %vm2151 = vcmp.gt.f32.partialorder %v1830, 0.0
    %vm2152 = vcmp.gt.f32.partialorder %v1832, 0.0
    %vm2153 = vcmp.gt.f32.partialorder %v2023, 0.0
    %vm2154 = vcmp.gt.f32.partialorder %v2025, 0.0
    %v2155 = vmul.f32 %v1676, 0.2
    %v2156 = vmul.f32 %v1678, 0.2
    %v2157 = vmul.f32 %v1869, 0.2
    %v2158 = vmul.f32 %v1871, 0.2
    %v2159 = vmul.f32 %v1680, 0.2
    %v2160 = vmul.f32 %v1682, 0.2
    %v2161 = vmul.f32 %v1873, 0.2
    %v2162 = vmul.f32 %v1875, 0.2
    %v2163 = vmul.f32 %v1686, 0.2
    %v2164 = vmul.f32 %v1688, 0.2
    %v2165 = vmul.f32 %v1879, 0.2
    %v2166 = vmul.f32 %v1881, 0.2
    %v2167 = vmul.f32 %v1690, 0.2
    %v2168 = vmul.f32 %v1692, 0.2
    %v2169 = vmul.f32 %v1883, 0.2
    %v2170 = vmul.f32 %v1885, 0.2
    %v2171 = vmul.f32 %v1696, 0.2
    %v2172 = vmul.f32 %v1698, 0.2
    %v2173 = vmul.f32 %v1889, 0.2
    %v2174 = vmul.f32 %v1891, 0.2
    %v2175 = vmul.f32 %v1700, 0.2
    %v2176 = vmul.f32 %v1702, 0.2
    %v2177 = vmul.f32 %v1893, 0.2
    %v2178 = vmul.f32 %v1895, 0.2
    %v2179 = vmul.f32 %v1706, 0.2
    %v2180 = vmul.f32 %v1708, 0.2
    %v2181 = vmul.f32 %v1899, 0.2
    %v2182 = vmul.f32 %v1901, 0.2
    %v2183 = vmul.f32 %v1710, 0.2
    %v2184 = vmul.f32 %v1712, 0.2
    %v2185 = vmul.f32 %v1903, 0.2
    %v2186 = vmul.f32 %v1905, 0.2
    %v2187 = vmul.f32 %v1716, 0.2
    %v2188 = vmul.f32 %v1718, 0.2
    %v2189 = vmul.f32 %v1909, 0.2
    %v2190 = vmul.f32 %v1911, 0.2
    %v2191 = vmul.f32 %v1720, 0.2
    %v2192 = vmul.f32 %v1722, 0.2
    %v2193 = vmul.f32 %v1913, 0.2
    %v2194 = vmul.f32 %v1915, 0.2
    %v2195 = vmul.f32 %v1726, 0.2
    %v2196 = vmul.f32 %v1728, 0.2
    %v2197 = vmul.f32 %v1919, 0.2
    %v2198 = vmul.f32 %v1921, 0.2
    %v2199 = vmul.f32 %v1730, 0.2
    %v2200 = vmul.f32 %v1732, 0.2
    %v2201 = vmul.f32 %v1923, 0.2
    %v2202 = vmul.f32 %v1925, 0.2
    %v2203 = vmul.f32 %v1736, 0.2
    %v2204 = vmul.f32 %v1738, 0.2
    %v2205 = vmul.f32 %v1929, 0.2
    %v2206 = vmul.f32 %v1931, 0.2
    %v2207 = vmul.f32 %v1740, 0.2
    %v2208 = vmul.f32 %v1742, 0.2
    %v2209 = vmul.f32 %v1933, 0.2
    %v2210 = vmul.f32 %v1935, 0.2
    %v2211 = vmul.f32 %v1746, 0.2
    %v2212 = vmul.f32 %v1748, 0.2
    %v2213 = vmul.f32 %v1939, 0.2
    %v2214 = vmul.f32 %v1941, 0.2
    %v2215 = vmul.f32 %v1750, 0.2
    %v2216 = vmul.f32 %v1752, 0.2
    %v2217 = vmul.f32 %v1943, 0.2
    %v2218 = vmul.f32 %v1945, 0.2
    %v2219 = vmul.f32 %v1756, 0.2
    %v2220 = vmul.f32 %v1758, 0.2
    %v2221 = vmul.f32 %v1949, 0.2
    %v2222 = vmul.f32 %v1951, 0.2
    %v2223 = vmul.f32 %v1760, 0.2
    %v2224 = vmul.f32 %v1762, 0.2
    %v2225 = vmul.f32 %v1953, 0.2
    %v2226 = vmul.f32 %v1955, 0.2
    %v2227 = vmul.f32 %v1766, 0.2
    %v2228 = vmul.f32 %v1768, 0.2
    %v2229 = vmul.f32 %v1959, 0.2
    %v2230 = vmul.f32 %v1961, 0.2
    %v2231 = vmul.f32 %v1770, 0.2
    %v2232 = vmul.f32 %v1772, 0.2
    %v2233 = vmul.f32 %v1963, 0.2
    %v2234 = vmul.f32 %v1965, 0.2
    %v2235 = vmul.f32 %v1776, 0.2
    %v2236 = vmul.f32 %v1778, 0.2
    %v2237 = vmul.f32 %v1969, 0.2
    %v2238 = vmul.f32 %v1971, 0.2
    %v2239 = vmul.f32 %v1780, 0.2
    %v2240 = vmul.f32 %v1782, 0.2
    %v2241 = vmul.f32 %v1973, 0.2
    %v2242 = vmul.f32 %v1975, 0.2
    %v2243 = vmul.f32 %v1786, 0.2
    %v2244 = vmul.f32 %v1788, 0.2
    %v2245 = vmul.f32 %v1979, 0.2
    %v2246 = vmul.f32 %v1981, 0.2
    %v2247 = vmul.f32 %v1790, 0.2
    %v2248 = vmul.f32 %v1792, 0.2
    %v2249 = vmul.f32 %v1983, 0.2
    %v2250 = vmul.f32 %v1985, 0.2
    %v2251 = vmul.f32 %v1796, 0.2
    %v2252 = vmul.f32 %v1798, 0.2
    %v2253 = vmul.f32 %v1989, 0.2
    %v2254 = vmul.f32 %v1991, 0.2
    %v2255 = vmul.f32 %v1800, 0.2
    %v2256 = vmul.f32 %v1802, 0.2
    %v2257 = vmul.f32 %v1993, 0.2
    %v2258 = vmul.f32 %v1995, 0.2
    %v2259 = vmul.f32 %v1806, 0.2
    %v2260 = vmul.f32 %v1808, 0.2
    %v2261 = vmul.f32 %v1999, 0.2
    %v2262 = vmul.f32 %v2001, 0.2
    %v2263 = vmul.f32 %v1810, 0.2
    %v2264 = vmul.f32 %v1812, 0.2
    %v2265 = vmul.f32 %v2003, 0.2
    %v2266 = vmul.f32 %v2005, 0.2
    %v2267 = vmul.f32 %v1816, 0.2
    %v2268 = vmul.f32 %v1818, 0.2
    %v2269 = vmul.f32 %v2009, 0.2
    %v2270 = vmul.f32 %v2011, 0.2
    %v2271 = vmul.f32 %v1820, 0.2
    %v2272 = vmul.f32 %v1822, 0.2
    %v2273 = vmul.f32 %v2013, 0.2
    %v2274 = vmul.f32 %v2015, 0.2
    %v2275 = vmul.f32 %v1826, 0.2
    %v2276 = vmul.f32 %v1828, 0.2
    %v2277 = vmul.f32 %v2019, 0.2
    %v2278 = vmul.f32 %v2021, 0.2
    %v2279 = vmul.f32 %v1830, 0.2
    %v2280 = vmul.f32 %v1832, 0.2
    %v2281 = vmul.f32 %v2023, 0.2
    %v2282 = vmul.f32 %v2025, 0.2
    %v2283 = vsel %vm2027, %v1676, %v2155
    %v2284 = vsel %vm2028, %v1678, %v2156
    %v2285 = vsel %vm2029, %v1869, %v2157
    %v2286 = vsel %vm2030, %v1871, %v2158
    %v2287 = vsel %vm2031, %v1680, %v2159
    %v2288 = vsel %vm2032, %v1682, %v2160
    %v2289 = vsel %vm2033, %v1873, %v2161
    %v2290 = vsel %vm2034, %v1875, %v2162
    %v2291 = vsel %vm2035, %v1686, %v2163
    %v2292 = vsel %vm2036, %v1688, %v2164
    %v2293 = vsel %vm2037, %v1879, %v2165
    %v2294 = vsel %vm2038, %v1881, %v2166
    %v2295 = vsel %vm2039, %v1690, %v2167
    %v2296 = vsel %vm2040, %v1692, %v2168
    %v2297 = vsel %vm2041, %v1883, %v2169
    %v2298 = vsel %vm2042, %v1885, %v2170
    %v2299 = vsel %vm2043, %v1696, %v2171
    %v2300 = vsel %vm2044, %v1698, %v2172
    %v2301 = vsel %vm2045, %v1889, %v2173
    %v2302 = vsel %vm2046, %v1891, %v2174
    %v2303 = vsel %vm2047, %v1700, %v2175
    %v2304 = vsel %vm2048, %v1702, %v2176
    %v2305 = vsel %vm2049, %v1893, %v2177
    %v2306 = vsel %vm2050, %v1895, %v2178
    %v2307 = vsel %vm2051, %v1706, %v2179
    %v2308 = vsel %vm2052, %v1708, %v2180
    %v2309 = vsel %vm2053, %v1899, %v2181
    %v2310 = vsel %vm2054, %v1901, %v2182
    %v2311 = vsel %vm2055, %v1710, %v2183
    %v2312 = vsel %vm2056, %v1712, %v2184
    %v2313 = vsel %vm2057, %v1903, %v2185
    %v2314 = vsel %vm2058, %v1905, %v2186
    %v2315 = vsel %vm2059, %v1716, %v2187
    %v2316 = vsel %vm2060, %v1718, %v2188
    %v2317 = vsel %vm2061, %v1909, %v2189
    %v2318 = vsel %vm2062, %v1911, %v2190
    %v2319 = vsel %vm2063, %v1720, %v2191
    %v2320 = vsel %vm2064, %v1722, %v2192
    %v2321 = vsel %vm2065, %v1913, %v2193
    %v2322 = vsel %vm2066, %v1915, %v2194
    %v2323 = vsel %vm2067, %v1726, %v2195
    %v2324 = vsel %vm2068, %v1728, %v2196
    %v2325 = vsel %vm2069, %v1919, %v2197
    %v2326 = vsel %vm2070, %v1921, %v2198
    %v2327 = vsel %vm2071, %v1730, %v2199
    %v2328 = vsel %vm2072, %v1732, %v2200
    %v2329 = vsel %vm2073, %v1923, %v2201
    %v2330 = vsel %vm2074, %v1925, %v2202
    %v2331 = vsel %vm2075, %v1736, %v2203
    %v2332 = vsel %vm2076, %v1738, %v2204
    %v2333 = vsel %vm2077, %v1929, %v2205
    %v2334 = vsel %vm2078, %v1931, %v2206
    %v2335 = vsel %vm2079, %v1740, %v2207
    %v2336 = vsel %vm2080, %v1742, %v2208
    %v2337 = vsel %vm2081, %v1933, %v2209
    %v2338 = vsel %vm2082, %v1935, %v2210
    %v2339 = vsel %vm2083, %v1746, %v2211
    %v2340 = vsel %vm2084, %v1748, %v2212
    %v2341 = vsel %vm2085, %v1939, %v2213
    %v2342 = vsel %vm2086, %v1941, %v2214
    %v2343 = vsel %vm2087, %v1750, %v2215
    %v2344 = vsel %vm2088, %v1752, %v2216
    %v2345 = vsel %vm2089, %v1943, %v2217
    %v2346 = vsel %vm2090, %v1945, %v2218
    %v2347 = vsel %vm2091, %v1756, %v2219
    %v2348 = vsel %vm2092, %v1758, %v2220
    %v2349 = vsel %vm2093, %v1949, %v2221
    %v2350 = vsel %vm2094, %v1951, %v2222
    %v2351 = vsel %vm2095, %v1760, %v2223
    %v2352 = vsel %vm2096, %v1762, %v2224
    %v2353 = vsel %vm2097, %v1953, %v2225
    %v2354 = vsel %vm2098, %v1955, %v2226
    %v2355 = vsel %vm2099, %v1766, %v2227
    %v2356 = vsel %vm2100, %v1768, %v2228
    %v2357 = vsel %vm2101, %v1959, %v2229
    %v2358 = vsel %vm2102, %v1961, %v2230
    %v2359 = vsel %vm2103, %v1770, %v2231
    %v2360 = vsel %vm2104, %v1772, %v2232
    %v2361 = vsel %vm2105, %v1963, %v2233
    %v2362 = vsel %vm2106, %v1965, %v2234
    %v2363 = vsel %vm2107, %v1776, %v2235
    %v2364 = vsel %vm2108, %v1778, %v2236
    %v2365 = vsel %vm2109, %v1969, %v2237
    %v2366 = vsel %vm2110, %v1971, %v2238
    %v2367 = vsel %vm2111, %v1780, %v2239
    %v2368 = vsel %vm2112, %v1782, %v2240
    %v2369 = vsel %vm2113, %v1973, %v2241
    %v2370 = vsel %vm2114, %v1975, %v2242
    %v2371 = vsel %vm2115, %v1786, %v2243
    %v2372 = vsel %vm2116, %v1788, %v2244
    %v2373 = vsel %vm2117, %v1979, %v2245
    %v2374 = vsel %vm2118, %v1981, %v2246
    %v2375 = vsel %vm2119, %v1790, %v2247
    %v2376 = vsel %vm2120, %v1792, %v2248
    %v2377 = vsel %vm2121, %v1983, %v2249
    %v2378 = vsel %vm2122, %v1985, %v2250
    %v2379 = vsel %vm2123, %v1796, %v2251
    %v2380 = vsel %vm2124, %v1798, %v2252
    %v2381 = vsel %vm2125, %v1989, %v2253
    %v2382 = vsel %vm2126, %v1991, %v2254
    %v2383 = vsel %vm2127, %v1800, %v2255
    %v2384 = vsel %vm2128, %v1802, %v2256
    %v2385 = vsel %vm2129, %v1993, %v2257
    %v2386 = vsel %vm2130, %v1995, %v2258
    %v2387 = vsel %vm2131, %v1806, %v2259
    %v2388 = vsel %vm2132, %v1808, %v2260
    %v2389 = vsel %vm2133, %v1999, %v2261
    %v2390 = vsel %vm2134, %v2001, %v2262
    %v2391 = vsel %vm2135, %v1810, %v2263
    %v2392 = vsel %vm2136, %v1812, %v2264
    %v2393 = vsel %vm2137, %v2003, %v2265
    %v2394 = vsel %vm2138, %v2005, %v2266
    %v2395 = vsel %vm2139, %v1816, %v2267
    %v2396 = vsel %vm2140, %v1818, %v2268
    %v2397 = vsel %vm2141, %v2009, %v2269
    %v2398 = vsel %vm2142, %v2011, %v2270
    %v2399 = vsel %vm2143, %v1820, %v2271
    %v2400 = vsel %vm2144, %v1822, %v2272
    %v2401 = vsel %vm2145, %v2013, %v2273
    %v2402 = vsel %vm2146, %v2015, %v2274
    %v2403 = vsel %vm2147, %v1826, %v2275
    %v2404 = vsel %vm2148, %v1828, %v2276
    %v2405 = vsel %vm2149, %v2019, %v2277
    %v2406 = vsel %vm2150, %v2021, %v2278
    %v2407 = vsel %vm2151, %v1830, %v2279
    %v2408 = vsel %vm2152, %v1832, %v2280
    %v2409 = vsel %vm2153, %v2023, %v2281
    %v2410 = vsel %vm2154, %v2025, %v2282
    %v2411 = vpack.c.bf16 %v2287, %v2283
    %v2412 = vpack.c.bf16 %v2288, %v2284
    %v2413 = vpack.c.bf16 %v2289, %v2285
    %v2414 = vpack.c.bf16 %v2290, %v2286
    %v2415 = vpack.c.bf16 %v2295, %v2291
    %v2416 = vpack.c.bf16 %v2296, %v2292
    %v2417 = vpack.c.bf16 %v2297, %v2293
    %v2418 = vpack.c.bf16 %v2298, %v2294
    %v2419 = vpack.c.bf16 %v2303, %v2299
    %v2420 = vpack.c.bf16 %v2304, %v2300
    %v2421 = vpack.c.bf16 %v2305, %v2301
    %v2422 = vpack.c.bf16 %v2306, %v2302
    %v2423 = vpack.c.bf16 %v2311, %v2307
    %v2424 = vpack.c.bf16 %v2312, %v2308
    %v2425 = vpack.c.bf16 %v2313, %v2309
    %v2426 = vpack.c.bf16 %v2314, %v2310
    %v2427 = vpack.c.bf16 %v2319, %v2315
    %v2428 = vpack.c.bf16 %v2320, %v2316
    %v2429 = vpack.c.bf16 %v2321, %v2317
    %v2430 = vpack.c.bf16 %v2322, %v2318
    %v2431 = vpack.c.bf16 %v2327, %v2323
    %v2432 = vpack.c.bf16 %v2328, %v2324
    %v2433 = vpack.c.bf16 %v2329, %v2325
    %v2434 = vpack.c.bf16 %v2330, %v2326
    %v2435 = vpack.c.bf16 %v2335, %v2331
    %v2436 = vpack.c.bf16 %v2336, %v2332
    %v2437 = vpack.c.bf16 %v2337, %v2333
    %v2438 = vpack.c.bf16 %v2338, %v2334
    %v2439 = vpack.c.bf16 %v2343, %v2339
    %v2440 = vpack.c.bf16 %v2344, %v2340
    %v2441 = vpack.c.bf16 %v2345, %v2341
    %v2442 = vpack.c.bf16 %v2346, %v2342
    %v2443 = vpack.c.bf16 %v2351, %v2347
    %v2444 = vpack.c.bf16 %v2352, %v2348
    %v2445 = vpack.c.bf16 %v2353, %v2349
    %v2446 = vpack.c.bf16 %v2354, %v2350
    %v2447 = vpack.c.bf16 %v2359, %v2355
    %v2448 = vpack.c.bf16 %v2360, %v2356
    %v2449 = vpack.c.bf16 %v2361, %v2357
    %v2450 = vpack.c.bf16 %v2362, %v2358
    %v2451 = vpack.c.bf16 %v2367, %v2363
    %v2452 = vpack.c.bf16 %v2368, %v2364
    %v2453 = vpack.c.bf16 %v2369, %v2365
    %v2454 = vpack.c.bf16 %v2370, %v2366
    %v2455 = vpack.c.bf16 %v2375, %v2371
    %v2456 = vpack.c.bf16 %v2376, %v2372
    %v2457 = vpack.c.bf16 %v2377, %v2373
    %v2458 = vpack.c.bf16 %v2378, %v2374
    %v2459 = vpack.c.bf16 %v2383, %v2379
    %v2460 = vpack.c.bf16 %v2384, %v2380
    %v2461 = vpack.c.bf16 %v2385, %v2381
    %v2462 = vpack.c.bf16 %v2386, %v2382
    %v2463 = vpack.c.bf16 %v2391, %v2387
    %v2464 = vpack.c.bf16 %v2392, %v2388
    %v2465 = vpack.c.bf16 %v2393, %v2389
    %v2466 = vpack.c.bf16 %v2394, %v2390
    %v2467 = vpack.c.bf16 %v2399, %v2395
    %v2468 = vpack.c.bf16 %v2400, %v2396
    %v2469 = vpack.c.bf16 %v2401, %v2397
    %v2470 = vpack.c.bf16 %v2402, %v2398
    %v2471 = vpack.c.bf16 %v2407, %v2403
    %v2472 = vpack.c.bf16 %v2408, %v2404
    %v2473 = vpack.c.bf16 %v2409, %v2405
    %v2474 = vpack.c.bf16 %v2410, %v2406
    %v2475 = vld [vmem:[#allocation9] sm:$0xff]
    %v2476 = vld [vmem:[#allocation9 + $0x8] sm:$0xff]
    %v2477 = vld [vmem:[#allocation9 + $0x10] sm:$0xff]
    %v2478 = vld [vmem:[#allocation9 + $0x18] sm:$0xff]
    %v2479 = vld [vmem:[#allocation9 + $0x20] sm:$0xff]
    %v2480 = vld [vmem:[#allocation9 + $0x28] sm:$0xff]
    %v2481 = vld [vmem:[#allocation9 + $0x30] sm:$0xff]
    %v2482 = vld [vmem:[#allocation9 + $0x38] sm:$0xff]
    %v2483 = vld [vmem:[#allocation9 + $0x40] sm:$0xff]
    %v2484 = vld [vmem:[#allocation9 + $0x48] sm:$0xff]
    %v2485 = vld [vmem:[#allocation9 + $0x50] sm:$0xff]
    %v2486 = vld [vmem:[#allocation9 + $0x58] sm:$0xff]
    %v2487 = vld [vmem:[#allocation9 + $0x60] sm:$0xff]
    %v2488 = vld [vmem:[#allocation9 + $0x68] sm:$0xff]
    %v2489 = vld [vmem:[#allocation9 + $0x70] sm:$0xff]
    %v2490 = vld [vmem:[#allocation9 + $0x78] sm:$0xff]
    %v2491 = vld [vmem:[#allocation9 + $0x80] sm:$0xff]
    %v2492 = vld [vmem:[#allocation9 + $0x88] sm:$0xff]
    %v2493 = vld [vmem:[#allocation9 + $0x90] sm:$0xff]
    %v2494 = vld [vmem:[#allocation9 + $0x98] sm:$0xff]
    %v2495 = vld [vmem:[#allocation9 + $0xa0] sm:$0xff]
    %v2496 = vld [vmem:[#allocation9 + $0xa8] sm:$0xff]
    %v2497 = vld [vmem:[#allocation9 + $0xb0] sm:$0xff]
    %v2498 = vld [vmem:[#allocation9 + $0xb8] sm:$0xff]
    %v2499 = vld [vmem:[#allocation9 + $0xc0] sm:$0xff]
    %v2500 = vld [vmem:[#allocation9 + $0xc8] sm:$0xff]
    %v2501 = vld [vmem:[#allocation9 + $0xd0] sm:$0xff]
    %v2502 = vld [vmem:[#allocation9 + $0xd8] sm:$0xff]
    %v2503 = vld [vmem:[#allocation9 + $0xe0] sm:$0xff]
    %v2504 = vld [vmem:[#allocation9 + $0xe8] sm:$0xff]
    %v2505 = vld [vmem:[#allocation9 + $0xf0] sm:$0xff]
    %v2506 = vld [vmem:[#allocation9 + $0xf8] sm:$0xff]
    %v2507 = vld [vmem:[#allocation9 + $0x100] sm:$0xff]
    %v2508 = vld [vmem:[#allocation9 + $0x108] sm:$0xff]
    %v2509 = vld [vmem:[#allocation9 + $0x110] sm:$0xff]
    %v2510 = vld [vmem:[#allocation9 + $0x118] sm:$0xff]
    %v2511 = vld [vmem:[#allocation9 + $0x120] sm:$0xff]
    %v2512 = vld [vmem:[#allocation9 + $0x128] sm:$0xff]
    %v2513 = vld [vmem:[#allocation9 + $0x130] sm:$0xff]
    %v2514 = vld [vmem:[#allocation9 + $0x138] sm:$0xff]
    %v2515 = vld [vmem:[#allocation9 + $0x140] sm:$0xff]
    %v2516 = vld [vmem:[#allocation9 + $0x148] sm:$0xff]
    %v2517 = vld [vmem:[#allocation9 + $0x150] sm:$0xff]
    %v2518 = vld [vmem:[#allocation9 + $0x158] sm:$0xff]
    %v2519 = vld [vmem:[#allocation9 + $0x160] sm:$0xff]
    %v2520 = vld [vmem:[#allocation9 + $0x168] sm:$0xff]
    %v2521 = vld [vmem:[#allocation9 + $0x170] sm:$0xff]
    %v2522 = vld [vmem:[#allocation9 + $0x178] sm:$0xff]
    %v2523 = vld [vmem:[#allocation9 + $0x180] sm:$0xff]
    %v2524 = vld [vmem:[#allocation9 + $0x188] sm:$0xff]
    %v2525 = vld [vmem:[#allocation9 + $0x190] sm:$0xff]
    %v2526 = vld [vmem:[#allocation9 + $0x198] sm:$0xff]
    %v2527 = vld [vmem:[#allocation9 + $0x1a0] sm:$0xff]
    %v2528 = vld [vmem:[#allocation9 + $0x1a8] sm:$0xff]
    %v2529 = vld [vmem:[#allocation9 + $0x1b0] sm:$0xff]
    %v2530 = vld [vmem:[#allocation9 + $0x1b8] sm:$0xff]
    %v2531 = vld [vmem:[#allocation9 + $0x1c0] sm:$0xff]
    %v2532 = vld [vmem:[#allocation9 + $0x1c8] sm:$0xff]
    %v2533 = vld [vmem:[#allocation9 + $0x1d0] sm:$0xff]
    %v2534 = vld [vmem:[#allocation9 + $0x1d8] sm:$0xff]
    %v2535 = vld [vmem:[#allocation9 + $0x1e0] sm:$0xff]
    %v2536 = vld [vmem:[#allocation9 + $0x1e8] sm:$0xff]
    %v2537 = vld [vmem:[#allocation9 + $0x1f0] sm:$0xff]
    %v2538 = vld [vmem:[#allocation9 + $0x1f8] sm:$0xff]
    %v2539 = vld [vmem:[%s6] sm:$0x3]
    %v2541 = vlaneseq
    %v2542 = vshrl.u32 %v2541, 7
    %v2543 = vsub.s32 0, %v2542
    %v2544 = vrot.slane %v2539, %v2543
    %v2545 = vlaneseq
    %v2546 = vshrl.u32 %v2545, 7
    %v2547 = vsub.s32 1, %v2546
    %v2548 = vrot.slane %v2539, %v2547
    %v2615 = vunpack.c.l.b16 %v2475
    %v2616 = vunpack.c.h.b16 %v2475
    %v2617 = vunpack.c.l.b16 %v2476
    %v2618 = vunpack.c.h.b16 %v2476
    %v2619 = vunpack.c.l.b16 %v2477
    %v2620 = vunpack.c.h.b16 %v2477
    %v2621 = vunpack.c.l.b16 %v2478
    %v2622 = vunpack.c.h.b16 %v2478
    %v2623 = vunpack.c.l.b16 %v2479
    %v2624 = vunpack.c.h.b16 %v2479
    %v2625 = vunpack.c.l.b16 %v2480
    %v2626 = vunpack.c.h.b16 %v2480
    %v2627 = vunpack.c.l.b16 %v2481
    %v2628 = vunpack.c.h.b16 %v2481
    %v2629 = vunpack.c.l.b16 %v2482
    %v2630 = vunpack.c.h.b16 %v2482
    %v2631 = vunpack.c.l.b16 %v2483
    %v2632 = vunpack.c.h.b16 %v2483
    %v2633 = vunpack.c.l.b16 %v2484
    %v2634 = vunpack.c.h.b16 %v2484
    %v2635 = vunpack.c.l.b16 %v2485
    %v2636 = vunpack.c.h.b16 %v2485
    %v2637 = vunpack.c.l.b16 %v2486
    %v2638 = vunpack.c.h.b16 %v2486
    %v2639 = vunpack.c.l.b16 %v2487
    %v2640 = vunpack.c.h.b16 %v2487
    %v2641 = vunpack.c.l.b16 %v2488
    %v2642 = vunpack.c.h.b16 %v2488
    %v2643 = vunpack.c.l.b16 %v2489
    %v2644 = vunpack.c.h.b16 %v2489
    %v2645 = vunpack.c.l.b16 %v2490
    %v2646 = vunpack.c.h.b16 %v2490
    %v2647 = vunpack.c.l.b16 %v2491
    %v2648 = vunpack.c.h.b16 %v2491
    %v2649 = vunpack.c.l.b16 %v2492
    %v2650 = vunpack.c.h.b16 %v2492
    %v2651 = vunpack.c.l.b16 %v2493
    %v2652 = vunpack.c.h.b16 %v2493
    %v2653 = vunpack.c.l.b16 %v2494
    %v2654 = vunpack.c.h.b16 %v2494
    %v2655 = vunpack.c.l.b16 %v2495
    %v2656 = vunpack.c.h.b16 %v2495
    %v2657 = vunpack.c.l.b16 %v2496
    %v2658 = vunpack.c.h.b16 %v2496
    %v2659 = vunpack.c.l.b16 %v2497
    %v2660 = vunpack.c.h.b16 %v2497
    %v2661 = vunpack.c.l.b16 %v2498
    %v2662 = vunpack.c.h.b16 %v2498
    %v2663 = vunpack.c.l.b16 %v2499
    %v2664 = vunpack.c.h.b16 %v2499
    %v2665 = vunpack.c.l.b16 %v2500
    %v2666 = vunpack.c.h.b16 %v2500
    %v2667 = vunpack.c.l.b16 %v2501
    %v2668 = vunpack.c.h.b16 %v2501
    %v2669 = vunpack.c.l.b16 %v2502
    %v2670 = vunpack.c.h.b16 %v2502
    %v2671 = vunpack.c.l.b16 %v2503
    %v2672 = vunpack.c.h.b16 %v2503
    %v2673 = vunpack.c.l.b16 %v2504
    %v2674 = vunpack.c.h.b16 %v2504
    %v2675 = vunpack.c.l.b16 %v2505
    %v2676 = vunpack.c.h.b16 %v2505
    %v2677 = vunpack.c.l.b16 %v2506
    %v2678 = vunpack.c.h.b16 %v2506
    %v2679 = vunpack.c.l.b16 %v2507
    %v2680 = vunpack.c.h.b16 %v2507
    %v2681 = vunpack.c.l.b16 %v2508
    %v2682 = vunpack.c.h.b16 %v2508
    %v2683 = vunpack.c.l.b16 %v2509
    %v2684 = vunpack.c.h.b16 %v2509
    %v2685 = vunpack.c.l.b16 %v2510
    %v2686 = vunpack.c.h.b16 %v2510
    %v2687 = vunpack.c.l.b16 %v2511
    %v2688 = vunpack.c.h.b16 %v2511
    %v2689 = vunpack.c.l.b16 %v2512
    %v2690 = vunpack.c.h.b16 %v2512
    %v2691 = vunpack.c.l.b16 %v2513
    %v2692 = vunpack.c.h.b16 %v2513
    %v2693 = vunpack.c.l.b16 %v2514
    %v2694 = vunpack.c.h.b16 %v2514
    %v2695 = vunpack.c.l.b16 %v2515
    %v2696 = vunpack.c.h.b16 %v2515
    %v2697 = vunpack.c.l.b16 %v2516
    %v2698 = vunpack.c.h.b16 %v2516
    %v2699 = vunpack.c.l.b16 %v2517
    %v2700 = vunpack.c.h.b16 %v2517
    %v2701 = vunpack.c.l.b16 %v2518
    %v2702 = vunpack.c.h.b16 %v2518
    %v2703 = vunpack.c.l.b16 %v2519
    %v2704 = vunpack.c.h.b16 %v2519
    %v2705 = vunpack.c.l.b16 %v2520
    %v2706 = vunpack.c.h.b16 %v2520
    %v2707 = vunpack.c.l.b16 %v2521
    %v2708 = vunpack.c.h.b16 %v2521
    %v2709 = vunpack.c.l.b16 %v2522
    %v2710 = vunpack.c.h.b16 %v2522
    %v2711 = vunpack.c.l.b16 %v2523
    %v2712 = vunpack.c.h.b16 %v2523
    %v2713 = vunpack.c.l.b16 %v2524
    %v2714 = vunpack.c.h.b16 %v2524
    %v2715 = vunpack.c.l.b16 %v2525
    %v2716 = vunpack.c.h.b16 %v2525
    %v2717 = vunpack.c.l.b16 %v2526
    %v2718 = vunpack.c.h.b16 %v2526
    %v2719 = vunpack.c.l.b16 %v2527
    %v2720 = vunpack.c.h.b16 %v2527
    %v2721 = vunpack.c.l.b16 %v2528
    %v2722 = vunpack.c.h.b16 %v2528
    %v2723 = vunpack.c.l.b16 %v2529
    %v2724 = vunpack.c.h.b16 %v2529
    %v2725 = vunpack.c.l.b16 %v2530
    %v2726 = vunpack.c.h.b16 %v2530
    %v2727 = vunpack.c.l.b16 %v2531
    %v2728 = vunpack.c.h.b16 %v2531
    %v2729 = vunpack.c.l.b16 %v2532
    %v2730 = vunpack.c.h.b16 %v2532
    %v2731 = vunpack.c.l.b16 %v2533
    %v2732 = vunpack.c.h.b16 %v2533
    %v2733 = vunpack.c.l.b16 %v2534
    %v2734 = vunpack.c.h.b16 %v2534
    %v2735 = vunpack.c.l.b16 %v2535
    %v2736 = vunpack.c.h.b16 %v2535
    %v2737 = vunpack.c.l.b16 %v2536
    %v2738 = vunpack.c.h.b16 %v2536
    %v2739 = vunpack.c.l.b16 %v2537
    %v2740 = vunpack.c.h.b16 %v2537
    %v2741 = vunpack.c.l.b16 %v2538
    %v2742 = vunpack.c.h.b16 %v2538
    %v2743 = vpack.c.b16 %v2617, %v2615
    %v2744 = vpack.c.b16 %v2618, %v2616
    %v2745 = vpack.c.b16 %v2621, %v2619
    %v2746 = vpack.c.b16 %v2622, %v2620
    %v2747 = vpack.c.b16 %v2625, %v2623
    %v2748 = vpack.c.b16 %v2626, %v2624
    %v2749 = vpack.c.b16 %v2629, %v2627
    %v2750 = vpack.c.b16 %v2630, %v2628
    %v2751 = vpack.c.b16 %v2633, %v2631
    %v2752 = vpack.c.b16 %v2634, %v2632
    %v2753 = vpack.c.b16 %v2637, %v2635
    %v2754 = vpack.c.b16 %v2638, %v2636
    %v2755 = vpack.c.b16 %v2641, %v2639
    %v2756 = vpack.c.b16 %v2642, %v2640
    %v2757 = vpack.c.b16 %v2645, %v2643
    %v2758 = vpack.c.b16 %v2646, %v2644
    %v2759 = vpack.c.b16 %v2649, %v2647
    %v2760 = vpack.c.b16 %v2650, %v2648
    %v2761 = vpack.c.b16 %v2653, %v2651
    %v2762 = vpack.c.b16 %v2654, %v2652
    %v2763 = vpack.c.b16 %v2657, %v2655
    %v2764 = vpack.c.b16 %v2658, %v2656
    %v2765 = vpack.c.b16 %v2661, %v2659
    %v2766 = vpack.c.b16 %v2662, %v2660
    %v2767 = vpack.c.b16 %v2665, %v2663
    %v2768 = vpack.c.b16 %v2666, %v2664
    %v2769 = vpack.c.b16 %v2669, %v2667
    %v2770 = vpack.c.b16 %v2670, %v2668
    %v2771 = vpack.c.b16 %v2673, %v2671
    %v2772 = vpack.c.b16 %v2674, %v2672
    %v2773 = vpack.c.b16 %v2677, %v2675
    %v2774 = vpack.c.b16 %v2678, %v2676
    %v2775 = vpack.c.b16 %v2681, %v2679
    %v2776 = vpack.c.b16 %v2682, %v2680
    %v2777 = vpack.c.b16 %v2685, %v2683
    %v2778 = vpack.c.b16 %v2686, %v2684
    %v2779 = vpack.c.b16 %v2689, %v2687
    %v2780 = vpack.c.b16 %v2690, %v2688
    %v2781 = vpack.c.b16 %v2693, %v2691
    %v2782 = vpack.c.b16 %v2694, %v2692
    %v2783 = vpack.c.b16 %v2697, %v2695
    %v2784 = vpack.c.b16 %v2698, %v2696
    %v2785 = vpack.c.b16 %v2701, %v2699
    %v2786 = vpack.c.b16 %v2702, %v2700
    %v2787 = vpack.c.b16 %v2705, %v2703
    %v2788 = vpack.c.b16 %v2706, %v2704
    %v2789 = vpack.c.b16 %v2709, %v2707
    %v2790 = vpack.c.b16 %v2710, %v2708
    %v2791 = vpack.c.b16 %v2713, %v2711
    %v2792 = vpack.c.b16 %v2714, %v2712
    %v2793 = vpack.c.b16 %v2717, %v2715
    %v2794 = vpack.c.b16 %v2718, %v2716
    %v2795 = vpack.c.b16 %v2721, %v2719
    %v2796 = vpack.c.b16 %v2722, %v2720
    %v2797 = vpack.c.b16 %v2725, %v2723
    %v2798 = vpack.c.b16 %v2726, %v2724
    %v2799 = vpack.c.b16 %v2729, %v2727
    %v2800 = vpack.c.b16 %v2730, %v2728
    %v2801 = vpack.c.b16 %v2733, %v2731
    %v2802 = vpack.c.b16 %v2734, %v2732
    %v2803 = vpack.c.b16 %v2737, %v2735
    %v2804 = vpack.c.b16 %v2738, %v2736
    %v2805 = vpack.c.b16 %v2741, %v2739
    %v2806 = vpack.c.b16 %v2742, %v2740
    %2871 = vmatprep.subr.bf16.mxu0 %v2744
    %2872 = vmatpush1.bf16.msra.mxu0 %v2743
    %2873 = vmatprep.subr.bf16.mxu0 %v2746
    %2874 = vmatpush1.bf16.msra.mxu0 %v2745
    %2875 = vmatprep.subr.bf16.mxu0 %v2748
    %2876 = vmatpush1.bf16.msra.mxu0 %v2747
    %2877 = vmatprep.subr.bf16.mxu0 %v2750
    %2878 = vmatpush1.bf16.msra.mxu0 %v2749
    %2879 = vmatprep.subr.bf16.mxu0 %v2752
    %2880 = vmatpush1.bf16.msra.mxu0 %v2751
    %2881 = vmatprep.subr.bf16.mxu0 %v2754
    %2882 = vmatpush1.bf16.msra.mxu0 %v2753
    %2883 = vmatprep.subr.bf16.mxu0 %v2756
    %2884 = vmatpush1.bf16.msra.mxu0 %v2755
    %2885 = vmatprep.subr.bf16.mxu0 %v2758
    %2886 = vmatpush1.bf16.msra.mxu0 %v2757
    %2887 = vmatprep.subr.bf16.mxu0 %v2760
    %2888 = vmatpush1.bf16.msra.mxu0 %v2759
    %2889 = vmatprep.subr.bf16.mxu0 %v2762
    %2890 = vmatpush1.bf16.msra.mxu0 %v2761
    %2891 = vmatprep.subr.bf16.mxu0 %v2764
    %2892 = vmatpush1.bf16.msra.mxu0 %v2763
    %2893 = vmatprep.subr.bf16.mxu0 %v2766
    %2894 = vmatpush1.bf16.msra.mxu0 %v2765
    %2895 = vmatprep.subr.bf16.mxu0 %v2768
    %2896 = vmatpush1.bf16.msra.mxu0 %v2767
    %2897 = vmatprep.subr.bf16.mxu0 %v2770
    %2898 = vmatpush1.bf16.msra.mxu0 %v2769
    %2899 = vmatprep.subr.bf16.mxu0 %v2772
    %2900 = vmatpush1.bf16.msra.mxu0 %v2771
    %2901 = vmatprep.subr.bf16.mxu0 %v2774
    %2902 = vmatpush1.bf16.msra.mxu0 %v2773
    %2903 = vmatprep.mubr.bf16.mxu0 %v2412
    %2904 = vmatmul.mubr.bf16.gmra.mrb[0].mxu0 %v2411
    %v2905 = vpop.f32.mrb[0].mxu0
    %v2906 = vadd.f32 %v2544, %v2905
    %v2907 = vpop.f32.mrb[0].mxu0
    %v2908 = vadd.f32 %v2548, %v2907
    %v2909 = vpop.f32.mrb[0].mxu0
    %v2910 = vadd.f32 %v2544, %v2909
    %v2911 = vpop.f32.mrb[0].mxu0
    %v2912 = vadd.f32 %v2548, %v2911
    %2913 = vmatprep.mubr.bf16.mxu0 %v2416
    %2914 = vmatmul.mubr.bf16.gmra.mrb[0].mxu0 %v2415
    %v2915 = vpop.f32.mrb[0].mxu0
    %v2916 = vadd.f32 %v2544, %v2915
    %v2917 = vpop.f32.mrb[0].mxu0
    %v2918 = vadd.f32 %v2548, %v2917
    %v2919 = vpop.f32.mrb[0].mxu0
    %v2920 = vadd.f32 %v2544, %v2919
    %v2921 = vpop.f32.mrb[0].mxu0
    %v2922 = vadd.f32 %v2548, %v2921
    %2923 = vmatprep.mubr.bf16.mxu0 %v2420
    %2924 = vmatmul.mubr.bf16.gmra.mrb[0].mxu0 %v2419
    %v2925 = vpop.f32.mrb[0].mxu0
    %v2926 = vadd.f32 %v2544, %v2925
    %v2927 = vpop.f32.mrb[0].mxu0
    %v2928 = vadd.f32 %v2548, %v2927
    %v2929 = vpop.f32.mrb[0].mxu0
    %v2930 = vadd.f32 %v2544, %v2929
    %v2931 = vpop.f32.mrb[0].mxu0
    %v2932 = vadd.f32 %v2548, %v2931
    %2933 = vmatprep.mubr.bf16.mxu0 %v2424
    %2934 = vmatmul.mubr.bf16.gmra.mrb[0].mxu0 %v2423
    %v2935 = vpop.f32.mrb[0].mxu0
    %v2936 = vadd.f32 %v2544, %v2935
    %v2937 = vpop.f32.mrb[0].mxu0
    %v2938 = vadd.f32 %v2548, %v2937
    %v2939 = vpop.f32.mrb[0].mxu0
    %v2940 = vadd.f32 %v2544, %v2939
    %v2941 = vpop.f32.mrb[0].mxu0
    %v2942 = vadd.f32 %v2548, %v2941
    %2943 = vmatprep.mubr.bf16.mxu0 %v2428
    %2944 = vmatmul.mubr.bf16.gmra.mrb[0].mxu0 %v2427
    %v2945 = vpop.f32.mrb[0].mxu0
    %v2946 = vadd.f32 %v2544, %v2945
    %v2947 = vpop.f32.mrb[0].mxu0
    %v2948 = vadd.f32 %v2548, %v2947
    %v2949 = vpop.f32.mrb[0].mxu0
    %v2950 = vadd.f32 %v2544, %v2949
    %v2951 = vpop.f32.mrb[0].mxu0
    %v2952 = vadd.f32 %v2548, %v2951
    %2953 = vmatprep.mubr.bf16.mxu0 %v2432
    %2954 = vmatmul.mubr.bf16.gmra.mrb[0].mxu0 %v2431
    %v2955 = vpop.f32.mrb[0].mxu0
    %v2956 = vadd.f32 %v2544, %v2955
    %v2957 = vpop.f32.mrb[0].mxu0
    %v2958 = vadd.f32 %v2548, %v2957
    %v2959 = vpop.f32.mrb[0].mxu0
    %v2960 = vadd.f32 %v2544, %v2959
    %v2961 = vpop.f32.mrb[0].mxu0
    %v2962 = vadd.f32 %v2548, %v2961
    %2963 = vmatprep.mubr.bf16.mxu0 %v2436
    %2964 = vmatmul.mubr.bf16.gmra.mrb[0].mxu0 %v2435
    %v2965 = vpop.f32.mrb[0].mxu0
    %v2966 = vadd.f32 %v2544, %v2965
    %v2967 = vpop.f32.mrb[0].mxu0
    %v2968 = vadd.f32 %v2548, %v2967
    %v2969 = vpop.f32.mrb[0].mxu0
    %v2970 = vadd.f32 %v2544, %v2969
    %v2971 = vpop.f32.mrb[0].mxu0
    %v2972 = vadd.f32 %v2548, %v2971
    %2973 = vmatprep.mubr.bf16.mxu0 %v2440
    %2974 = vmatmul.mubr.bf16.gmra.mrb[0].mxu0 %v2439
    %v2975 = vpop.f32.mrb[0].mxu0
    %v2976 = vadd.f32 %v2544, %v2975
    %v2977 = vpop.f32.mrb[0].mxu0
    %v2978 = vadd.f32 %v2548, %v2977
    %v2979 = vpop.f32.mrb[0].mxu0
    %v2980 = vadd.f32 %v2544, %v2979
    %v2981 = vpop.f32.mrb[0].mxu0
    %v2982 = vadd.f32 %v2548, %v2981
    %2983 = vmatprep.mubr.bf16.mxu0 %v2444
    %2984 = vmatmul.mubr.bf16.gmra.mrb[0].mxu0 %v2443
    %v2985 = vpop.f32.mrb[0].mxu0
    %v2986 = vadd.f32 %v2544, %v2985
    %v2987 = vpop.f32.mrb[0].mxu0
    %v2988 = vadd.f32 %v2548, %v2987
    %v2989 = vpop.f32.mrb[0].mxu0
    %v2990 = vadd.f32 %v2544, %v2989
    %v2991 = vpop.f32.mrb[0].mxu0
    %v2992 = vadd.f32 %v2548, %v2991
    %2993 = vmatprep.mubr.bf16.mxu0 %v2448
    %2994 = vmatmul.mubr.bf16.gmra.mrb[0].mxu0 %v2447
    %v2995 = vpop.f32.mrb[0].mxu0
    %v2996 = vadd.f32 %v2544, %v2995
    %v2997 = vpop.f32.mrb[0].mxu0
    %v2998 = vadd.f32 %v2548, %v2997
    %v2999 = vpop.f32.mrb[0].mxu0
    %v3000 = vadd.f32 %v2544, %v2999
    %v3001 = vpop.f32.mrb[0].mxu0
    %v3002 = vadd.f32 %v2548, %v3001
    %3003 = vmatprep.mubr.bf16.mxu0 %v2452
    %3004 = vmatmul.mubr.bf16.gmra.mrb[0].mxu0 %v2451
    %v3005 = vpop.f32.mrb[0].mxu0
    %v3006 = vadd.f32 %v2544, %v3005
    %v3007 = vpop.f32.mrb[0].mxu0
    %v3008 = vadd.f32 %v2548, %v3007
    %v3009 = vpop.f32.mrb[0].mxu0
    %v3010 = vadd.f32 %v2544, %v3009
    %v3011 = vpop.f32.mrb[0].mxu0
    %v3012 = vadd.f32 %v2548, %v3011
    %3013 = vmatprep.mubr.bf16.mxu0 %v2456
    %3014 = vmatmul.mubr.bf16.gmra.mrb[0].mxu0 %v2455
    %v3015 = vpop.f32.mrb[0].mxu0
    %v3016 = vadd.f32 %v2544, %v3015
    %v3017 = vpop.f32.mrb[0].mxu0
    %v3018 = vadd.f32 %v2548, %v3017
    %v3019 = vpop.f32.mrb[0].mxu0
    %v3020 = vadd.f32 %v2544, %v3019
    %v3021 = vpop.f32.mrb[0].mxu0
    %v3022 = vadd.f32 %v2548, %v3021
    %3023 = vmatprep.mubr.bf16.mxu0 %v2460
    %3024 = vmatmul.mubr.bf16.gmra.mrb[0].mxu0 %v2459
    %v3025 = vpop.f32.mrb[0].mxu0
    %v3026 = vadd.f32 %v2544, %v3025
    %v3027 = vpop.f32.mrb[0].mxu0
    %v3028 = vadd.f32 %v2548, %v3027
    %v3029 = vpop.f32.mrb[0].mxu0
    %v3030 = vadd.f32 %v2544, %v3029
    %v3031 = vpop.f32.mrb[0].mxu0
    %v3032 = vadd.f32 %v2548, %v3031
    %3033 = vmatprep.mubr.bf16.mxu0 %v2464
    %3034 = vmatmul.mubr.bf16.gmra.mrb[0].mxu0 %v2463
    %v3035 = vpop.f32.mrb[0].mxu0
    %v3036 = vadd.f32 %v2544, %v3035
    %v3037 = vpop.f32.mrb[0].mxu0
    %v3038 = vadd.f32 %v2548, %v3037
    %v3039 = vpop.f32.mrb[0].mxu0
    %v3040 = vadd.f32 %v2544, %v3039
    %v3041 = vpop.f32.mrb[0].mxu0
    %v3042 = vadd.f32 %v2548, %v3041
    %3043 = vmatprep.mubr.bf16.mxu0 %v2468
    %3044 = vmatmul.mubr.bf16.gmra.mrb[0].mxu0 %v2467
    %v3045 = vpop.f32.mrb[0].mxu0
    %v3046 = vadd.f32 %v2544, %v3045
    %v3047 = vpop.f32.mrb[0].mxu0
    %v3048 = vadd.f32 %v2548, %v3047
    %v3049 = vpop.f32.mrb[0].mxu0
    %v3050 = vadd.f32 %v2544, %v3049
    %v3051 = vpop.f32.mrb[0].mxu0
    %v3052 = vadd.f32 %v2548, %v3051
    %3053 = vmatprep.mubr.bf16.mxu0 %v2472
    %3054 = vmatmul.mubr.bf16.gmra.mrb[0].mxu0 %v2471
    %v3055 = vpop.f32.mrb[0].mxu0
    %v3056 = vadd.f32 %v2544, %v3055
    %v3057 = vpop.f32.mrb[0].mxu0
    %v3058 = vadd.f32 %v2548, %v3057
    %v3059 = vpop.f32.mrb[0].mxu0
    %v3060 = vadd.f32 %v2544, %v3059
    %v3061 = vpop.f32.mrb[0].mxu0
    %v3062 = vadd.f32 %v2548, %v3061
    %3063 = vdwg.mxu0
    %3064 = vmatprep.subr.bf16.mxu0 %v2776
    %3065 = vmatpush1.bf16.msra.mxu0 %v2775
    %3066 = vmatprep.subr.bf16.mxu0 %v2778
    %3067 = vmatpush1.bf16.msra.mxu0 %v2777
    %3068 = vmatprep.subr.bf16.mxu0 %v2780
    %3069 = vmatpush1.bf16.msra.mxu0 %v2779
    %3070 = vmatprep.subr.bf16.mxu0 %v2782
    %3071 = vmatpush1.bf16.msra.mxu0 %v2781
    %3072 = vmatprep.subr.bf16.mxu0 %v2784
    %3073 = vmatpush1.bf16.msra.mxu0 %v2783
    %3074 = vmatprep.subr.bf16.mxu0 %v2786
    %3075 = vmatpush1.bf16.msra.mxu0 %v2785
    %3076 = vmatprep.subr.bf16.mxu0 %v2788
    %3077 = vmatpush1.bf16.msra.mxu0 %v2787
    %3078 = vmatprep.subr.bf16.mxu0 %v2790
    %3079 = vmatpush1.bf16.msra.mxu0 %v2789
    %3080 = vmatprep.subr.bf16.mxu0 %v2792
    %3081 = vmatpush1.bf16.msra.mxu0 %v2791
    %3082 = vmatprep.subr.bf16.mxu0 %v2794
    %3083 = vmatpush1.bf16.msra.mxu0 %v2793
    %3084 = vmatprep.subr.bf16.mxu0 %v2796
    %3085 = vmatpush1.bf16.msra.mxu0 %v2795
    %3086 = vmatprep.subr.bf16.mxu0 %v2798
    %3087 = vmatpush1.bf16.msra.mxu0 %v2797
    %3088 = vmatprep.subr.bf16.mxu0 %v2800
    %3089 = vmatpush1.bf16.msra.mxu0 %v2799
    %3090 = vmatprep.subr.bf16.mxu0 %v2802
    %3091 = vmatpush1.bf16.msra.mxu0 %v2801
    %3092 = vmatprep.subr.bf16.mxu0 %v2804
    %3093 = vmatpush1.bf16.msra.mxu0 %v2803
    %3094 = vmatprep.subr.bf16.mxu0 %v2806
    %3095 = vmatpush1.bf16.msra.mxu0 %v2805
    %3096 = vmatprep.mubr.bf16.mxu0 %v2414
    %3097 = vmatmul.mubr.bf16.gmra.mrb[0].mxu0 %v2413
    %v3098 = vpop.f32.mrb[0].mxu0
    %v3099 = vadd.f32 %v2906, %v3098
    %v3100 = vpop.f32.mrb[0].mxu0
    %v3101 = vadd.f32 %v2908, %v3100
    %v3102 = vpop.f32.mrb[0].mxu0
    %v3103 = vadd.f32 %v2910, %v3102
    %v3104 = vpop.f32.mrb[0].mxu0
    %v3105 = vadd.f32 %v2912, %v3104
    %3106 = vmatprep.mubr.bf16.mxu0 %v2418
    %3107 = vmatmul.mubr.bf16.gmra.mrb[0].mxu0 %v2417
    %v3108 = vpop.f32.mrb[0].mxu0
    %v3109 = vadd.f32 %v2916, %v3108
    %v3110 = vpop.f32.mrb[0].mxu0
    %v3111 = vadd.f32 %v2918, %v3110
    %v3112 = vpop.f32.mrb[0].mxu0
    %v3113 = vadd.f32 %v2920, %v3112
    %v3114 = vpop.f32.mrb[0].mxu0
    %v3115 = vadd.f32 %v2922, %v3114
    %3116 = vmatprep.mubr.bf16.mxu0 %v2422
    %3117 = vmatmul.mubr.bf16.gmra.mrb[0].mxu0 %v2421
    %v3118 = vpop.f32.mrb[0].mxu0
    %v3119 = vadd.f32 %v2926, %v3118
    %v3120 = vpop.f32.mrb[0].mxu0
    %v3121 = vadd.f32 %v2928, %v3120
    %v3122 = vpop.f32.mrb[0].mxu0
    %v3123 = vadd.f32 %v2930, %v3122
    %v3124 = vpop.f32.mrb[0].mxu0
    %v3125 = vadd.f32 %v2932, %v3124
    %3126 = vmatprep.mubr.bf16.mxu0 %v2426
    %3127 = vmatmul.mubr.bf16.gmra.mrb[0].mxu0 %v2425
    %v3128 = vpop.f32.mrb[0].mxu0
    %v3129 = vadd.f32 %v2936, %v3128
    %v3130 = vpop.f32.mrb[0].mxu0
    %v3131 = vadd.f32 %v2938, %v3130
    %v3132 = vpop.f32.mrb[0].mxu0
    %v3133 = vadd.f32 %v2940, %v3132
    %v3134 = vpop.f32.mrb[0].mxu0
    %v3135 = vadd.f32 %v2942, %v3134
    %3136 = vmatprep.mubr.bf16.mxu0 %v2430
    %3137 = vmatmul.mubr.bf16.gmra.mrb[0].mxu0 %v2429
    %v3138 = vpop.f32.mrb[0].mxu0
    %v3139 = vadd.f32 %v2946, %v3138
    %v3140 = vpop.f32.mrb[0].mxu0
    %v3141 = vadd.f32 %v2948, %v3140
    %v3142 = vpop.f32.mrb[0].mxu0
    %v3143 = vadd.f32 %v2950, %v3142
    %v3144 = vpop.f32.mrb[0].mxu0
    %v3145 = vadd.f32 %v2952, %v3144
    %3146 = vmatprep.mubr.bf16.mxu0 %v2434
    %3147 = vmatmul.mubr.bf16.gmra.mrb[0].mxu0 %v2433
    %v3148 = vpop.f32.mrb[0].mxu0
    %v3149 = vadd.f32 %v2956, %v3148
    %v3150 = vpop.f32.mrb[0].mxu0
    %v3151 = vadd.f32 %v2958, %v3150
    %v3152 = vpop.f32.mrb[0].mxu0
    %v3153 = vadd.f32 %v2960, %v3152
    %v3154 = vpop.f32.mrb[0].mxu0
    %v3155 = vadd.f32 %v2962, %v3154
    %3156 = vmatprep.mubr.bf16.mxu0 %v2438
    %3157 = vmatmul.mubr.bf16.gmra.mrb[0].mxu0 %v2437
    %v3158 = vpop.f32.mrb[0].mxu0
    %v3159 = vadd.f32 %v2966, %v3158
    %v3160 = vpop.f32.mrb[0].mxu0
    %v3161 = vadd.f32 %v2968, %v3160
    %v3162 = vpop.f32.mrb[0].mxu0
    %v3163 = vadd.f32 %v2970, %v3162
    %v3164 = vpop.f32.mrb[0].mxu0
    %v3165 = vadd.f32 %v2972, %v3164
    %3166 = vmatprep.mubr.bf16.mxu0 %v2442
    %3167 = vmatmul.mubr.bf16.gmra.mrb[0].mxu0 %v2441
    %v3168 = vpop.f32.mrb[0].mxu0
    %v3169 = vadd.f32 %v2976, %v3168
    %v3170 = vpop.f32.mrb[0].mxu0
    %v3171 = vadd.f32 %v2978, %v3170
    %v3172 = vpop.f32.mrb[0].mxu0
    %v3173 = vadd.f32 %v2980, %v3172
    %v3174 = vpop.f32.mrb[0].mxu0
    %v3175 = vadd.f32 %v2982, %v3174
    %3176 = vmatprep.mubr.bf16.mxu0 %v2446
    %3177 = vmatmul.mubr.bf16.gmra.mrb[0].mxu0 %v2445
    %v3178 = vpop.f32.mrb[0].mxu0
    %v3179 = vadd.f32 %v2986, %v3178
    %v3180 = vpop.f32.mrb[0].mxu0
    %v3181 = vadd.f32 %v2988, %v3180
    %v3182 = vpop.f32.mrb[0].mxu0
    %v3183 = vadd.f32 %v2990, %v3182
    %v3184 = vpop.f32.mrb[0].mxu0
    %v3185 = vadd.f32 %v2992, %v3184
    %3186 = vmatprep.mubr.bf16.mxu0 %v2450
    %3187 = vmatmul.mubr.bf16.gmra.mrb[0].mxu0 %v2449
    %v3188 = vpop.f32.mrb[0].mxu0
    %v3189 = vadd.f32 %v2996, %v3188
    %v3190 = vpop.f32.mrb[0].mxu0
    %v3191 = vadd.f32 %v2998, %v3190
    %v3192 = vpop.f32.mrb[0].mxu0
    %v3193 = vadd.f32 %v3000, %v3192
    %v3194 = vpop.f32.mrb[0].mxu0
    %v3195 = vadd.f32 %v3002, %v3194
    %3196 = vmatprep.mubr.bf16.mxu0 %v2454
    %3197 = vmatmul.mubr.bf16.gmra.mrb[0].mxu0 %v2453
    %v3198 = vpop.f32.mrb[0].mxu0
    %v3199 = vadd.f32 %v3006, %v3198
    %v3200 = vpop.f32.mrb[0].mxu0
    %v3201 = vadd.f32 %v3008, %v3200
    %v3202 = vpop.f32.mrb[0].mxu0
    %v3203 = vadd.f32 %v3010, %v3202
    %v3204 = vpop.f32.mrb[0].mxu0
    %v3205 = vadd.f32 %v3012, %v3204
    %3206 = vmatprep.mubr.bf16.mxu0 %v2458
    %3207 = vmatmul.mubr.bf16.gmra.mrb[0].mxu0 %v2457
    %v3208 = vpop.f32.mrb[0].mxu0
    %v3209 = vadd.f32 %v3016, %v3208
    %v3210 = vpop.f32.mrb[0].mxu0
    %v3211 = vadd.f32 %v3018, %v3210
    %v3212 = vpop.f32.mrb[0].mxu0
    %v3213 = vadd.f32 %v3020, %v3212
    %v3214 = vpop.f32.mrb[0].mxu0
    %v3215 = vadd.f32 %v3022, %v3214
    %3216 = vmatprep.mubr.bf16.mxu0 %v2462
    %3217 = vmatmul.mubr.bf16.gmra.mrb[0].mxu0 %v2461
    %v3218 = vpop.f32.mrb[0].mxu0
    %v3219 = vadd.f32 %v3026, %v3218
    %v3220 = vpop.f32.mrb[0].mxu0
    %v3221 = vadd.f32 %v3028, %v3220
    %v3222 = vpop.f32.mrb[0].mxu0
    %v3223 = vadd.f32 %v3030, %v3222
    %v3224 = vpop.f32.mrb[0].mxu0
    %v3225 = vadd.f32 %v3032, %v3224
    %3226 = vmatprep.mubr.bf16.mxu0 %v2466
    %3227 = vmatmul.mubr.bf16.gmra.mrb[0].mxu0 %v2465
    %v3228 = vpop.f32.mrb[0].mxu0
    %v3229 = vadd.f32 %v3036, %v3228
    %v3230 = vpop.f32.mrb[0].mxu0
    %v3231 = vadd.f32 %v3038, %v3230
    %v3232 = vpop.f32.mrb[0].mxu0
    %v3233 = vadd.f32 %v3040, %v3232
    %v3234 = vpop.f32.mrb[0].mxu0
    %v3235 = vadd.f32 %v3042, %v3234
    %3236 = vmatprep.mubr.bf16.mxu0 %v2470
    %3237 = vmatmul.mubr.bf16.gmra.mrb[0].mxu0 %v2469
    %v3238 = vpop.f32.mrb[0].mxu0
    %v3239 = vadd.f32 %v3046, %v3238
    %v3240 = vpop.f32.mrb[0].mxu0
    %v3241 = vadd.f32 %v3048, %v3240
    %v3242 = vpop.f32.mrb[0].mxu0
    %v3243 = vadd.f32 %v3050, %v3242
    %v3244 = vpop.f32.mrb[0].mxu0
    %v3245 = vadd.f32 %v3052, %v3244
    %3246 = vmatprep.mubr.bf16.mxu0 %v2474
    %3247 = vmatmul.mubr.bf16.gmra.mrb[0].mxu0 %v2473
    %v3248 = vpop.f32.mrb[0].mxu0
    %v3249 = vadd.f32 %v3056, %v3248
    %v3250 = vpop.f32.mrb[0].mxu0
    %v3251 = vadd.f32 %v3058, %v3250
    %v3252 = vpop.f32.mrb[0].mxu0
    %v3253 = vadd.f32 %v3060, %v3252
    %v3254 = vpop.f32.mrb[0].mxu0
    %v3255 = vadd.f32 %v3062, %v3254
    %3256 = vdwg.mxu0
    %vm3257 = vcmp.gt.f32.partialorder %v3099, 0.0
    %vm3258 = vcmp.gt.f32.partialorder %v3101, 0.0
    %vm3259 = vcmp.gt.f32.partialorder %v3103, 0.0
    %vm3260 = vcmp.gt.f32.partialorder %v3105, 0.0
    %vm3261 = vcmp.gt.f32.partialorder %v3109, 0.0
    %vm3262 = vcmp.gt.f32.partialorder %v3111, 0.0
    %vm3263 = vcmp.gt.f32.partialorder %v3113, 0.0
    %vm3264 = vcmp.gt.f32.partialorder %v3115, 0.0
    %vm3265 = vcmp.gt.f32.partialorder %v3119, 0.0
    %vm3266 = vcmp.gt.f32.partialorder %v3121, 0.0
    %vm3267 = vcmp.gt.f32.partialorder %v3123, 0.0
    %vm3268 = vcmp.gt.f32.partialorder %v3125, 0.0
    %vm3269 = vcmp.gt.f32.partialorder %v3129, 0.0
    %vm3270 = vcmp.gt.f32.partialorder %v3131, 0.0
    %vm3271 = vcmp.gt.f32.partialorder %v3133, 0.0
    %vm3272 = vcmp.gt.f32.partialorder %v3135, 0.0
    %vm3273 = vcmp.gt.f32.partialorder %v3139, 0.0
    %vm3274 = vcmp.gt.f32.partialorder %v3141, 0.0
    %vm3275 = vcmp.gt.f32.partialorder %v3143, 0.0
    %vm3276 = vcmp.gt.f32.partialorder %v3145, 0.0
    %vm3277 = vcmp.gt.f32.partialorder %v3149, 0.0
    %vm3278 = vcmp.gt.f32.partialorder %v3151, 0.0
    %vm3279 = vcmp.gt.f32.partialorder %v3153, 0.0
    %vm3280 = vcmp.gt.f32.partialorder %v3155, 0.0
    %vm3281 = vcmp.gt.f32.partialorder %v3159, 0.0
    %vm3282 = vcmp.gt.f32.partialorder %v3161, 0.0
    %vm3283 = vcmp.gt.f32.partialorder %v3163, 0.0
    %vm3284 = vcmp.gt.f32.partialorder %v3165, 0.0
    %vm3285 = vcmp.gt.f32.partialorder %v3169, 0.0
    %vm3286 = vcmp.gt.f32.partialorder %v3171, 0.0
    %vm3287 = vcmp.gt.f32.partialorder %v3173, 0.0
    %vm3288 = vcmp.gt.f32.partialorder %v3175, 0.0
    %vm3289 = vcmp.gt.f32.partialorder %v3179, 0.0
    %vm3290 = vcmp.gt.f32.partialorder %v3181, 0.0
    %vm3291 = vcmp.gt.f32.partialorder %v3183, 0.0
    %vm3292 = vcmp.gt.f32.partialorder %v3185, 0.0
    %vm3293 = vcmp.gt.f32.partialorder %v3189, 0.0
    %vm3294 = vcmp.gt.f32.partialorder %v3191, 0.0
    %vm3295 = vcmp.gt.f32.partialorder %v3193, 0.0
    %vm3296 = vcmp.gt.f32.partialorder %v3195, 0.0
    %vm3297 = vcmp.gt.f32.partialorder %v3199, 0.0
    %vm3298 = vcmp.gt.f32.partialorder %v3201, 0.0
    %vm3299 = vcmp.gt.f32.partialorder %v3203, 0.0
    %vm3300 = vcmp.gt.f32.partialorder %v3205, 0.0
    %vm3301 = vcmp.gt.f32.partialorder %v3209, 0.0
    %vm3302 = vcmp.gt.f32.partialorder %v3211, 0.0
    %vm3303 = vcmp.gt.f32.partialorder %v3213, 0.0
    %vm3304 = vcmp.gt.f32.partialorder %v3215, 0.0
    %vm3305 = vcmp.gt.f32.partialorder %v3219, 0.0
    %vm3306 = vcmp.gt.f32.partialorder %v3221, 0.0
    %vm3307 = vcmp.gt.f32.partialorder %v3223, 0.0
    %vm3308 = vcmp.gt.f32.partialorder %v3225, 0.0
    %vm3309 = vcmp.gt.f32.partialorder %v3229, 0.0
    %vm3310 = vcmp.gt.f32.partialorder %v3231, 0.0
    %vm3311 = vcmp.gt.f32.partialorder %v3233, 0.0
    %vm3312 = vcmp.gt.f32.partialorder %v3235, 0.0
    %vm3313 = vcmp.gt.f32.partialorder %v3239, 0.0
    %vm3314 = vcmp.gt.f32.partialorder %v3241, 0.0
    %vm3315 = vcmp.gt.f32.partialorder %v3243, 0.0
    %vm3316 = vcmp.gt.f32.partialorder %v3245, 0.0
    %vm3317 = vcmp.gt.f32.partialorder %v3249, 0.0
    %vm3318 = vcmp.gt.f32.partialorder %v3251, 0.0
    %vm3319 = vcmp.gt.f32.partialorder %v3253, 0.0
    %vm3320 = vcmp.gt.f32.partialorder %v3255, 0.0
    %v3321 = vmul.f32 %v3099, 0.2
    %v3322 = vmul.f32 %v3101, 0.2
    %v3323 = vmul.f32 %v3103, 0.2
    %v3324 = vmul.f32 %v3105, 0.2
    %v3325 = vmul.f32 %v3109, 0.2
    %v3326 = vmul.f32 %v3111, 0.2
    %v3327 = vmul.f32 %v3113, 0.2
    %v3328 = vmul.f32 %v3115, 0.2
    %v3329 = vmul.f32 %v3119, 0.2
    %v3330 = vmul.f32 %v3121, 0.2
    %v3331 = vmul.f32 %v3123, 0.2
    %v3332 = vmul.f32 %v3125, 0.2
    %v3333 = vmul.f32 %v3129, 0.2
    %v3334 = vmul.f32 %v3131, 0.2
    %v3335 = vmul.f32 %v3133, 0.2
    %v3336 = vmul.f32 %v3135, 0.2
    %v3337 = vmul.f32 %v3139, 0.2
    %v3338 = vmul.f32 %v3141, 0.2
    %v3339 = vmul.f32 %v3143, 0.2
    %v3340 = vmul.f32 %v3145, 0.2
    %v3341 = vmul.f32 %v3149, 0.2
    %v3342 = vmul.f32 %v3151, 0.2
    %v3343 = vmul.f32 %v3153, 0.2
    %v3344 = vmul.f32 %v3155, 0.2
    %v3345 = vmul.f32 %v3159, 0.2
    %v3346 = vmul.f32 %v3161, 0.2
    %v3347 = vmul.f32 %v3163, 0.2
    %v3348 = vmul.f32 %v3165, 0.2
    %v3349 = vmul.f32 %v3169, 0.2
    %v3350 = vmul.f32 %v3171, 0.2
    %v3351 = vmul.f32 %v3173, 0.2
    %v3352 = vmul.f32 %v3175, 0.2
    %v3353 = vmul.f32 %v3179, 0.2
    %v3354 = vmul.f32 %v3181, 0.2
    %v3355 = vmul.f32 %v3183, 0.2
    %v3356 = vmul.f32 %v3185, 0.2
    %v3357 = vmul.f32 %v3189, 0.2
    %v3358 = vmul.f32 %v3191, 0.2
    %v3359 = vmul.f32 %v3193, 0.2
    %v3360 = vmul.f32 %v3195, 0.2
    %v3361 = vmul.f32 %v3199, 0.2
    %v3362 = vmul.f32 %v3201, 0.2
    %v3363 = vmul.f32 %v3203, 0.2
    %v3364 = vmul.f32 %v3205, 0.2
    %v3365 = vmul.f32 %v3209, 0.2
    %v3366 = vmul.f32 %v3211, 0.2
    %v3367 = vmul.f32 %v3213, 0.2
    %v3368 = vmul.f32 %v3215, 0.2
    %v3369 = vmul.f32 %v3219, 0.2
    %v3370 = vmul.f32 %v3221, 0.2
    %v3371 = vmul.f32 %v3223, 0.2
    %v3372 = vmul.f32 %v3225, 0.2
    %v3373 = vmul.f32 %v3229, 0.2
    %v3374 = vmul.f32 %v3231, 0.2
    %v3375 = vmul.f32 %v3233, 0.2
    %v3376 = vmul.f32 %v3235, 0.2
    %v3377 = vmul.f32 %v3239, 0.2
    %v3378 = vmul.f32 %v3241, 0.2
    %v3379 = vmul.f32 %v3243, 0.2
    %v3380 = vmul.f32 %v3245, 0.2
    %v3381 = vmul.f32 %v3249, 0.2
    %v3382 = vmul.f32 %v3251, 0.2
    %v3383 = vmul.f32 %v3253, 0.2
    %v3384 = vmul.f32 %v3255, 0.2
    %v3385 = vsel %vm3257, %v3099, %v3321
    %v3386 = vsel %vm3258, %v3101, %v3322
    %v3387 = vsel %vm3259, %v3103, %v3323
    %v3388 = vsel %vm3260, %v3105, %v3324
    %v3389 = vsel %vm3261, %v3109, %v3325
    %v3390 = vsel %vm3262, %v3111, %v3326
    %v3391 = vsel %vm3263, %v3113, %v3327
    %v3392 = vsel %vm3264, %v3115, %v3328
    %v3393 = vsel %vm3265, %v3119, %v3329
    %v3394 = vsel %vm3266, %v3121, %v3330
    %v3395 = vsel %vm3267, %v3123, %v3331
    %v3396 = vsel %vm3268, %v3125, %v3332
    %v3397 = vsel %vm3269, %v3129, %v3333
    %v3398 = vsel %vm3270, %v3131, %v3334
    %v3399 = vsel %vm3271, %v3133, %v3335
    %v3400 = vsel %vm3272, %v3135, %v3336
    %v3401 = vsel %vm3273, %v3139, %v3337
    %v3402 = vsel %vm3274, %v3141, %v3338
    %v3403 = vsel %vm3275, %v3143, %v3339
    %v3404 = vsel %vm3276, %v3145, %v3340
    %v3405 = vsel %vm3277, %v3149, %v3341
    %v3406 = vsel %vm3278, %v3151, %v3342
    %v3407 = vsel %vm3279, %v3153, %v3343
    %v3408 = vsel %vm3280, %v3155, %v3344
    %v3409 = vsel %vm3281, %v3159, %v3345
    %v3410 = vsel %vm3282, %v3161, %v3346
    %v3411 = vsel %vm3283, %v3163, %v3347
    %v3412 = vsel %vm3284, %v3165, %v3348
    %v3413 = vsel %vm3285, %v3169, %v3349
    %v3414 = vsel %vm3286, %v3171, %v3350
    %v3415 = vsel %vm3287, %v3173, %v3351
    %v3416 = vsel %vm3288, %v3175, %v3352
    %v3417 = vsel %vm3289, %v3179, %v3353
    %v3418 = vsel %vm3290, %v3181, %v3354
    %v3419 = vsel %vm3291, %v3183, %v3355
    %v3420 = vsel %vm3292, %v3185, %v3356
    %v3421 = vsel %vm3293, %v3189, %v3357
    %v3422 = vsel %vm3294, %v3191, %v3358
    %v3423 = vsel %vm3295, %v3193, %v3359
    %v3424 = vsel %vm3296, %v3195, %v3360
    %v3425 = vsel %vm3297, %v3199, %v3361
    %v3426 = vsel %vm3298, %v3201, %v3362
    %v3427 = vsel %vm3299, %v3203, %v3363
    %v3428 = vsel %vm3300, %v3205, %v3364
    %v3429 = vsel %vm3301, %v3209, %v3365
    %v3430 = vsel %vm3302, %v3211, %v3366
    %v3431 = vsel %vm3303, %v3213, %v3367
    %v3432 = vsel %vm3304, %v3215, %v3368
    %v3433 = vsel %vm3305, %v3219, %v3369
    %v3434 = vsel %vm3306, %v3221, %v3370
    %v3435 = vsel %vm3307, %v3223, %v3371
    %v3436 = vsel %vm3308, %v3225, %v3372
    %v3437 = vsel %vm3309, %v3229, %v3373
    %v3438 = vsel %vm3310, %v3231, %v3374
    %v3439 = vsel %vm3311, %v3233, %v3375
    %v3440 = vsel %vm3312, %v3235, %v3376
    %v3441 = vsel %vm3313, %v3239, %v3377
    %v3442 = vsel %vm3314, %v3241, %v3378
    %v3443 = vsel %vm3315, %v3243, %v3379
    %v3444 = vsel %vm3316, %v3245, %v3380
    %v3445 = vsel %vm3317, %v3249, %v3381
    %v3446 = vsel %vm3318, %v3251, %v3382
    %v3447 = vsel %vm3319, %v3253, %v3383
    %v3448 = vsel %vm3320, %v3255, %v3384
    %v3449 = vld [vmem:[%s7] sm:$0x3]
    %v3451 = vlaneseq
    %v3452 = vshrl.u32 %v3451, 7
    %v3453 = vsub.s32 0, %v3452
    %v3454 = vrot.slane %v3449, %v3453
    %v3455 = vlaneseq
    %v3456 = vshrl.u32 %v3455, 7
    %v3457 = vsub.s32 1, %v3456
    %v3458 = vrot.slane %v3449, %v3457
    %v3461 = vmul.f32 %v3385, %v3454
    %v3462 = vmul.f32 %v3386, %v3458
    %v3463 = vmul.f32 %v3387, %v3454
    %v3464 = vmul.f32 %v3388, %v3458
    %v3465 = vmul.f32 %v3389, %v3454
    %v3466 = vmul.f32 %v3390, %v3458
    %v3467 = vmul.f32 %v3391, %v3454
    %v3468 = vmul.f32 %v3392, %v3458
    %v3469 = vmul.f32 %v3393, %v3454
    %v3470 = vmul.f32 %v3394, %v3458
    %v3471 = vmul.f32 %v3395, %v3454
    %v3472 = vmul.f32 %v3396, %v3458
    %v3473 = vmul.f32 %v3397, %v3454
    %v3474 = vmul.f32 %v3398, %v3458
    %v3475 = vmul.f32 %v3399, %v3454
    %v3476 = vmul.f32 %v3400, %v3458
    %v3477 = vmul.f32 %v3401, %v3454
    %v3478 = vmul.f32 %v3402, %v3458
    %v3479 = vmul.f32 %v3403, %v3454
    %v3480 = vmul.f32 %v3404, %v3458
    %v3481 = vmul.f32 %v3405, %v3454
    %v3482 = vmul.f32 %v3406, %v3458
    %v3483 = vmul.f32 %v3407, %v3454
    %v3484 = vmul.f32 %v3408, %v3458
    %v3485 = vmul.f32 %v3409, %v3454
    %v3486 = vmul.f32 %v3410, %v3458
    %v3487 = vmul.f32 %v3411, %v3454
    %v3488 = vmul.f32 %v3412, %v3458
    %v3489 = vmul.f32 %v3413, %v3454
    %v3490 = vmul.f32 %v3414, %v3458
    %v3491 = vmul.f32 %v3415, %v3454
    %v3492 = vmul.f32 %v3416, %v3458
    %v3493 = vmul.f32 %v3417, %v3454
    %v3494 = vmul.f32 %v3418, %v3458
    %v3495 = vmul.f32 %v3419, %v3454
    %v3496 = vmul.f32 %v3420, %v3458
    %v3497 = vmul.f32 %v3421, %v3454
    %v3498 = vmul.f32 %v3422, %v3458
    %v3499 = vmul.f32 %v3423, %v3454
    %v3500 = vmul.f32 %v3424, %v3458
    %v3501 = vmul.f32 %v3425, %v3454
    %v3502 = vmul.f32 %v3426, %v3458
    %v3503 = vmul.f32 %v3427, %v3454
    %v3504 = vmul.f32 %v3428, %v3458
    %v3505 = vmul.f32 %v3429, %v3454
    %v3506 = vmul.f32 %v3430, %v3458
    %v3507 = vmul.f32 %v3431, %v3454
    %v3508 = vmul.f32 %v3432, %v3458
    %v3509 = vmul.f32 %v3433, %v3454
    %v3510 = vmul.f32 %v3434, %v3458
    %v3511 = vmul.f32 %v3435, %v3454
    %v3512 = vmul.f32 %v3436, %v3458
    %v3513 = vmul.f32 %v3437, %v3454
    %v3514 = vmul.f32 %v3438, %v3458
    %v3515 = vmul.f32 %v3439, %v3454
    %v3516 = vmul.f32 %v3440, %v3458
    %v3517 = vmul.f32 %v3441, %v3454
    %v3518 = vmul.f32 %v3442, %v3458
    %v3519 = vmul.f32 %v3443, %v3454
    %v3520 = vmul.f32 %v3444, %v3458
    %v3521 = vmul.f32 %v3445, %v3454
    %v3522 = vmul.f32 %v3446, %v3458
    %v3523 = vmul.f32 %v3447, %v3454
    %v3524 = vmul.f32 %v3448, %v3458
    %v3525 = vadd.f32 %v3461, %v3462
    %3526 = vadd.xlane.f32.xlu0 %v3525
    %v3527 = vpop.xlane.xlu0 %3526
    %v3528 = vadd.f32 %v3463, %v3464
    %3529 = vadd.xlane.f32.xlu0 %v3528
    %v3530 = vpop.xlane.xlu0 %3529
    %v3531 = vadd.f32 %v3465, %v3466
    %3532 = vadd.xlane.f32.xlu0 %v3531
    %v3533 = vpop.xlane.xlu0 %3532
    %v3534 = vadd.f32 %v3467, %v3468
    %3535 = vadd.xlane.f32.xlu0 %v3534
    %v3536 = vpop.xlane.xlu0 %3535
    %v3537 = vadd.f32 %v3469, %v3470
    %3538 = vadd.xlane.f32.xlu0 %v3537
    %v3539 = vpop.xlane.xlu0 %3538
    %v3540 = vadd.f32 %v3471, %v3472
    %3541 = vadd.xlane.f32.xlu0 %v3540
    %v3542 = vpop.xlane.xlu0 %3541
    %v3543 = vadd.f32 %v3473, %v3474
    %3544 = vadd.xlane.f32.xlu0 %v3543
    %v3545 = vpop.xlane.xlu0 %3544
    %v3546 = vadd.f32 %v3475, %v3476
    %3547 = vadd.xlane.f32.xlu0 %v3546
    %v3548 = vpop.xlane.xlu0 %3547
    %v3549 = vadd.f32 %v3477, %v3478
    %3550 = vadd.xlane.f32.xlu0 %v3549
    %v3551 = vpop.xlane.xlu0 %3550
    %v3552 = vadd.f32 %v3479, %v3480
    %3553 = vadd.xlane.f32.xlu0 %v3552
    %v3554 = vpop.xlane.xlu0 %3553
    %v3555 = vadd.f32 %v3481, %v3482
    %3556 = vadd.xlane.f32.xlu0 %v3555
    %v3557 = vpop.xlane.xlu0 %3556
    %v3558 = vadd.f32 %v3483, %v3484
    %3559 = vadd.xlane.f32.xlu0 %v3558
    %v3560 = vpop.xlane.xlu0 %3559
    %v3561 = vadd.f32 %v3485, %v3486
    %3562 = vadd.xlane.f32.xlu0 %v3561
    %v3563 = vpop.xlane.xlu0 %3562
    %v3564 = vadd.f32 %v3487, %v3488
    %3565 = vadd.xlane.f32.xlu0 %v3564
    %v3566 = vpop.xlane.xlu0 %3565
    %v3567 = vadd.f32 %v3489, %v3490
    %3568 = vadd.xlane.f32.xlu0 %v3567
    %v3569 = vpop.xlane.xlu0 %3568
    %v3570 = vadd.f32 %v3491, %v3492
    %3571 = vadd.xlane.f32.xlu0 %v3570
    %v3572 = vpop.xlane.xlu0 %3571
    %v3573 = vadd.f32 %v3493, %v3494
    %3574 = vadd.xlane.f32.xlu0 %v3573
    %v3575 = vpop.xlane.xlu0 %3574
    %v3576 = vadd.f32 %v3495, %v3496
    %3577 = vadd.xlane.f32.xlu0 %v3576
    %v3578 = vpop.xlane.xlu0 %3577
    %v3579 = vadd.f32 %v3497, %v3498
    %3580 = vadd.xlane.f32.xlu0 %v3579
    %v3581 = vpop.xlane.xlu0 %3580
    %v3582 = vadd.f32 %v3499, %v3500
    %3583 = vadd.xlane.f32.xlu0 %v3582
    %v3584 = vpop.xlane.xlu0 %3583
    %v3585 = vadd.f32 %v3501, %v3502
    %3586 = vadd.xlane.f32.xlu0 %v3585
    %v3587 = vpop.xlane.xlu0 %3586
    %v3588 = vadd.f32 %v3503, %v3504
    %3589 = vadd.xlane.f32.xlu0 %v3588
    %v3590 = vpop.xlane.xlu0 %3589
    %v3591 = vadd.f32 %v3505, %v3506
    %3592 = vadd.xlane.f32.xlu0 %v3591
    %v3593 = vpop.xlane.xlu0 %3592
    %v3594 = vadd.f32 %v3507, %v3508
    %3595 = vadd.xlane.f32.xlu0 %v3594
    %v3596 = vpop.xlane.xlu0 %3595
    %v3597 = vadd.f32 %v3509, %v3510
    %3598 = vadd.xlane.f32.xlu0 %v3597
    %v3599 = vpop.xlane.xlu0 %3598
    %v3600 = vadd.f32 %v3511, %v3512
    %3601 = vadd.xlane.f32.xlu0 %v3600
    %v3602 = vpop.xlane.xlu0 %3601
    %v3603 = vadd.f32 %v3513, %v3514
    %3604 = vadd.xlane.f32.xlu0 %v3603
    %v3605 = vpop.xlane.xlu0 %3604
    %v3606 = vadd.f32 %v3515, %v3516
    %3607 = vadd.xlane.f32.xlu0 %v3606
    %v3608 = vpop.xlane.xlu0 %3607
    %v3609 = vadd.f32 %v3517, %v3518
    %3610 = vadd.xlane.f32.xlu0 %v3609
    %v3611 = vpop.xlane.xlu0 %3610
    %v3612 = vadd.f32 %v3519, %v3520
    %3613 = vadd.xlane.f32.xlu0 %v3612
    %v3614 = vpop.xlane.xlu0 %3613
    %v3615 = vadd.f32 %v3521, %v3522
    %3616 = vadd.xlane.f32.xlu0 %v3615
    %v3617 = vpop.xlane.xlu0 %3616
    %v3618 = vadd.f32 %v3523, %v3524
    %3619 = vadd.xlane.f32.xlu0 %v3618
    %v3620 = vpop.xlane.xlu0 %3619
    %v3621 = vld [vmem:[#allocation2] sm:$0x1]
    %3623 = vset.pattern.permute.xlu0 0
    %3624 = vperm.xlu0 %3623, %v3621
    %v3625 = vpop.permute.xlu0 %3624
    %v3627 = vlaneseq
    %v3628 = vshrl.u32 %v3627, 7
    %v3629 = vsub.s32 0, %v3628
    %v3630 = vrot.slane %v3625, %v3629
    %v3631 = vadd.f32 %v3527, %v3630
    %v3632 = vadd.f32 %v3530, %v3630
    %v3633 = vadd.f32 %v3533, %v3630
    %v3634 = vadd.f32 %v3536, %v3630
    %v3635 = vadd.f32 %v3539, %v3630
    %v3636 = vadd.f32 %v3542, %v3630
    %v3637 = vadd.f32 %v3545, %v3630
    %v3638 = vadd.f32 %v3548, %v3630
    %v3639 = vadd.f32 %v3551, %v3630
    %v3640 = vadd.f32 %v3554, %v3630
    %v3641 = vadd.f32 %v3557, %v3630
    %v3642 = vadd.f32 %v3560, %v3630
    %v3643 = vadd.f32 %v3563, %v3630
    %v3644 = vadd.f32 %v3566, %v3630
    %v3645 = vadd.f32 %v3569, %v3630
    %v3646 = vadd.f32 %v3572, %v3630
    %v3647 = vadd.f32 %v3575, %v3630
    %v3648 = vadd.f32 %v3578, %v3630
    %v3649 = vadd.f32 %v3581, %v3630
    %v3650 = vadd.f32 %v3584, %v3630
    %v3651 = vadd.f32 %v3587, %v3630
    %v3652 = vadd.f32 %v3590, %v3630
    %v3653 = vadd.f32 %v3593, %v3630
    %v3654 = vadd.f32 %v3596, %v3630
    %v3655 = vadd.f32 %v3599, %v3630
    %v3656 = vadd.f32 %v3602, %v3630
    %v3657 = vadd.f32 %v3605, %v3630
    %v3658 = vadd.f32 %v3608, %v3630
    %v3659 = vadd.f32 %v3611, %v3630
    %v3660 = vadd.f32 %v3614, %v3630
    %v3661 = vadd.f32 %v3617, %v3630
    %v3662 = vadd.f32 %v3620, %v3630
    %v3663 = vxor.u32 %v3631, 2147483648
    %v3664 = vxor.u32 %v3632, 2147483648
    %v3665 = vxor.u32 %v3633, 2147483648
    %v3666 = vxor.u32 %v3634, 2147483648
    %v3667 = vxor.u32 %v3635, 2147483648
    %v3668 = vxor.u32 %v3636, 2147483648
    %v3669 = vxor.u32 %v3637, 2147483648
    %v3670 = vxor.u32 %v3638, 2147483648
    %v3671 = vxor.u32 %v3639, 2147483648
    %v3672 = vxor.u32 %v3640, 2147483648
    %v3673 = vxor.u32 %v3641, 2147483648
    %v3674 = vxor.u32 %v3642, 2147483648
    %v3675 = vxor.u32 %v3643, 2147483648
    %v3676 = vxor.u32 %v3644, 2147483648
    %v3677 = vxor.u32 %v3645, 2147483648
    %v3678 = vxor.u32 %v3646, 2147483648
    %v3679 = vxor.u32 %v3647, 2147483648
    %v3680 = vxor.u32 %v3648, 2147483648
    %v3681 = vxor.u32 %v3649, 2147483648
    %v3682 = vxor.u32 %v3650, 2147483648
    %v3683 = vxor.u32 %v3651, 2147483648
    %v3684 = vxor.u32 %v3652, 2147483648
    %v3685 = vxor.u32 %v3653, 2147483648
    %v3686 = vxor.u32 %v3654, 2147483648
    %v3687 = vxor.u32 %v3655, 2147483648
    %v3688 = vxor.u32 %v3656, 2147483648
    %v3689 = vxor.u32 %v3657, 2147483648
    %v3690 = vxor.u32 %v3658, 2147483648
    %v3691 = vxor.u32 %v3659, 2147483648
    %v3692 = vxor.u32 %v3660, 2147483648
    %v3693 = vxor.u32 %v3661, 2147483648
    %v3694 = vxor.u32 %v3662, 2147483648
    %v3695 = vmul.f32 %v3663, 1.442695
    %v3696 = vpow.pop %v3695
    %v3697 = vmul.f32 %v3664, 1.442695
    %v3698 = vpow.pop %v3697
    %v3699 = vmul.f32 %v3665, 1.442695
    %v3700 = vpow.pop %v3699
    %v3701 = vmul.f32 %v3666, 1.442695
    %v3702 = vpow.pop %v3701
    %v3703 = vmul.f32 %v3667, 1.442695
    %v3704 = vpow.pop %v3703
    %v3705 = vmul.f32 %v3668, 1.442695
    %v3706 = vpow.pop %v3705
    %v3707 = vmul.f32 %v3669, 1.442695
    %v3708 = vpow.pop %v3707
    %v3709 = vmul.f32 %v3670, 1.442695
    %v3710 = vpow.pop %v3709
    %v3711 = vmul.f32 %v3671, 1.442695
    %v3712 = vpow.pop %v3711
    %v3713 = vmul.f32 %v3672, 1.442695
    %v3714 = vpow.pop %v3713
    %v3715 = vmul.f32 %v3673, 1.442695
    %v3716 = vpow.pop %v3715
    %v3717 = vmul.f32 %v3674, 1.442695
    %v3718 = vpow.pop %v3717
    %v3719 = vmul.f32 %v3675, 1.442695
    %v3720 = vpow.pop %v3719
    %v3721 = vmul.f32 %v3676, 1.442695
    %v3722 = vpow.pop %v3721
    %v3723 = vmul.f32 %v3677, 1.442695
    %v3724 = vpow.pop %v3723
    %v3725 = vmul.f32 %v3678, 1.442695
    %v3726 = vpow.pop %v3725
    %v3727 = vmul.f32 %v3679, 1.442695
    %v3728 = vpow.pop %v3727
    %v3729 = vmul.f32 %v3680, 1.442695
    %v3730 = vpow.pop %v3729
    %v3731 = vmul.f32 %v3681, 1.442695
    %v3732 = vpow.pop %v3731
    %v3733 = vmul.f32 %v3682, 1.442695
    %v3734 = vpow.pop %v3733
    %v3735 = vmul.f32 %v3683, 1.442695
    %v3736 = vpow.pop %v3735
    %v3737 = vmul.f32 %v3684, 1.442695
    %v3738 = vpow.pop %v3737
    %v3739 = vmul.f32 %v3685, 1.442695
    %v3740 = vpow.pop %v3739
    %v3741 = vmul.f32 %v3686, 1.442695
    %v3742 = vpow.pop %v3741
    %v3743 = vmul.f32 %v3687, 1.442695
    %v3744 = vpow.pop %v3743
    %v3745 = vmul.f32 %v3688, 1.442695
    %v3746 = vpow.pop %v3745
    %v3747 = vmul.f32 %v3689, 1.442695
    %v3748 = vpow.pop %v3747
    %v3749 = vmul.f32 %v3690, 1.442695
    %v3750 = vpow.pop %v3749
    %v3751 = vmul.f32 %v3691, 1.442695
    %v3752 = vpow.pop %v3751
    %v3753 = vmul.f32 %v3692, 1.442695
    %v3754 = vpow.pop %v3753
    %v3755 = vmul.f32 %v3693, 1.442695
    %v3756 = vpow.pop %v3755
    %v3757 = vmul.f32 %v3694, 1.442695
    %v3758 = vpow.pop %v3757
    %v3759 = vadd.f32 %v3696, 1.0
    %v3760 = vadd.f32 %v3698, 1.0
    %v3761 = vadd.f32 %v3700, 1.0
    %v3762 = vadd.f32 %v3702, 1.0
    %v3763 = vadd.f32 %v3704, 1.0
    %v3764 = vadd.f32 %v3706, 1.0
    %v3765 = vadd.f32 %v3708, 1.0
    %v3766 = vadd.f32 %v3710, 1.0
    %v3767 = vadd.f32 %v3712, 1.0
    %v3768 = vadd.f32 %v3714, 1.0
    %v3769 = vadd.f32 %v3716, 1.0
    %v3770 = vadd.f32 %v3718, 1.0
    %v3771 = vadd.f32 %v3720, 1.0
    %v3772 = vadd.f32 %v3722, 1.0
    %v3773 = vadd.f32 %v3724, 1.0
    %v3774 = vadd.f32 %v3726, 1.0
    %v3775 = vadd.f32 %v3728, 1.0
    %v3776 = vadd.f32 %v3730, 1.0
    %v3777 = vadd.f32 %v3732, 1.0
    %v3778 = vadd.f32 %v3734, 1.0
    %v3779 = vadd.f32 %v3736, 1.0
    %v3780 = vadd.f32 %v3738, 1.0
    %v3781 = vadd.f32 %v3740, 1.0
    %v3782 = vadd.f32 %v3742, 1.0
    %v3783 = vadd.f32 %v3744, 1.0
    %v3784 = vadd.f32 %v3746, 1.0
    %v3785 = vadd.f32 %v3748, 1.0
    %v3786 = vadd.f32 %v3750, 1.0
    %v3787 = vadd.f32 %v3752, 1.0
    %v3788 = vadd.f32 %v3754, 1.0
    %v3789 = vadd.f32 %v3756, 1.0
    %v3790 = vadd.f32 %v3758, 1.0
    %v3791 = vrcp.pop %v3759
    %v3792 = vmul.f32 1.0, %v3791
    %v3793 = vrcp.pop %v3760
    %v3794 = vmul.f32 1.0, %v3793
    %v3795 = vrcp.pop %v3761
    %v3796 = vmul.f32 1.0, %v3795
    %v3797 = vrcp.pop %v3762
    %v3798 = vmul.f32 1.0, %v3797
    %v3799 = vrcp.pop %v3763
    %v3800 = vmul.f32 1.0, %v3799
    %v3801 = vrcp.pop %v3764
    %v3802 = vmul.f32 1.0, %v3801
    %v3803 = vrcp.pop %v3765
    %v3804 = vmul.f32 1.0, %v3803
    %v3805 = vrcp.pop %v3766
    %v3806 = vmul.f32 1.0, %v3805
    %v3807 = vrcp.pop %v3767
    %v3808 = vmul.f32 1.0, %v3807
    %v3809 = vrcp.pop %v3768
    %v3810 = vmul.f32 1.0, %v3809
    %v3811 = vrcp.pop %v3769
    %v3812 = vmul.f32 1.0, %v3811
    %v3813 = vrcp.pop %v3770
    %v3814 = vmul.f32 1.0, %v3813
    %v3815 = vrcp.pop %v3771
    %v3816 = vmul.f32 1.0, %v3815
    %v3817 = vrcp.pop %v3772
    %v3818 = vmul.f32 1.0, %v3817
    %v3819 = vrcp.pop %v3773
    %v3820 = vmul.f32 1.0, %v3819
    %v3821 = vrcp.pop %v3774
    %v3822 = vmul.f32 1.0, %v3821
    %v3823 = vrcp.pop %v3775
    %v3824 = vmul.f32 1.0, %v3823
    %v3825 = vrcp.pop %v3776
    %v3826 = vmul.f32 1.0, %v3825
    %v3827 = vrcp.pop %v3777
    %v3828 = vmul.f32 1.0, %v3827
    %v3829 = vrcp.pop %v3778
    %v3830 = vmul.f32 1.0, %v3829
    %v3831 = vrcp.pop %v3779
    %v3832 = vmul.f32 1.0, %v3831
    %v3833 = vrcp.pop %v3780
    %v3834 = vmul.f32 1.0, %v3833
    %v3835 = vrcp.pop %v3781
    %v3836 = vmul.f32 1.0, %v3835
    %v3837 = vrcp.pop %v3782
    %v3838 = vmul.f32 1.0, %v3837
    %v3839 = vrcp.pop %v3783
    %v3840 = vmul.f32 1.0, %v3839
    %v3841 = vrcp.pop %v3784
    %v3842 = vmul.f32 1.0, %v3841
    %v3843 = vrcp.pop %v3785
    %v3844 = vmul.f32 1.0, %v3843
    %v3845 = vrcp.pop %v3786
    %v3846 = vmul.f32 1.0, %v3845
    %v3847 = vrcp.pop %v3787
    %v3848 = vmul.f32 1.0, %v3847
    %v3849 = vrcp.pop %v3788
    %v3850 = vmul.f32 1.0, %v3849
    %v3851 = vrcp.pop %v3789
    %v3852 = vmul.f32 1.0, %v3851
    %v3853 = vrcp.pop %v3790
    %v3854 = vmul.f32 1.0, %v3853
    %v3887 = vlaneseq
    %v3888 = vshrl.u32 %v3887, 7
    %v3889 = vsub.s32 0, %v3888
    %v3890 = vrot.slane %v3792, %v3889
    %v3891 = vlaneseq
    %v3892 = vshrl.u32 %v3891, 7
    %v3893 = vsub.s32 1, %v3892
    %v3894 = vrot.slane %v3792, %v3893
    %v3895 = vlaneseq
    %v3896 = vshrl.u32 %v3895, 7
    %v3897 = vsub.s32 2, %v3896
    %v3898 = vrot.slane %v3792, %v3897
    %v3899 = vlaneseq
    %v3900 = vshrl.u32 %v3899, 7
    %v3901 = vsub.s32 3, %v3900
    %v3902 = vrot.slane %v3792, %v3901
    %v3903 = vlaneseq
    %v3904 = vshrl.u32 %v3903, 7
    %v3905 = vsub.s32 4, %v3904
    %v3906 = vrot.slane %v3792, %v3905
    %v3907 = vlaneseq
    %v3908 = vshrl.u32 %v3907, 7
    %v3909 = vsub.s32 5, %v3908
    %v3910 = vrot.slane %v3792, %v3909
    %v3911 = vlaneseq
    %v3912 = vshrl.u32 %v3911, 7
    %v3913 = vsub.s32 6, %v3912
    %v3914 = vrot.slane %v3792, %v3913
    %v3915 = vlaneseq
    %v3916 = vshrl.u32 %v3915, 7
    %v3917 = vsub.s32 7, %v3916
    %v3918 = vrot.slane %v3792, %v3917
    %v3919 = vlaneseq
    %v3920 = vshrl.u32 %v3919, 7
    %v3921 = vsub.s32 0, %v3920
    %v3922 = vrot.slane %v3794, %v3921
    %v3923 = vlaneseq
    %v3924 = vshrl.u32 %v3923, 7
    %v3925 = vsub.s32 1, %v3924
    %v3926 = vrot.slane %v3794, %v3925
    %v3927 = vlaneseq
    %v3928 = vshrl.u32 %v3927, 7
    %v3929 = vsub.s32 2, %v3928
    %v3930 = vrot.slane %v3794, %v3929
    %v3931 = vlaneseq
    %v3932 = vshrl.u32 %v3931, 7
    %v3933 = vsub.s32 3, %v3932
    %v3934 = vrot.slane %v3794, %v3933
    %v3935 = vlaneseq
    %v3936 = vshrl.u32 %v3935, 7
    %v3937 = vsub.s32 4, %v3936
    %v3938 = vrot.slane %v3794, %v3937
    %v3939 = vlaneseq
    %v3940 = vshrl.u32 %v3939, 7
    %v3941 = vsub.s32 5, %v3940
    %v3942 = vrot.slane %v3794, %v3941
    %v3943 = vlaneseq
    %v3944 = vshrl.u32 %v3943, 7
    %v3945 = vsub.s32 6, %v3944
    %v3946 = vrot.slane %v3794, %v3945
    %v3947 = vlaneseq
    %v3948 = vshrl.u32 %v3947, 7
    %v3949 = vsub.s32 7, %v3948
    %v3950 = vrot.slane %v3794, %v3949
    %v3951 = vlaneseq
    %v3952 = vshrl.u32 %v3951, 7
    %v3953 = vsub.s32 0, %v3952
    %v3954 = vrot.slane %v3796, %v3953
    %v3955 = vlaneseq
    %v3956 = vshrl.u32 %v3955, 7
    %v3957 = vsub.s32 1, %v3956
    %v3958 = vrot.slane %v3796, %v3957
    %v3959 = vlaneseq
    %v3960 = vshrl.u32 %v3959, 7
    %v3961 = vsub.s32 2, %v3960
    %v3962 = vrot.slane %v3796, %v3961
    %v3963 = vlaneseq
    %v3964 = vshrl.u32 %v3963, 7
    %v3965 = vsub.s32 3, %v3964
    %v3966 = vrot.slane %v3796, %v3965
    %v3967 = vlaneseq
    %v3968 = vshrl.u32 %v3967, 7
    %v3969 = vsub.s32 4, %v3968
    %v3970 = vrot.slane %v3796, %v3969
    %v3971 = vlaneseq
    %v3972 = vshrl.u32 %v3971, 7
    %v3973 = vsub.s32 5, %v3972
    %v3974 = vrot.slane %v3796, %v3973
    %v3975 = vlaneseq
    %v3976 = vshrl.u32 %v3975, 7
    %v3977 = vsub.s32 6, %v3976
    %v3978 = vrot.slane %v3796, %v3977
    %v3979 = vlaneseq
    %v3980 = vshrl.u32 %v3979, 7
    %v3981 = vsub.s32 7, %v3980
    %v3982 = vrot.slane %v3796, %v3981
    %v3983 = vlaneseq
    %v3984 = vshrl.u32 %v3983, 7
    %v3985 = vsub.s32 0, %v3984
    %v3986 = vrot.slane %v3798, %v3985
    %v3987 = vlaneseq
    %v3988 = vshrl.u32 %v3987, 7
    %v3989 = vsub.s32 1, %v3988
    %v3990 = vrot.slane %v3798, %v3989
    %v3991 = vlaneseq
    %v3992 = vshrl.u32 %v3991, 7
    %v3993 = vsub.s32 2, %v3992
    %v3994 = vrot.slane %v3798, %v3993
    %v3995 = vlaneseq
    %v3996 = vshrl.u32 %v3995, 7
    %v3997 = vsub.s32 3, %v3996
    %v3998 = vrot.slane %v3798, %v3997
    %v3999 = vlaneseq
    %v4000 = vshrl.u32 %v3999, 7
    %v4001 = vsub.s32 4, %v4000
    %v4002 = vrot.slane %v3798, %v4001
    %v4003 = vlaneseq
    %v4004 = vshrl.u32 %v4003, 7
    %v4005 = vsub.s32 5, %v4004
    %v4006 = vrot.slane %v3798, %v4005
    %v4007 = vlaneseq
    %v4008 = vshrl.u32 %v4007, 7
    %v4009 = vsub.s32 6, %v4008
    %v4010 = vrot.slane %v3798, %v4009
    %v4011 = vlaneseq
    %v4012 = vshrl.u32 %v4011, 7
    %v4013 = vsub.s32 7, %v4012
    %v4014 = vrot.slane %v3798, %v4013
    %v4015 = vlaneseq
    %v4016 = vshrl.u32 %v4015, 7
    %v4017 = vsub.s32 0, %v4016
    %v4018 = vrot.slane %v3800, %v4017
    %v4019 = vlaneseq
    %v4020 = vshrl.u32 %v4019, 7
    %v4021 = vsub.s32 1, %v4020
    %v4022 = vrot.slane %v3800, %v4021
    %v4023 = vlaneseq
    %v4024 = vshrl.u32 %v4023, 7
    %v4025 = vsub.s32 2, %v4024
    %v4026 = vrot.slane %v3800, %v4025
    %v4027 = vlaneseq
    %v4028 = vshrl.u32 %v4027, 7
    %v4029 = vsub.s32 3, %v4028
    %v4030 = vrot.slane %v3800, %v4029
    %v4031 = vlaneseq
    %v4032 = vshrl.u32 %v4031, 7
    %v4033 = vsub.s32 4, %v4032
    %v4034 = vrot.slane %v3800, %v4033
    %v4035 = vlaneseq
    %v4036 = vshrl.u32 %v4035, 7
    %v4037 = vsub.s32 5, %v4036
    %v4038 = vrot.slane %v3800, %v4037
    %v4039 = vlaneseq
    %v4040 = vshrl.u32 %v4039, 7
    %v4041 = vsub.s32 6, %v4040
    %v4042 = vrot.slane %v3800, %v4041
    %v4043 = vlaneseq
    %v4044 = vshrl.u32 %v4043, 7
    %v4045 = vsub.s32 7, %v4044
    %v4046 = vrot.slane %v3800, %v4045
    %v4047 = vlaneseq
    %v4048 = vshrl.u32 %v4047, 7
    %v4049 = vsub.s32 0, %v4048
    %v4050 = vrot.slane %v3802, %v4049
    %v4051 = vlaneseq
    %v4052 = vshrl.u32 %v4051, 7
    %v4053 = vsub.s32 1, %v4052
    %v4054 = vrot.slane %v3802, %v4053
    %v4055 = vlaneseq
    %v4056 = vshrl.u32 %v4055, 7
    %v4057 = vsub.s32 2, %v4056
    %v4058 = vrot.slane %v3802, %v4057
    %v4059 = vlaneseq
    %v4060 = vshrl.u32 %v4059, 7
    %v4061 = vsub.s32 3, %v4060
    %v4062 = vrot.slane %v3802, %v4061
    %v4063 = vlaneseq
    %v4064 = vshrl.u32 %v4063, 7
    %v4065 = vsub.s32 4, %v4064
    %v4066 = vrot.slane %v3802, %v4065
    %v4067 = vlaneseq
    %v4068 = vshrl.u32 %v4067, 7
    %v4069 = vsub.s32 5, %v4068
    %v4070 = vrot.slane %v3802, %v4069
    %v4071 = vlaneseq
    %v4072 = vshrl.u32 %v4071, 7
    %v4073 = vsub.s32 6, %v4072
    %v4074 = vrot.slane %v3802, %v4073
    %v4075 = vlaneseq
    %v4076 = vshrl.u32 %v4075, 7
    %v4077 = vsub.s32 7, %v4076
    %v4078 = vrot.slane %v3802, %v4077
    %v4079 = vlaneseq
    %v4080 = vshrl.u32 %v4079, 7
    %v4081 = vsub.s32 0, %v4080
    %v4082 = vrot.slane %v3804, %v4081
    %v4083 = vlaneseq
    %v4084 = vshrl.u32 %v4083, 7
    %v4085 = vsub.s32 1, %v4084
    %v4086 = vrot.slane %v3804, %v4085
    %v4087 = vlaneseq
    %v4088 = vshrl.u32 %v4087, 7
    %v4089 = vsub.s32 2, %v4088
    %v4090 = vrot.slane %v3804, %v4089
    %v4091 = vlaneseq
    %v4092 = vshrl.u32 %v4091, 7
    %v4093 = vsub.s32 3, %v4092
    %v4094 = vrot.slane %v3804, %v4093
    %v4095 = vlaneseq
    %v4096 = vshrl.u32 %v4095, 7
    %v4097 = vsub.s32 4, %v4096
    %v4098 = vrot.slane %v3804, %v4097
    %v4099 = vlaneseq
    %v4100 = vshrl.u32 %v4099, 7
    %v4101 = vsub.s32 5, %v4100
    %v4102 = vrot.slane %v3804, %v4101
    %v4103 = vlaneseq
    %v4104 = vshrl.u32 %v4103, 7
    %v4105 = vsub.s32 6, %v4104
    %v4106 = vrot.slane %v3804, %v4105
    %v4107 = vlaneseq
    %v4108 = vshrl.u32 %v4107, 7
    %v4109 = vsub.s32 7, %v4108
    %v4110 = vrot.slane %v3804, %v4109
    %v4111 = vlaneseq
    %v4112 = vshrl.u32 %v4111, 7
    %v4113 = vsub.s32 0, %v4112
    %v4114 = vrot.slane %v3806, %v4113
    %v4115 = vlaneseq
    %v4116 = vshrl.u32 %v4115, 7
    %v4117 = vsub.s32 1, %v4116
    %v4118 = vrot.slane %v3806, %v4117
    %v4119 = vlaneseq
    %v4120 = vshrl.u32 %v4119, 7
    %v4121 = vsub.s32 2, %v4120
    %v4122 = vrot.slane %v3806, %v4121
    %v4123 = vlaneseq
    %v4124 = vshrl.u32 %v4123, 7
    %v4125 = vsub.s32 3, %v4124
    %v4126 = vrot.slane %v3806, %v4125
    %v4127 = vlaneseq
    %v4128 = vshrl.u32 %v4127, 7
    %v4129 = vsub.s32 4, %v4128
    %v4130 = vrot.slane %v3806, %v4129
    %v4131 = vlaneseq
    %v4132 = vshrl.u32 %v4131, 7
    %v4133 = vsub.s32 5, %v4132
    %v4134 = vrot.slane %v3806, %v4133
    %v4135 = vlaneseq
    %v4136 = vshrl.u32 %v4135, 7
    %v4137 = vsub.s32 6, %v4136
    %v4138 = vrot.slane %v3806, %v4137
    %v4139 = vlaneseq
    %v4140 = vshrl.u32 %v4139, 7
    %v4141 = vsub.s32 7, %v4140
    %v4142 = vrot.slane %v3806, %v4141
    %v4143 = vlaneseq
    %v4144 = vshrl.u32 %v4143, 7
    %v4145 = vsub.s32 0, %v4144
    %v4146 = vrot.slane %v3808, %v4145
    %v4147 = vlaneseq
    %v4148 = vshrl.u32 %v4147, 7
    %v4149 = vsub.s32 1, %v4148
    %v4150 = vrot.slane %v3808, %v4149
    %v4151 = vlaneseq
    %v4152 = vshrl.u32 %v4151, 7
    %v4153 = vsub.s32 2, %v4152
    %v4154 = vrot.slane %v3808, %v4153
    %v4155 = vlaneseq
    %v4156 = vshrl.u32 %v4155, 7
    %v4157 = vsub.s32 3, %v4156
    %v4158 = vrot.slane %v3808, %v4157
    %v4159 = vlaneseq
    %v4160 = vshrl.u32 %v4159, 7
    %v4161 = vsub.s32 4, %v4160
    %v4162 = vrot.slane %v3808, %v4161
    %v4163 = vlaneseq
    %v4164 = vshrl.u32 %v4163, 7
    %v4165 = vsub.s32 5, %v4164
    %v4166 = vrot.slane %v3808, %v4165
    %v4167 = vlaneseq
    %v4168 = vshrl.u32 %v4167, 7
    %v4169 = vsub.s32 6, %v4168
    %v4170 = vrot.slane %v3808, %v4169
    %v4171 = vlaneseq
    %v4172 = vshrl.u32 %v4171, 7
    %v4173 = vsub.s32 7, %v4172
    %v4174 = vrot.slane %v3808, %v4173
    %v4175 = vlaneseq
    %v4176 = vshrl.u32 %v4175, 7
    %v4177 = vsub.s32 0, %v4176
    %v4178 = vrot.slane %v3810, %v4177
    %v4179 = vlaneseq
    %v4180 = vshrl.u32 %v4179, 7
    %v4181 = vsub.s32 1, %v4180
    %v4182 = vrot.slane %v3810, %v4181
    %v4183 = vlaneseq
    %v4184 = vshrl.u32 %v4183, 7
    %v4185 = vsub.s32 2, %v4184
    %v4186 = vrot.slane %v3810, %v4185
    %v4187 = vlaneseq
    %v4188 = vshrl.u32 %v4187, 7
    %v4189 = vsub.s32 3, %v4188
    %v4190 = vrot.slane %v3810, %v4189
    %v4191 = vlaneseq
    %v4192 = vshrl.u32 %v4191, 7
    %v4193 = vsub.s32 4, %v4192
    %v4194 = vrot.slane %v3810, %v4193
    %v4195 = vlaneseq
    %v4196 = vshrl.u32 %v4195, 7
    %v4197 = vsub.s32 5, %v4196
    %v4198 = vrot.slane %v3810, %v4197
    %v4199 = vlaneseq
    %v4200 = vshrl.u32 %v4199, 7
    %v4201 = vsub.s32 6, %v4200
    %v4202 = vrot.slane %v3810, %v4201
    %v4203 = vlaneseq
    %v4204 = vshrl.u32 %v4203, 7
    %v4205 = vsub.s32 7, %v4204
    %v4206 = vrot.slane %v3810, %v4205
    %v4207 = vlaneseq
    %v4208 = vshrl.u32 %v4207, 7
    %v4209 = vsub.s32 0, %v4208
    %v4210 = vrot.slane %v3812, %v4209
    %v4211 = vlaneseq
    %v4212 = vshrl.u32 %v4211, 7
    %v4213 = vsub.s32 1, %v4212
    %v4214 = vrot.slane %v3812, %v4213
    %v4215 = vlaneseq
    %v4216 = vshrl.u32 %v4215, 7
    %v4217 = vsub.s32 2, %v4216
    %v4218 = vrot.slane %v3812, %v4217
    %v4219 = vlaneseq
    %v4220 = vshrl.u32 %v4219, 7
    %v4221 = vsub.s32 3, %v4220
    %v4222 = vrot.slane %v3812, %v4221
    %v4223 = vlaneseq
    %v4224 = vshrl.u32 %v4223, 7
    %v4225 = vsub.s32 4, %v4224
    %v4226 = vrot.slane %v3812, %v4225
    %v4227 = vlaneseq
    %v4228 = vshrl.u32 %v4227, 7
    %v4229 = vsub.s32 5, %v4228
    %v4230 = vrot.slane %v3812, %v4229
    %v4231 = vlaneseq
    %v4232 = vshrl.u32 %v4231, 7
    %v4233 = vsub.s32 6, %v4232
    %v4234 = vrot.slane %v3812, %v4233
    %v4235 = vlaneseq
    %v4236 = vshrl.u32 %v4235, 7
    %v4237 = vsub.s32 7, %v4236
    %v4238 = vrot.slane %v3812, %v4237
    %v4239 = vlaneseq
    %v4240 = vshrl.u32 %v4239, 7
    %v4241 = vsub.s32 0, %v4240
    %v4242 = vrot.slane %v3814, %v4241
    %v4243 = vlaneseq
    %v4244 = vshrl.u32 %v4243, 7
    %v4245 = vsub.s32 1, %v4244
    %v4246 = vrot.slane %v3814, %v4245
    %v4247 = vlaneseq
    %v4248 = vshrl.u32 %v4247, 7
    %v4249 = vsub.s32 2, %v4248
    %v4250 = vrot.slane %v3814, %v4249
    %v4251 = vlaneseq
    %v4252 = vshrl.u32 %v4251, 7
    %v4253 = vsub.s32 3, %v4252
    %v4254 = vrot.slane %v3814, %v4253
    %v4255 = vlaneseq
    %v4256 = vshrl.u32 %v4255, 7
    %v4257 = vsub.s32 4, %v4256
    %v4258 = vrot.slane %v3814, %v4257
    %v4259 = vlaneseq
    %v4260 = vshrl.u32 %v4259, 7
    %v4261 = vsub.s32 5, %v4260
    %v4262 = vrot.slane %v3814, %v4261
    %v4263 = vlaneseq
    %v4264 = vshrl.u32 %v4263, 7
    %v4265 = vsub.s32 6, %v4264
    %v4266 = vrot.slane %v3814, %v4265
    %v4267 = vlaneseq
    %v4268 = vshrl.u32 %v4267, 7
    %v4269 = vsub.s32 7, %v4268
    %v4270 = vrot.slane %v3814, %v4269
    %v4271 = vlaneseq
    %v4272 = vshrl.u32 %v4271, 7
    %v4273 = vsub.s32 0, %v4272
    %v4274 = vrot.slane %v3816, %v4273
    %v4275 = vlaneseq
    %v4276 = vshrl.u32 %v4275, 7
    %v4277 = vsub.s32 1, %v4276
    %v4278 = vrot.slane %v3816, %v4277
    %v4279 = vlaneseq
    %v4280 = vshrl.u32 %v4279, 7
    %v4281 = vsub.s32 2, %v4280
    %v4282 = vrot.slane %v3816, %v4281
    %v4283 = vlaneseq
    %v4284 = vshrl.u32 %v4283, 7
    %v4285 = vsub.s32 3, %v4284
    %v4286 = vrot.slane %v3816, %v4285
    %v4287 = vlaneseq
    %v4288 = vshrl.u32 %v4287, 7
    %v4289 = vsub.s32 4, %v4288
    %v4290 = vrot.slane %v3816, %v4289
    %v4291 = vlaneseq
    %v4292 = vshrl.u32 %v4291, 7
    %v4293 = vsub.s32 5, %v4292
    %v4294 = vrot.slane %v3816, %v4293
    %v4295 = vlaneseq
    %v4296 = vshrl.u32 %v4295, 7
    %v4297 = vsub.s32 6, %v4296
    %v4298 = vrot.slane %v3816, %v4297
    %v4299 = vlaneseq
    %v4300 = vshrl.u32 %v4299, 7
    %v4301 = vsub.s32 7, %v4300
    %v4302 = vrot.slane %v3816, %v4301
    %v4303 = vlaneseq
    %v4304 = vshrl.u32 %v4303, 7
    %v4305 = vsub.s32 0, %v4304
    %v4306 = vrot.slane %v3818, %v4305
    %v4307 = vlaneseq
    %v4308 = vshrl.u32 %v4307, 7
    %v4309 = vsub.s32 1, %v4308
    %v4310 = vrot.slane %v3818, %v4309
    %v4311 = vlaneseq
    %v4312 = vshrl.u32 %v4311, 7
    %v4313 = vsub.s32 2, %v4312
    %v4314 = vrot.slane %v3818, %v4313
    %v4315 = vlaneseq
    %v4316 = vshrl.u32 %v4315, 7
    %v4317 = vsub.s32 3, %v4316
    %v4318 = vrot.slane %v3818, %v4317
    %v4319 = vlaneseq
    %v4320 = vshrl.u32 %v4319, 7
    %v4321 = vsub.s32 4, %v4320
    %v4322 = vrot.slane %v3818, %v4321
    %v4323 = vlaneseq
    %v4324 = vshrl.u32 %v4323, 7
    %v4325 = vsub.s32 5, %v4324
    %v4326 = vrot.slane %v3818, %v4325
    %v4327 = vlaneseq
    %v4328 = vshrl.u32 %v4327, 7
    %v4329 = vsub.s32 6, %v4328
    %v4330 = vrot.slane %v3818, %v4329
    %v4331 = vlaneseq
    %v4332 = vshrl.u32 %v4331, 7
    %v4333 = vsub.s32 7, %v4332
    %v4334 = vrot.slane %v3818, %v4333
    %v4335 = vlaneseq
    %v4336 = vshrl.u32 %v4335, 7
    %v4337 = vsub.s32 0, %v4336
    %v4338 = vrot.slane %v3820, %v4337
    %v4339 = vlaneseq
    %v4340 = vshrl.u32 %v4339, 7
    %v4341 = vsub.s32 1, %v4340
    %v4342 = vrot.slane %v3820, %v4341
    %v4343 = vlaneseq
    %v4344 = vshrl.u32 %v4343, 7
    %v4345 = vsub.s32 2, %v4344
    %v4346 = vrot.slane %v3820, %v4345
    %v4347 = vlaneseq
    %v4348 = vshrl.u32 %v4347, 7
    %v4349 = vsub.s32 3, %v4348
    %v4350 = vrot.slane %v3820, %v4349
    %v4351 = vlaneseq
    %v4352 = vshrl.u32 %v4351, 7
    %v4353 = vsub.s32 4, %v4352
    %v4354 = vrot.slane %v3820, %v4353
    %v4355 = vlaneseq
    %v4356 = vshrl.u32 %v4355, 7
    %v4357 = vsub.s32 5, %v4356
    %v4358 = vrot.slane %v3820, %v4357
    %v4359 = vlaneseq
    %v4360 = vshrl.u32 %v4359, 7
    %v4361 = vsub.s32 6, %v4360
    %v4362 = vrot.slane %v3820, %v4361
    %v4363 = vlaneseq
    %v4364 = vshrl.u32 %v4363, 7
    %v4365 = vsub.s32 7, %v4364
    %v4366 = vrot.slane %v3820, %v4365
    %v4367 = vlaneseq
    %v4368 = vshrl.u32 %v4367, 7
    %v4369 = vsub.s32 0, %v4368
    %v4370 = vrot.slane %v3822, %v4369
    %v4371 = vlaneseq
    %v4372 = vshrl.u32 %v4371, 7
    %v4373 = vsub.s32 1, %v4372
    %v4374 = vrot.slane %v3822, %v4373
    %v4375 = vlaneseq
    %v4376 = vshrl.u32 %v4375, 7
    %v4377 = vsub.s32 2, %v4376
    %v4378 = vrot.slane %v3822, %v4377
    %v4379 = vlaneseq
    %v4380 = vshrl.u32 %v4379, 7
    %v4381 = vsub.s32 3, %v4380
    %v4382 = vrot.slane %v3822, %v4381
    %v4383 = vlaneseq
    %v4384 = vshrl.u32 %v4383, 7
    %v4385 = vsub.s32 4, %v4384
    %v4386 = vrot.slane %v3822, %v4385
    %v4387 = vlaneseq
    %v4388 = vshrl.u32 %v4387, 7
    %v4389 = vsub.s32 5, %v4388
    %v4390 = vrot.slane %v3822, %v4389
    %v4391 = vlaneseq
    %v4392 = vshrl.u32 %v4391, 7
    %v4393 = vsub.s32 6, %v4392
    %v4394 = vrot.slane %v3822, %v4393
    %v4395 = vlaneseq
    %v4396 = vshrl.u32 %v4395, 7
    %v4397 = vsub.s32 7, %v4396
    %v4398 = vrot.slane %v3822, %v4397
    %v4399 = vlaneseq
    %v4400 = vshrl.u32 %v4399, 7
    %v4401 = vsub.s32 0, %v4400
    %v4402 = vrot.slane %v3824, %v4401
    %v4403 = vlaneseq
    %v4404 = vshrl.u32 %v4403, 7
    %v4405 = vsub.s32 1, %v4404
    %v4406 = vrot.slane %v3824, %v4405
    %v4407 = vlaneseq
    %v4408 = vshrl.u32 %v4407, 7
    %v4409 = vsub.s32 2, %v4408
    %v4410 = vrot.slane %v3824, %v4409
    %v4411 = vlaneseq
    %v4412 = vshrl.u32 %v4411, 7
    %v4413 = vsub.s32 3, %v4412
    %v4414 = vrot.slane %v3824, %v4413
    %v4415 = vlaneseq
    %v4416 = vshrl.u32 %v4415, 7
    %v4417 = vsub.s32 4, %v4416
    %v4418 = vrot.slane %v3824, %v4417
    %v4419 = vlaneseq
    %v4420 = vshrl.u32 %v4419, 7
    %v4421 = vsub.s32 5, %v4420
    %v4422 = vrot.slane %v3824, %v4421
    %v4423 = vlaneseq
    %v4424 = vshrl.u32 %v4423, 7
    %v4425 = vsub.s32 6, %v4424
    %v4426 = vrot.slane %v3824, %v4425
    %v4427 = vlaneseq
    %v4428 = vshrl.u32 %v4427, 7
    %v4429 = vsub.s32 7, %v4428
    %v4430 = vrot.slane %v3824, %v4429
    %v4431 = vlaneseq
    %v4432 = vshrl.u32 %v4431, 7
    %v4433 = vsub.s32 0, %v4432
    %v4434 = vrot.slane %v3826, %v4433
    %v4435 = vlaneseq
    %v4436 = vshrl.u32 %v4435, 7
    %v4437 = vsub.s32 1, %v4436
    %v4438 = vrot.slane %v3826, %v4437
    %v4439 = vlaneseq
    %v4440 = vshrl.u32 %v4439, 7
    %v4441 = vsub.s32 2, %v4440
    %v4442 = vrot.slane %v3826, %v4441
    %v4443 = vlaneseq
    %v4444 = vshrl.u32 %v4443, 7
    %v4445 = vsub.s32 3, %v4444
    %v4446 = vrot.slane %v3826, %v4445
    %v4447 = vlaneseq
    %v4448 = vshrl.u32 %v4447, 7
    %v4449 = vsub.s32 4, %v4448
    %v4450 = vrot.slane %v3826, %v4449
    %v4451 = vlaneseq
    %v4452 = vshrl.u32 %v4451, 7
    %v4453 = vsub.s32 5, %v4452
    %v4454 = vrot.slane %v3826, %v4453
    %v4455 = vlaneseq
    %v4456 = vshrl.u32 %v4455, 7
    %v4457 = vsub.s32 6, %v4456
    %v4458 = vrot.slane %v3826, %v4457
    %v4459 = vlaneseq
    %v4460 = vshrl.u32 %v4459, 7
    %v4461 = vsub.s32 7, %v4460
    %v4462 = vrot.slane %v3826, %v4461
    %v4463 = vlaneseq
    %v4464 = vshrl.u32 %v4463, 7
    %v4465 = vsub.s32 0, %v4464
    %v4466 = vrot.slane %v3828, %v4465
    %v4467 = vlaneseq
    %v4468 = vshrl.u32 %v4467, 7
    %v4469 = vsub.s32 1, %v4468
    %v4470 = vrot.slane %v3828, %v4469
    %v4471 = vlaneseq
    %v4472 = vshrl.u32 %v4471, 7
    %v4473 = vsub.s32 2, %v4472
    %v4474 = vrot.slane %v3828, %v4473
    %v4475 = vlaneseq
    %v4476 = vshrl.u32 %v4475, 7
    %v4477 = vsub.s32 3, %v4476
    %v4478 = vrot.slane %v3828, %v4477
    %v4479 = vlaneseq
    %v4480 = vshrl.u32 %v4479, 7
    %v4481 = vsub.s32 4, %v4480
    %v4482 = vrot.slane %v3828, %v4481
    %v4483 = vlaneseq
    %v4484 = vshrl.u32 %v4483, 7
    %v4485 = vsub.s32 5, %v4484
    %v4486 = vrot.slane %v3828, %v4485
    %v4487 = vlaneseq
    %v4488 = vshrl.u32 %v4487, 7
    %v4489 = vsub.s32 6, %v4488
    %v4490 = vrot.slane %v3828, %v4489
    %v4491 = vlaneseq
    %v4492 = vshrl.u32 %v4491, 7
    %v4493 = vsub.s32 7, %v4492
    %v4494 = vrot.slane %v3828, %v4493
    %v4495 = vlaneseq
    %v4496 = vshrl.u32 %v4495, 7
    %v4497 = vsub.s32 0, %v4496
    %v4498 = vrot.slane %v3830, %v4497
    %v4499 = vlaneseq
    %v4500 = vshrl.u32 %v4499, 7
    %v4501 = vsub.s32 1, %v4500
    %v4502 = vrot.slane %v3830, %v4501
    %v4503 = vlaneseq
    %v4504 = vshrl.u32 %v4503, 7
    %v4505 = vsub.s32 2, %v4504
    %v4506 = vrot.slane %v3830, %v4505
    %v4507 = vlaneseq
    %v4508 = vshrl.u32 %v4507, 7
    %v4509 = vsub.s32 3, %v4508
    %v4510 = vrot.slane %v3830, %v4509
    %v4511 = vlaneseq
    %v4512 = vshrl.u32 %v4511, 7
    %v4513 = vsub.s32 4, %v4512
    %v4514 = vrot.slane %v3830, %v4513
    %v4515 = vlaneseq
    %v4516 = vshrl.u32 %v4515, 7
    %v4517 = vsub.s32 5, %v4516
    %v4518 = vrot.slane %v3830, %v4517
    %v4519 = vlaneseq
    %v4520 = vshrl.u32 %v4519, 7
    %v4521 = vsub.s32 6, %v4520
    %v4522 = vrot.slane %v3830, %v4521
    %v4523 = vlaneseq
    %v4524 = vshrl.u32 %v4523, 7
    %v4525 = vsub.s32 7, %v4524
    %v4526 = vrot.slane %v3830, %v4525
    %v4527 = vlaneseq
    %v4528 = vshrl.u32 %v4527, 7
    %v4529 = vsub.s32 0, %v4528
    %v4530 = vrot.slane %v3832, %v4529
    %v4531 = vlaneseq
    %v4532 = vshrl.u32 %v4531, 7
    %v4533 = vsub.s32 1, %v4532
    %v4534 = vrot.slane %v3832, %v4533
    %v4535 = vlaneseq
    %v4536 = vshrl.u32 %v4535, 7
    %v4537 = vsub.s32 2, %v4536
    %v4538 = vrot.slane %v3832, %v4537
    %v4539 = vlaneseq
    %v4540 = vshrl.u32 %v4539, 7
    %v4541 = vsub.s32 3, %v4540
    %v4542 = vrot.slane %v3832, %v4541
    %v4543 = vlaneseq
    %v4544 = vshrl.u32 %v4543, 7
    %v4545 = vsub.s32 4, %v4544
    %v4546 = vrot.slane %v3832, %v4545
    %v4547 = vlaneseq
    %v4548 = vshrl.u32 %v4547, 7
    %v4549 = vsub.s32 5, %v4548
    %v4550 = vrot.slane %v3832, %v4549
    %v4551 = vlaneseq
    %v4552 = vshrl.u32 %v4551, 7
    %v4553 = vsub.s32 6, %v4552
    %v4554 = vrot.slane %v3832, %v4553
    %v4555 = vlaneseq
    %v4556 = vshrl.u32 %v4555, 7
    %v4557 = vsub.s32 7, %v4556
    %v4558 = vrot.slane %v3832, %v4557
    %v4559 = vlaneseq
    %v4560 = vshrl.u32 %v4559, 7
    %v4561 = vsub.s32 0, %v4560
    %v4562 = vrot.slane %v3834, %v4561
    %v4563 = vlaneseq
    %v4564 = vshrl.u32 %v4563, 7
    %v4565 = vsub.s32 1, %v4564
    %v4566 = vrot.slane %v3834, %v4565
    %v4567 = vlaneseq
    %v4568 = vshrl.u32 %v4567, 7
    %v4569 = vsub.s32 2, %v4568
    %v4570 = vrot.slane %v3834, %v4569
    %v4571 = vlaneseq
    %v4572 = vshrl.u32 %v4571, 7
    %v4573 = vsub.s32 3, %v4572
    %v4574 = vrot.slane %v3834, %v4573
    %v4575 = vlaneseq
    %v4576 = vshrl.u32 %v4575, 7
    %v4577 = vsub.s32 4, %v4576
    %v4578 = vrot.slane %v3834, %v4577
    %v4579 = vlaneseq
    %v4580 = vshrl.u32 %v4579, 7
    %v4581 = vsub.s32 5, %v4580
    %v4582 = vrot.slane %v3834, %v4581
    %v4583 = vlaneseq
    %v4584 = vshrl.u32 %v4583, 7
    %v4585 = vsub.s32 6, %v4584
    %v4586 = vrot.slane %v3834, %v4585
    %v4587 = vlaneseq
    %v4588 = vshrl.u32 %v4587, 7
    %v4589 = vsub.s32 7, %v4588
    %v4590 = vrot.slane %v3834, %v4589
    %v4591 = vlaneseq
    %v4592 = vshrl.u32 %v4591, 7
    %v4593 = vsub.s32 0, %v4592
    %v4594 = vrot.slane %v3836, %v4593
    %v4595 = vlaneseq
    %v4596 = vshrl.u32 %v4595, 7
    %v4597 = vsub.s32 1, %v4596
    %v4598 = vrot.slane %v3836, %v4597
    %v4599 = vlaneseq
    %v4600 = vshrl.u32 %v4599, 7
    %v4601 = vsub.s32 2, %v4600
    %v4602 = vrot.slane %v3836, %v4601
    %v4603 = vlaneseq
    %v4604 = vshrl.u32 %v4603, 7
    %v4605 = vsub.s32 3, %v4604
    %v4606 = vrot.slane %v3836, %v4605
    %v4607 = vlaneseq
    %v4608 = vshrl.u32 %v4607, 7
    %v4609 = vsub.s32 4, %v4608
    %v4610 = vrot.slane %v3836, %v4609
    %v4611 = vlaneseq
    %v4612 = vshrl.u32 %v4611, 7
    %v4613 = vsub.s32 5, %v4612
    %v4614 = vrot.slane %v3836, %v4613
    %v4615 = vlaneseq
    %v4616 = vshrl.u32 %v4615, 7
    %v4617 = vsub.s32 6, %v4616
    %v4618 = vrot.slane %v3836, %v4617
    %v4619 = vlaneseq
    %v4620 = vshrl.u32 %v4619, 7
    %v4621 = vsub.s32 7, %v4620
    %v4622 = vrot.slane %v3836, %v4621
    %v4623 = vlaneseq
    %v4624 = vshrl.u32 %v4623, 7
    %v4625 = vsub.s32 0, %v4624
    %v4626 = vrot.slane %v3838, %v4625
    %v4627 = vlaneseq
    %v4628 = vshrl.u32 %v4627, 7
    %v4629 = vsub.s32 1, %v4628
    %v4630 = vrot.slane %v3838, %v4629
    %v4631 = vlaneseq
    %v4632 = vshrl.u32 %v4631, 7
    %v4633 = vsub.s32 2, %v4632
    %v4634 = vrot.slane %v3838, %v4633
    %v4635 = vlaneseq
    %v4636 = vshrl.u32 %v4635, 7
    %v4637 = vsub.s32 3, %v4636
    %v4638 = vrot.slane %v3838, %v4637
    %v4639 = vlaneseq
    %v4640 = vshrl.u32 %v4639, 7
    %v4641 = vsub.s32 4, %v4640
    %v4642 = vrot.slane %v3838, %v4641
    %v4643 = vlaneseq
    %v4644 = vshrl.u32 %v4643, 7
    %v4645 = vsub.s32 5, %v4644
    %v4646 = vrot.slane %v3838, %v4645
    %v4647 = vlaneseq
    %v4648 = vshrl.u32 %v4647, 7
    %v4649 = vsub.s32 6, %v4648
    %v4650 = vrot.slane %v3838, %v4649
    %v4651 = vlaneseq
    %v4652 = vshrl.u32 %v4651, 7
    %v4653 = vsub.s32 7, %v4652
    %v4654 = vrot.slane %v3838, %v4653
    %v4655 = vlaneseq
    %v4656 = vshrl.u32 %v4655, 7
    %v4657 = vsub.s32 0, %v4656
    %v4658 = vrot.slane %v3840, %v4657
    %v4659 = vlaneseq
    %v4660 = vshrl.u32 %v4659, 7
    %v4661 = vsub.s32 1, %v4660
    %v4662 = vrot.slane %v3840, %v4661
    %v4663 = vlaneseq
    %v4664 = vshrl.u32 %v4663, 7
    %v4665 = vsub.s32 2, %v4664
    %v4666 = vrot.slane %v3840, %v4665
    %v4667 = vlaneseq
    %v4668 = vshrl.u32 %v4667, 7
    %v4669 = vsub.s32 3, %v4668
    %v4670 = vrot.slane %v3840, %v4669
    %v4671 = vlaneseq
    %v4672 = vshrl.u32 %v4671, 7
    %v4673 = vsub.s32 4, %v4672
    %v4674 = vrot.slane %v3840, %v4673
    %v4675 = vlaneseq
    %v4676 = vshrl.u32 %v4675, 7
    %v4677 = vsub.s32 5, %v4676
    %v4678 = vrot.slane %v3840, %v4677
    %v4679 = vlaneseq
    %v4680 = vshrl.u32 %v4679, 7
    %v4681 = vsub.s32 6, %v4680
    %v4682 = vrot.slane %v3840, %v4681
    %v4683 = vlaneseq
    %v4684 = vshrl.u32 %v4683, 7
    %v4685 = vsub.s32 7, %v4684
    %v4686 = vrot.slane %v3840, %v4685
    %v4687 = vlaneseq
    %v4688 = vshrl.u32 %v4687, 7
    %v4689 = vsub.s32 0, %v4688
    %v4690 = vrot.slane %v3842, %v4689
    %v4691 = vlaneseq
    %v4692 = vshrl.u32 %v4691, 7
    %v4693 = vsub.s32 1, %v4692
    %v4694 = vrot.slane %v3842, %v4693
    %v4695 = vlaneseq
    %v4696 = vshrl.u32 %v4695, 7
    %v4697 = vsub.s32 2, %v4696
    %v4698 = vrot.slane %v3842, %v4697
    %v4699 = vlaneseq
    %v4700 = vshrl.u32 %v4699, 7
    %v4701 = vsub.s32 3, %v4700
    %v4702 = vrot.slane %v3842, %v4701
    %v4703 = vlaneseq
    %v4704 = vshrl.u32 %v4703, 7
    %v4705 = vsub.s32 4, %v4704
    %v4706 = vrot.slane %v3842, %v4705
    %v4707 = vlaneseq
    %v4708 = vshrl.u32 %v4707, 7
    %v4709 = vsub.s32 5, %v4708
    %v4710 = vrot.slane %v3842, %v4709
    %v4711 = vlaneseq
    %v4712 = vshrl.u32 %v4711, 7
    %v4713 = vsub.s32 6, %v4712
    %v4714 = vrot.slane %v3842, %v4713
    %v4715 = vlaneseq
    %v4716 = vshrl.u32 %v4715, 7
    %v4717 = vsub.s32 7, %v4716
    %v4718 = vrot.slane %v3842, %v4717
    %v4719 = vlaneseq
    %v4720 = vshrl.u32 %v4719, 7
    %v4721 = vsub.s32 0, %v4720
    %v4722 = vrot.slane %v3844, %v4721
    %v4723 = vlaneseq
    %v4724 = vshrl.u32 %v4723, 7
    %v4725 = vsub.s32 1, %v4724
    %v4726 = vrot.slane %v3844, %v4725
    %v4727 = vlaneseq
    %v4728 = vshrl.u32 %v4727, 7
    %v4729 = vsub.s32 2, %v4728
    %v4730 = vrot.slane %v3844, %v4729
    %v4731 = vlaneseq
    %v4732 = vshrl.u32 %v4731, 7
    %v4733 = vsub.s32 3, %v4732
    %v4734 = vrot.slane %v3844, %v4733
    %v4735 = vlaneseq
    %v4736 = vshrl.u32 %v4735, 7
    %v4737 = vsub.s32 4, %v4736
    %v4738 = vrot.slane %v3844, %v4737
    %v4739 = vlaneseq
    %v4740 = vshrl.u32 %v4739, 7
    %v4741 = vsub.s32 5, %v4740
    %v4742 = vrot.slane %v3844, %v4741
    %v4743 = vlaneseq
    %v4744 = vshrl.u32 %v4743, 7
    %v4745 = vsub.s32 6, %v4744
    %v4746 = vrot.slane %v3844, %v4745
    %v4747 = vlaneseq
    %v4748 = vshrl.u32 %v4747, 7
    %v4749 = vsub.s32 7, %v4748
    %v4750 = vrot.slane %v3844, %v4749
    %v4751 = vlaneseq
    %v4752 = vshrl.u32 %v4751, 7
    %v4753 = vsub.s32 0, %v4752
    %v4754 = vrot.slane %v3846, %v4753
    %v4755 = vlaneseq
    %v4756 = vshrl.u32 %v4755, 7
    %v4757 = vsub.s32 1, %v4756
    %v4758 = vrot.slane %v3846, %v4757
    %v4759 = vlaneseq
    %v4760 = vshrl.u32 %v4759, 7
    %v4761 = vsub.s32 2, %v4760
    %v4762 = vrot.slane %v3846, %v4761
    %v4763 = vlaneseq
    %v4764 = vshrl.u32 %v4763, 7
    %v4765 = vsub.s32 3, %v4764
    %v4766 = vrot.slane %v3846, %v4765
    %v4767 = vlaneseq
    %v4768 = vshrl.u32 %v4767, 7
    %v4769 = vsub.s32 4, %v4768
    %v4770 = vrot.slane %v3846, %v4769
    %v4771 = vlaneseq
    %v4772 = vshrl.u32 %v4771, 7
    %v4773 = vsub.s32 5, %v4772
    %v4774 = vrot.slane %v3846, %v4773
    %v4775 = vlaneseq
    %v4776 = vshrl.u32 %v4775, 7
    %v4777 = vsub.s32 6, %v4776
    %v4778 = vrot.slane %v3846, %v4777
    %v4779 = vlaneseq
    %v4780 = vshrl.u32 %v4779, 7
    %v4781 = vsub.s32 7, %v4780
    %v4782 = vrot.slane %v3846, %v4781
    %v4783 = vlaneseq
    %v4784 = vshrl.u32 %v4783, 7
    %v4785 = vsub.s32 0, %v4784
    %v4786 = vrot.slane %v3848, %v4785
    %v4787 = vlaneseq
    %v4788 = vshrl.u32 %v4787, 7
    %v4789 = vsub.s32 1, %v4788
    %v4790 = vrot.slane %v3848, %v4789
    %v4791 = vlaneseq
    %v4792 = vshrl.u32 %v4791, 7
    %v4793 = vsub.s32 2, %v4792
    %v4794 = vrot.slane %v3848, %v4793
    %v4795 = vlaneseq
    %v4796 = vshrl.u32 %v4795, 7
    %v4797 = vsub.s32 3, %v4796
    %v4798 = vrot.slane %v3848, %v4797
    %v4799 = vlaneseq
    %v4800 = vshrl.u32 %v4799, 7
    %v4801 = vsub.s32 4, %v4800
    %v4802 = vrot.slane %v3848, %v4801
    %v4803 = vlaneseq
    %v4804 = vshrl.u32 %v4803, 7
    %v4805 = vsub.s32 5, %v4804
    %v4806 = vrot.slane %v3848, %v4805
    %v4807 = vlaneseq
    %v4808 = vshrl.u32 %v4807, 7
    %v4809 = vsub.s32 6, %v4808
    %v4810 = vrot.slane %v3848, %v4809
    %v4811 = vlaneseq
    %v4812 = vshrl.u32 %v4811, 7
    %v4813 = vsub.s32 7, %v4812
    %v4814 = vrot.slane %v3848, %v4813
    %v4815 = vlaneseq
    %v4816 = vshrl.u32 %v4815, 7
    %v4817 = vsub.s32 0, %v4816
    %v4818 = vrot.slane %v3850, %v4817
    %v4819 = vlaneseq
    %v4820 = vshrl.u32 %v4819, 7
    %v4821 = vsub.s32 1, %v4820
    %v4822 = vrot.slane %v3850, %v4821
    %v4823 = vlaneseq
    %v4824 = vshrl.u32 %v4823, 7
    %v4825 = vsub.s32 2, %v4824
    %v4826 = vrot.slane %v3850, %v4825
    %v4827 = vlaneseq
    %v4828 = vshrl.u32 %v4827, 7
    %v4829 = vsub.s32 3, %v4828
    %v4830 = vrot.slane %v3850, %v4829
    %v4831 = vlaneseq
    %v4832 = vshrl.u32 %v4831, 7
    %v4833 = vsub.s32 4, %v4832
    %v4834 = vrot.slane %v3850, %v4833
    %v4835 = vlaneseq
    %v4836 = vshrl.u32 %v4835, 7
    %v4837 = vsub.s32 5, %v4836
    %v4838 = vrot.slane %v3850, %v4837
    %v4839 = vlaneseq
    %v4840 = vshrl.u32 %v4839, 7
    %v4841 = vsub.s32 6, %v4840
    %v4842 = vrot.slane %v3850, %v4841
    %v4843 = vlaneseq
    %v4844 = vshrl.u32 %v4843, 7
    %v4845 = vsub.s32 7, %v4844
    %v4846 = vrot.slane %v3850, %v4845
    %v4847 = vlaneseq
    %v4848 = vshrl.u32 %v4847, 7
    %v4849 = vsub.s32 0, %v4848
    %v4850 = vrot.slane %v3852, %v4849
    %v4851 = vlaneseq
    %v4852 = vshrl.u32 %v4851, 7
    %v4853 = vsub.s32 1, %v4852
    %v4854 = vrot.slane %v3852, %v4853
    %v4855 = vlaneseq
    %v4856 = vshrl.u32 %v4855, 7
    %v4857 = vsub.s32 2, %v4856
    %v4858 = vrot.slane %v3852, %v4857
    %v4859 = vlaneseq
    %v4860 = vshrl.u32 %v4859, 7
    %v4861 = vsub.s32 3, %v4860
    %v4862 = vrot.slane %v3852, %v4861
    %v4863 = vlaneseq
    %v4864 = vshrl.u32 %v4863, 7
    %v4865 = vsub.s32 4, %v4864
    %v4866 = vrot.slane %v3852, %v4865
    %v4867 = vlaneseq
    %v4868 = vshrl.u32 %v4867, 7
    %v4869 = vsub.s32 5, %v4868
    %v4870 = vrot.slane %v3852, %v4869
    %v4871 = vlaneseq
    %v4872 = vshrl.u32 %v4871, 7
    %v4873 = vsub.s32 6, %v4872
    %v4874 = vrot.slane %v3852, %v4873
    %v4875 = vlaneseq
    %v4876 = vshrl.u32 %v4875, 7
    %v4877 = vsub.s32 7, %v4876
    %v4878 = vrot.slane %v3852, %v4877
    %v4879 = vlaneseq
    %v4880 = vshrl.u32 %v4879, 7
    %v4881 = vsub.s32 0, %v4880
    %v4882 = vrot.slane %v3854, %v4881
    %v4883 = vlaneseq
    %v4884 = vshrl.u32 %v4883, 7
    %v4885 = vsub.s32 1, %v4884
    %v4886 = vrot.slane %v3854, %v4885
    %v4887 = vlaneseq
    %v4888 = vshrl.u32 %v4887, 7
    %v4889 = vsub.s32 2, %v4888
    %v4890 = vrot.slane %v3854, %v4889
    %v4891 = vlaneseq
    %v4892 = vshrl.u32 %v4891, 7
    %v4893 = vsub.s32 3, %v4892
    %v4894 = vrot.slane %v3854, %v4893
    %v4895 = vlaneseq
    %v4896 = vshrl.u32 %v4895, 7
    %v4897 = vsub.s32 4, %v4896
    %v4898 = vrot.slane %v3854, %v4897
    %v4899 = vlaneseq
    %v4900 = vshrl.u32 %v4899, 7
    %v4901 = vsub.s32 5, %v4900
    %v4902 = vrot.slane %v3854, %v4901
    %v4903 = vlaneseq
    %v4904 = vshrl.u32 %v4903, 7
    %v4905 = vsub.s32 6, %v4904
    %v4906 = vrot.slane %v3854, %v4905
    %v4907 = vlaneseq
    %v4908 = vshrl.u32 %v4907, 7
    %v4909 = vsub.s32 7, %v4908
    %v4910 = vrot.slane %v3854, %v4909
    %v4911 = vcombine.low %v3890, %v3894
    %v4912 = vcombine.low %v3898, %v3902
    %v4913 = vcombine.low %v3906, %v3910
    %v4914 = vcombine.low %v3914, %v3918
    %v4916 = vunpack.c.l.s4 1966171168
    %v4917 = vunpack.c.0.s8 %v4916
    %v4918 = vlaneseq
    %v4919 = vshrl.u32 %v4918, 7
    %v4920 = vsub.s32 %v4917, %v4919
    %v4921 = vrot.slane %v4911, %v4920
    %v4923 = vunpack.c.l.s4 1966171168
    %v4924 = vunpack.c.0.s8 %v4923
    %v4925 = vlaneseq
    %v4926 = vshrl.u32 %v4925, 7
    %v4927 = vsub.s32 %v4924, %v4926
    %v4928 = vrot.slane %v4912, %v4927
    %v4930 = vunpack.c.l.s4 1966171168
    %v4931 = vunpack.c.0.s8 %v4930
    %v4932 = vlaneseq
    %v4933 = vshrl.u32 %v4932, 7
    %v4934 = vsub.s32 %v4931, %v4933
    %v4935 = vrot.slane %v4913, %v4934
    %v4937 = vunpack.c.l.s4 1966171168
    %v4938 = vunpack.c.0.s8 %v4937
    %v4939 = vlaneseq
    %v4940 = vshrl.u32 %v4939, 7
    %v4941 = vsub.s32 %v4938, %v4940
    %v4942 = vrot.slane %v4914, %v4941
    %v4943 = vcombine.low %v4921, %v4928
    %v4944 = vcombine.low %v4935, %v4942
    %v4946 = vunpack.c.l.s4 1966171168
    %v4947 = vunpack.c.0.s8 %v4946
    %v4948 = vlaneseq
    %v4949 = vshrl.u32 %v4948, 7
    %v4950 = vsub.s32 %v4947, %v4949
    %v4951 = vrot.slane %v4943, %v4950
    %v4953 = vunpack.c.l.s4 1966171168
    %v4954 = vunpack.c.0.s8 %v4953
    %v4955 = vlaneseq
    %v4956 = vshrl.u32 %v4955, 7
    %v4957 = vsub.s32 %v4954, %v4956
    %v4958 = vrot.slane %v4944, %v4957
    %v4959 = vcombine.low %v4951, %v4958
    %v4960 = vcombine.low %v3922, %v3926
    %v4961 = vcombine.low %v3930, %v3934
    %v4962 = vcombine.low %v3938, %v3942
    %v4963 = vcombine.low %v3946, %v3950
    %v4965 = vunpack.c.l.s4 1966171168
    %v4966 = vunpack.c.0.s8 %v4965
    %v4967 = vlaneseq
    %v4968 = vshrl.u32 %v4967, 7
    %v4969 = vsub.s32 %v4966, %v4968
    %v4970 = vrot.slane %v4960, %v4969
    %v4972 = vunpack.c.l.s4 1966171168
    %v4973 = vunpack.c.0.s8 %v4972
    %v4974 = vlaneseq
    %v4975 = vshrl.u32 %v4974, 7
    %v4976 = vsub.s32 %v4973, %v4975
    %v4977 = vrot.slane %v4961, %v4976
    %v4979 = vunpack.c.l.s4 1966171168
    %v4980 = vunpack.c.0.s8 %v4979
    %v4981 = vlaneseq
    %v4982 = vshrl.u32 %v4981, 7
    %v4983 = vsub.s32 %v4980, %v4982
    %v4984 = vrot.slane %v4962, %v4983
    %v4986 = vunpack.c.l.s4 1966171168
    %v4987 = vunpack.c.0.s8 %v4986
    %v4988 = vlaneseq
    %v4989 = vshrl.u32 %v4988, 7
    %v4990 = vsub.s32 %v4987, %v4989
    %v4991 = vrot.slane %v4963, %v4990
    %v4992 = vcombine.low %v4970, %v4977
    %v4993 = vcombine.low %v4984, %v4991
    %v4995 = vunpack.c.l.s4 1966171168
    %v4996 = vunpack.c.0.s8 %v4995
    %v4997 = vlaneseq
    %v4998 = vshrl.u32 %v4997, 7
    %v4999 = vsub.s32 %v4996, %v4998
    %v5000 = vrot.slane %v4992, %v4999
    %v5002 = vunpack.c.l.s4 1966171168
    %v5003 = vunpack.c.0.s8 %v5002
    %v5004 = vlaneseq
    %v5005 = vshrl.u32 %v5004, 7
    %v5006 = vsub.s32 %v5003, %v5005
    %v5007 = vrot.slane %v4993, %v5006
    %v5008 = vcombine.low %v5000, %v5007
    %v5009 = vcombine.low %v3954, %v3958
    %v5010 = vcombine.low %v3962, %v3966
    %v5011 = vcombine.low %v3970, %v3974
    %v5012 = vcombine.low %v3978, %v3982
    %v5014 = vunpack.c.l.s4 1966171168
    %v5015 = vunpack.c.0.s8 %v5014
    %v5016 = vlaneseq
    %v5017 = vshrl.u32 %v5016, 7
    %v5018 = vsub.s32 %v5015, %v5017
    %v5019 = vrot.slane %v5009, %v5018
    %v5021 = vunpack.c.l.s4 1966171168
    %v5022 = vunpack.c.0.s8 %v5021
    %v5023 = vlaneseq
    %v5024 = vshrl.u32 %v5023, 7
    %v5025 = vsub.s32 %v5022, %v5024
    %v5026 = vrot.slane %v5010, %v5025
    %v5028 = vunpack.c.l.s4 1966171168
    %v5029 = vunpack.c.0.s8 %v5028
    %v5030 = vlaneseq
    %v5031 = vshrl.u32 %v5030, 7
    %v5032 = vsub.s32 %v5029, %v5031
    %v5033 = vrot.slane %v5011, %v5032
    %v5035 = vunpack.c.l.s4 1966171168
    %v5036 = vunpack.c.0.s8 %v5035
    %v5037 = vlaneseq
    %v5038 = vshrl.u32 %v5037, 7
    %v5039 = vsub.s32 %v5036, %v5038
    %v5040 = vrot.slane %v5012, %v5039
    %v5041 = vcombine.low %v5019, %v5026
    %v5042 = vcombine.low %v5033, %v5040
    %v5044 = vunpack.c.l.s4 1966171168
    %v5045 = vunpack.c.0.s8 %v5044
    %v5046 = vlaneseq
    %v5047 = vshrl.u32 %v5046, 7
    %v5048 = vsub.s32 %v5045, %v5047
    %v5049 = vrot.slane %v5041, %v5048
    %v5051 = vunpack.c.l.s4 1966171168
    %v5052 = vunpack.c.0.s8 %v5051
    %v5053 = vlaneseq
    %v5054 = vshrl.u32 %v5053, 7
    %v5055 = vsub.s32 %v5052, %v5054
    %v5056 = vrot.slane %v5042, %v5055
    %v5057 = vcombine.low %v5049, %v5056
    %v5058 = vcombine.low %v3986, %v3990
    %v5059 = vcombine.low %v3994, %v3998
    %v5060 = vcombine.low %v4002, %v4006
    %v5061 = vcombine.low %v4010, %v4014
    %v5063 = vunpack.c.l.s4 1966171168
    %v5064 = vunpack.c.0.s8 %v5063
    %v5065 = vlaneseq
    %v5066 = vshrl.u32 %v5065, 7
    %v5067 = vsub.s32 %v5064, %v5066
    %v5068 = vrot.slane %v5058, %v5067
    %v5070 = vunpack.c.l.s4 1966171168
    %v5071 = vunpack.c.0.s8 %v5070
    %v5072 = vlaneseq
    %v5073 = vshrl.u32 %v5072, 7
    %v5074 = vsub.s32 %v5071, %v5073
    %v5075 = vrot.slane %v5059, %v5074
    %v5077 = vunpack.c.l.s4 1966171168
    %v5078 = vunpack.c.0.s8 %v5077
    %v5079 = vlaneseq
    %v5080 = vshrl.u32 %v5079, 7
    %v5081 = vsub.s32 %v5078, %v5080
    %v5082 = vrot.slane %v5060, %v5081
    %v5084 = vunpack.c.l.s4 1966171168
    %v5085 = vunpack.c.0.s8 %v5084
    %v5086 = vlaneseq
    %v5087 = vshrl.u32 %v5086, 7
    %v5088 = vsub.s32 %v5085, %v5087
    %v5089 = vrot.slane %v5061, %v5088
    %v5090 = vcombine.low %v5068, %v5075
    %v5091 = vcombine.low %v5082, %v5089
    %v5093 = vunpack.c.l.s4 1966171168
    %v5094 = vunpack.c.0.s8 %v5093
    %v5095 = vlaneseq
    %v5096 = vshrl.u32 %v5095, 7
    %v5097 = vsub.s32 %v5094, %v5096
    %v5098 = vrot.slane %v5090, %v5097
    %v5100 = vunpack.c.l.s4 1966171168
    %v5101 = vunpack.c.0.s8 %v5100
    %v5102 = vlaneseq
    %v5103 = vshrl.u32 %v5102, 7
    %v5104 = vsub.s32 %v5101, %v5103
    %v5105 = vrot.slane %v5091, %v5104
    %v5106 = vcombine.low %v5098, %v5105
    %v5107 = vcombine.low %v4018, %v4022
    %v5108 = vcombine.low %v4026, %v4030
    %v5109 = vcombine.low %v4034, %v4038
    %v5110 = vcombine.low %v4042, %v4046
    %v5112 = vunpack.c.l.s4 1966171168
    %v5113 = vunpack.c.0.s8 %v5112
    %v5114 = vlaneseq
    %v5115 = vshrl.u32 %v5114, 7
    %v5116 = vsub.s32 %v5113, %v5115
    %v5117 = vrot.slane %v5107, %v5116
    %v5119 = vunpack.c.l.s4 1966171168
    %v5120 = vunpack.c.0.s8 %v5119
    %v5121 = vlaneseq
    %v5122 = vshrl.u32 %v5121, 7
    %v5123 = vsub.s32 %v5120, %v5122
    %v5124 = vrot.slane %v5108, %v5123
    %v5126 = vunpack.c.l.s4 1966171168
    %v5127 = vunpack.c.0.s8 %v5126
    %v5128 = vlaneseq
    %v5129 = vshrl.u32 %v5128, 7
    %v5130 = vsub.s32 %v5127, %v5129
    %v5131 = vrot.slane %v5109, %v5130
    %v5133 = vunpack.c.l.s4 1966171168
    %v5134 = vunpack.c.0.s8 %v5133
    %v5135 = vlaneseq
    %v5136 = vshrl.u32 %v5135, 7
    %v5137 = vsub.s32 %v5134, %v5136
    %v5138 = vrot.slane %v5110, %v5137
    %v5139 = vcombine.low %v5117, %v5124
    %v5140 = vcombine.low %v5131, %v5138
    %v5142 = vunpack.c.l.s4 1966171168
    %v5143 = vunpack.c.0.s8 %v5142
    %v5144 = vlaneseq
    %v5145 = vshrl.u32 %v5144, 7
    %v5146 = vsub.s32 %v5143, %v5145
    %v5147 = vrot.slane %v5139, %v5146
    %v5149 = vunpack.c.l.s4 1966171168
    %v5150 = vunpack.c.0.s8 %v5149
    %v5151 = vlaneseq
    %v5152 = vshrl.u32 %v5151, 7
    %v5153 = vsub.s32 %v5150, %v5152
    %v5154 = vrot.slane %v5140, %v5153
    %v5155 = vcombine.low %v5147, %v5154
    %v5156 = vcombine.low %v4050, %v4054
    %v5157 = vcombine.low %v4058, %v4062
    %v5158 = vcombine.low %v4066, %v4070
    %v5159 = vcombine.low %v4074, %v4078
    %v5161 = vunpack.c.l.s4 1966171168
    %v5162 = vunpack.c.0.s8 %v5161
    %v5163 = vlaneseq
    %v5164 = vshrl.u32 %v5163, 7
    %v5165 = vsub.s32 %v5162, %v5164
    %v5166 = vrot.slane %v5156, %v5165
    %v5168 = vunpack.c.l.s4 1966171168
    %v5169 = vunpack.c.0.s8 %v5168
    %v5170 = vlaneseq
    %v5171 = vshrl.u32 %v5170, 7
    %v5172 = vsub.s32 %v5169, %v5171
    %v5173 = vrot.slane %v5157, %v5172
    %v5175 = vunpack.c.l.s4 1966171168
    %v5176 = vunpack.c.0.s8 %v5175
    %v5177 = vlaneseq
    %v5178 = vshrl.u32 %v5177, 7
    %v5179 = vsub.s32 %v5176, %v5178
    %v5180 = vrot.slane %v5158, %v5179
    %v5182 = vunpack.c.l.s4 1966171168
    %v5183 = vunpack.c.0.s8 %v5182
    %v5184 = vlaneseq
    %v5185 = vshrl.u32 %v5184, 7
    %v5186 = vsub.s32 %v5183, %v5185
    %v5187 = vrot.slane %v5159, %v5186
    %v5188 = vcombine.low %v5166, %v5173
    %v5189 = vcombine.low %v5180, %v5187
    %v5191 = vunpack.c.l.s4 1966171168
    %v5192 = vunpack.c.0.s8 %v5191
    %v5193 = vlaneseq
    %v5194 = vshrl.u32 %v5193, 7
    %v5195 = vsub.s32 %v5192, %v5194
    %v5196 = vrot.slane %v5188, %v5195
    %v5198 = vunpack.c.l.s4 1966171168
    %v5199 = vunpack.c.0.s8 %v5198
    %v5200 = vlaneseq
    %v5201 = vshrl.u32 %v5200, 7
    %v5202 = vsub.s32 %v5199, %v5201
    %v5203 = vrot.slane %v5189, %v5202
    %v5204 = vcombine.low %v5196, %v5203
    %v5205 = vcombine.low %v4082, %v4086
    %v5206 = vcombine.low %v4090, %v4094
    %v5207 = vcombine.low %v4098, %v4102
    %v5208 = vcombine.low %v4106, %v4110
    %v5210 = vunpack.c.l.s4 1966171168
    %v5211 = vunpack.c.0.s8 %v5210
    %v5212 = vlaneseq
    %v5213 = vshrl.u32 %v5212, 7
    %v5214 = vsub.s32 %v5211, %v5213
    %v5215 = vrot.slane %v5205, %v5214
    %v5217 = vunpack.c.l.s4 1966171168
    %v5218 = vunpack.c.0.s8 %v5217
    %v5219 = vlaneseq
    %v5220 = vshrl.u32 %v5219, 7
    %v5221 = vsub.s32 %v5218, %v5220
    %v5222 = vrot.slane %v5206, %v5221
    %v5224 = vunpack.c.l.s4 1966171168
    %v5225 = vunpack.c.0.s8 %v5224
    %v5226 = vlaneseq
    %v5227 = vshrl.u32 %v5226, 7
    %v5228 = vsub.s32 %v5225, %v5227
    %v5229 = vrot.slane %v5207, %v5228
    %v5231 = vunpack.c.l.s4 1966171168
    %v5232 = vunpack.c.0.s8 %v5231
    %v5233 = vlaneseq
    %v5234 = vshrl.u32 %v5233, 7
    %v5235 = vsub.s32 %v5232, %v5234
    %v5236 = vrot.slane %v5208, %v5235
    %v5237 = vcombine.low %v5215, %v5222
    %v5238 = vcombine.low %v5229, %v5236
    %v5240 = vunpack.c.l.s4 1966171168
    %v5241 = vunpack.c.0.s8 %v5240
    %v5242 = vlaneseq
    %v5243 = vshrl.u32 %v5242, 7
    %v5244 = vsub.s32 %v5241, %v5243
    %v5245 = vrot.slane %v5237, %v5244
    %v5247 = vunpack.c.l.s4 1966171168
    %v5248 = vunpack.c.0.s8 %v5247
    %v5249 = vlaneseq
    %v5250 = vshrl.u32 %v5249, 7
    %v5251 = vsub.s32 %v5248, %v5250
    %v5252 = vrot.slane %v5238, %v5251
    %v5253 = vcombine.low %v5245, %v5252
    %v5254 = vcombine.low %v4114, %v4118
    %v5255 = vcombine.low %v4122, %v4126
    %v5256 = vcombine.low %v4130, %v4134
    %v5257 = vcombine.low %v4138, %v4142
    %v5259 = vunpack.c.l.s4 1966171168
    %v5260 = vunpack.c.0.s8 %v5259
    %v5261 = vlaneseq
    %v5262 = vshrl.u32 %v5261, 7
    %v5263 = vsub.s32 %v5260, %v5262
    %v5264 = vrot.slane %v5254, %v5263
    %v5266 = vunpack.c.l.s4 1966171168
    %v5267 = vunpack.c.0.s8 %v5266
    %v5268 = vlaneseq
    %v5269 = vshrl.u32 %v5268, 7
    %v5270 = vsub.s32 %v5267, %v5269
    %v5271 = vrot.slane %v5255, %v5270
    %v5273 = vunpack.c.l.s4 1966171168
    %v5274 = vunpack.c.0.s8 %v5273
    %v5275 = vlaneseq
    %v5276 = vshrl.u32 %v5275, 7
    %v5277 = vsub.s32 %v5274, %v5276
    %v5278 = vrot.slane %v5256, %v5277
    %v5280 = vunpack.c.l.s4 1966171168
    %v5281 = vunpack.c.0.s8 %v5280
    %v5282 = vlaneseq
    %v5283 = vshrl.u32 %v5282, 7
    %v5284 = vsub.s32 %v5281, %v5283
    %v5285 = vrot.slane %v5257, %v5284
    %v5286 = vcombine.low %v5264, %v5271
    %v5287 = vcombine.low %v5278, %v5285
    %v5289 = vunpack.c.l.s4 1966171168
    %v5290 = vunpack.c.0.s8 %v5289
    %v5291 = vlaneseq
    %v5292 = vshrl.u32 %v5291, 7
    %v5293 = vsub.s32 %v5290, %v5292
    %v5294 = vrot.slane %v5286, %v5293
    %v5296 = vunpack.c.l.s4 1966171168
    %v5297 = vunpack.c.0.s8 %v5296
    %v5298 = vlaneseq
    %v5299 = vshrl.u32 %v5298, 7
    %v5300 = vsub.s32 %v5297, %v5299
    %v5301 = vrot.slane %v5287, %v5300
    %v5302 = vcombine.low %v5294, %v5301
    %v5303 = vcombine.low %v4146, %v4150
    %v5304 = vcombine.low %v4154, %v4158
    %v5305 = vcombine.low %v4162, %v4166
    %v5306 = vcombine.low %v4170, %v4174
    %v5308 = vunpack.c.l.s4 1966171168
    %v5309 = vunpack.c.0.s8 %v5308
    %v5310 = vlaneseq
    %v5311 = vshrl.u32 %v5310, 7
    %v5312 = vsub.s32 %v5309, %v5311
    %v5313 = vrot.slane %v5303, %v5312
    %v5315 = vunpack.c.l.s4 1966171168
    %v5316 = vunpack.c.0.s8 %v5315
    %v5317 = vlaneseq
    %v5318 = vshrl.u32 %v5317, 7
    %v5319 = vsub.s32 %v5316, %v5318
    %v5320 = vrot.slane %v5304, %v5319
    %v5322 = vunpack.c.l.s4 1966171168
    %v5323 = vunpack.c.0.s8 %v5322
    %v5324 = vlaneseq
    %v5325 = vshrl.u32 %v5324, 7
    %v5326 = vsub.s32 %v5323, %v5325
    %v5327 = vrot.slane %v5305, %v5326
    %v5329 = vunpack.c.l.s4 1966171168
    %v5330 = vunpack.c.0.s8 %v5329
    %v5331 = vlaneseq
    %v5332 = vshrl.u32 %v5331, 7
    %v5333 = vsub.s32 %v5330, %v5332
    %v5334 = vrot.slane %v5306, %v5333
    %v5335 = vcombine.low %v5313, %v5320
    %v5336 = vcombine.low %v5327, %v5334
    %v5338 = vunpack.c.l.s4 1966171168
    %v5339 = vunpack.c.0.s8 %v5338
    %v5340 = vlaneseq
    %v5341 = vshrl.u32 %v5340, 7
    %v5342 = vsub.s32 %v5339, %v5341
    %v5343 = vrot.slane %v5335, %v5342
    %v5345 = vunpack.c.l.s4 1966171168
    %v5346 = vunpack.c.0.s8 %v5345
    %v5347 = vlaneseq
    %v5348 = vshrl.u32 %v5347, 7
    %v5349 = vsub.s32 %v5346, %v5348
    %v5350 = vrot.slane %v5336, %v5349
    %v5351 = vcombine.low %v5343, %v5350
    %v5352 = vcombine.low %v4178, %v4182
    %v5353 = vcombine.low %v4186, %v4190
    %v5354 = vcombine.low %v4194, %v4198
    %v5355 = vcombine.low %v4202, %v4206
    %v5357 = vunpack.c.l.s4 1966171168
    %v5358 = vunpack.c.0.s8 %v5357
    %v5359 = vlaneseq
    %v5360 = vshrl.u32 %v5359, 7
    %v5361 = vsub.s32 %v5358, %v5360
    %v5362 = vrot.slane %v5352, %v5361
    %v5364 = vunpack.c.l.s4 1966171168
    %v5365 = vunpack.c.0.s8 %v5364
    %v5366 = vlaneseq
    %v5367 = vshrl.u32 %v5366, 7
    %v5368 = vsub.s32 %v5365, %v5367
    %v5369 = vrot.slane %v5353, %v5368
    %v5371 = vunpack.c.l.s4 1966171168
    %v5372 = vunpack.c.0.s8 %v5371
    %v5373 = vlaneseq
    %v5374 = vshrl.u32 %v5373, 7
    %v5375 = vsub.s32 %v5372, %v5374
    %v5376 = vrot.slane %v5354, %v5375
    %v5378 = vunpack.c.l.s4 1966171168
    %v5379 = vunpack.c.0.s8 %v5378
    %v5380 = vlaneseq
    %v5381 = vshrl.u32 %v5380, 7
    %v5382 = vsub.s32 %v5379, %v5381
    %v5383 = vrot.slane %v5355, %v5382
    %v5384 = vcombine.low %v5362, %v5369
    %v5385 = vcombine.low %v5376, %v5383
    %v5387 = vunpack.c.l.s4 1966171168
    %v5388 = vunpack.c.0.s8 %v5387
    %v5389 = vlaneseq
    %v5390 = vshrl.u32 %v5389, 7
    %v5391 = vsub.s32 %v5388, %v5390
    %v5392 = vrot.slane %v5384, %v5391
    %v5394 = vunpack.c.l.s4 1966171168
    %v5395 = vunpack.c.0.s8 %v5394
    %v5396 = vlaneseq
    %v5397 = vshrl.u32 %v5396, 7
    %v5398 = vsub.s32 %v5395, %v5397
    %v5399 = vrot.slane %v5385, %v5398
    %v5400 = vcombine.low %v5392, %v5399
    %v5401 = vcombine.low %v4210, %v4214
    %v5402 = vcombine.low %v4218, %v4222
    %v5403 = vcombine.low %v4226, %v4230
    %v5404 = vcombine.low %v4234, %v4238
    %v5406 = vunpack.c.l.s4 1966171168
    %v5407 = vunpack.c.0.s8 %v5406
    %v5408 = vlaneseq
    %v5409 = vshrl.u32 %v5408, 7
    %v5410 = vsub.s32 %v5407, %v5409
    %v5411 = vrot.slane %v5401, %v5410
    %v5413 = vunpack.c.l.s4 1966171168
    %v5414 = vunpack.c.0.s8 %v5413
    %v5415 = vlaneseq
    %v5416 = vshrl.u32 %v5415, 7
    %v5417 = vsub.s32 %v5414, %v5416
    %v5418 = vrot.slane %v5402, %v5417
    %v5420 = vunpack.c.l.s4 1966171168
    %v5421 = vunpack.c.0.s8 %v5420
    %v5422 = vlaneseq
    %v5423 = vshrl.u32 %v5422, 7
    %v5424 = vsub.s32 %v5421, %v5423
    %v5425 = vrot.slane %v5403, %v5424
    %v5427 = vunpack.c.l.s4 1966171168
    %v5428 = vunpack.c.0.s8 %v5427
    %v5429 = vlaneseq
    %v5430 = vshrl.u32 %v5429, 7
    %v5431 = vsub.s32 %v5428, %v5430
    %v5432 = vrot.slane %v5404, %v5431
    %v5433 = vcombine.low %v5411, %v5418
    %v5434 = vcombine.low %v5425, %v5432
    %v5436 = vunpack.c.l.s4 1966171168
    %v5437 = vunpack.c.0.s8 %v5436
    %v5438 = vlaneseq
    %v5439 = vshrl.u32 %v5438, 7
    %v5440 = vsub.s32 %v5437, %v5439
    %v5441 = vrot.slane %v5433, %v5440
    %v5443 = vunpack.c.l.s4 1966171168
    %v5444 = vunpack.c.0.s8 %v5443
    %v5445 = vlaneseq
    %v5446 = vshrl.u32 %v5445, 7
    %v5447 = vsub.s32 %v5444, %v5446
    %v5448 = vrot.slane %v5434, %v5447
    %v5449 = vcombine.low %v5441, %v5448
    %v5450 = vcombine.low %v4242, %v4246
    %v5451 = vcombine.low %v4250, %v4254
    %v5452 = vcombine.low %v4258, %v4262
    %v5453 = vcombine.low %v4266, %v4270
    %v5455 = vunpack.c.l.s4 1966171168
    %v5456 = vunpack.c.0.s8 %v5455
    %v5457 = vlaneseq
    %v5458 = vshrl.u32 %v5457, 7
    %v5459 = vsub.s32 %v5456, %v5458
    %v5460 = vrot.slane %v5450, %v5459
    %v5462 = vunpack.c.l.s4 1966171168
    %v5463 = vunpack.c.0.s8 %v5462
    %v5464 = vlaneseq
    %v5465 = vshrl.u32 %v5464, 7
    %v5466 = vsub.s32 %v5463, %v5465
    %v5467 = vrot.slane %v5451, %v5466
    %v5469 = vunpack.c.l.s4 1966171168
    %v5470 = vunpack.c.0.s8 %v5469
    %v5471 = vlaneseq
    %v5472 = vshrl.u32 %v5471, 7
    %v5473 = vsub.s32 %v5470, %v5472
    %v5474 = vrot.slane %v5452, %v5473
    %v5476 = vunpack.c.l.s4 1966171168
    %v5477 = vunpack.c.0.s8 %v5476
    %v5478 = vlaneseq
    %v5479 = vshrl.u32 %v5478, 7
    %v5480 = vsub.s32 %v5477, %v5479
    %v5481 = vrot.slane %v5453, %v5480
    %v5482 = vcombine.low %v5460, %v5467
    %v5483 = vcombine.low %v5474, %v5481
    %v5485 = vunpack.c.l.s4 1966171168
    %v5486 = vunpack.c.0.s8 %v5485
    %v5487 = vlaneseq
    %v5488 = vshrl.u32 %v5487, 7
    %v5489 = vsub.s32 %v5486, %v5488
    %v5490 = vrot.slane %v5482, %v5489
    %v5492 = vunpack.c.l.s4 1966171168
    %v5493 = vunpack.c.0.s8 %v5492
    %v5494 = vlaneseq
    %v5495 = vshrl.u32 %v5494, 7
    %v5496 = vsub.s32 %v5493, %v5495
    %v5497 = vrot.slane %v5483, %v5496
    %v5498 = vcombine.low %v5490, %v5497
    %v5499 = vcombine.low %v4274, %v4278
    %v5500 = vcombine.low %v4282, %v4286
    %v5501 = vcombine.low %v4290, %v4294
    %v5502 = vcombine.low %v4298, %v4302
    %v5504 = vunpack.c.l.s4 1966171168
    %v5505 = vunpack.c.0.s8 %v5504
    %v5506 = vlaneseq
    %v5507 = vshrl.u32 %v5506, 7
    %v5508 = vsub.s32 %v5505, %v5507
    %v5509 = vrot.slane %v5499, %v5508
    %v5511 = vunpack.c.l.s4 1966171168
    %v5512 = vunpack.c.0.s8 %v5511
    %v5513 = vlaneseq
    %v5514 = vshrl.u32 %v5513, 7
    %v5515 = vsub.s32 %v5512, %v5514
    %v5516 = vrot.slane %v5500, %v5515
    %v5518 = vunpack.c.l.s4 1966171168
    %v5519 = vunpack.c.0.s8 %v5518
    %v5520 = vlaneseq
    %v5521 = vshrl.u32 %v5520, 7
    %v5522 = vsub.s32 %v5519, %v5521
    %v5523 = vrot.slane %v5501, %v5522
    %v5525 = vunpack.c.l.s4 1966171168
    %v5526 = vunpack.c.0.s8 %v5525
    %v5527 = vlaneseq
    %v5528 = vshrl.u32 %v5527, 7
    %v5529 = vsub.s32 %v5526, %v5528
    %v5530 = vrot.slane %v5502, %v5529
    %v5531 = vcombine.low %v5509, %v5516
    %v5532 = vcombine.low %v5523, %v5530
    %v5534 = vunpack.c.l.s4 1966171168
    %v5535 = vunpack.c.0.s8 %v5534
    %v5536 = vlaneseq
    %v5537 = vshrl.u32 %v5536, 7
    %v5538 = vsub.s32 %v5535, %v5537
    %v5539 = vrot.slane %v5531, %v5538
    %v5541 = vunpack.c.l.s4 1966171168
    %v5542 = vunpack.c.0.s8 %v5541
    %v5543 = vlaneseq
    %v5544 = vshrl.u32 %v5543, 7
    %v5545 = vsub.s32 %v5542, %v5544
    %v5546 = vrot.slane %v5532, %v5545
    %v5547 = vcombine.low %v5539, %v5546
    %v5548 = vcombine.low %v4306, %v4310
    %v5549 = vcombine.low %v4314, %v4318
    %v5550 = vcombine.low %v4322, %v4326
    %v5551 = vcombine.low %v4330, %v4334
    %v5553 = vunpack.c.l.s4 1966171168
    %v5554 = vunpack.c.0.s8 %v5553
    %v5555 = vlaneseq
    %v5556 = vshrl.u32 %v5555, 7
    %v5557 = vsub.s32 %v5554, %v5556
    %v5558 = vrot.slane %v5548, %v5557
    %v5560 = vunpack.c.l.s4 1966171168
    %v5561 = vunpack.c.0.s8 %v5560
    %v5562 = vlaneseq
    %v5563 = vshrl.u32 %v5562, 7
    %v5564 = vsub.s32 %v5561, %v5563
    %v5565 = vrot.slane %v5549, %v5564
    %v5567 = vunpack.c.l.s4 1966171168
    %v5568 = vunpack.c.0.s8 %v5567
    %v5569 = vlaneseq
    %v5570 = vshrl.u32 %v5569, 7
    %v5571 = vsub.s32 %v5568, %v5570
    %v5572 = vrot.slane %v5550, %v5571
    %v5574 = vunpack.c.l.s4 1966171168
    %v5575 = vunpack.c.0.s8 %v5574
    %v5576 = vlaneseq
    %v5577 = vshrl.u32 %v5576, 7
    %v5578 = vsub.s32 %v5575, %v5577
    %v5579 = vrot.slane %v5551, %v5578
    %v5580 = vcombine.low %v5558, %v5565
    %v5581 = vcombine.low %v5572, %v5579
    %v5583 = vunpack.c.l.s4 1966171168
    %v5584 = vunpack.c.0.s8 %v5583
    %v5585 = vlaneseq
    %v5586 = vshrl.u32 %v5585, 7
    %v5587 = vsub.s32 %v5584, %v5586
    %v5588 = vrot.slane %v5580, %v5587
    %v5590 = vunpack.c.l.s4 1966171168
    %v5591 = vunpack.c.0.s8 %v5590
    %v5592 = vlaneseq
    %v5593 = vshrl.u32 %v5592, 7
    %v5594 = vsub.s32 %v5591, %v5593
    %v5595 = vrot.slane %v5581, %v5594
    %v5596 = vcombine.low %v5588, %v5595
    %v5597 = vcombine.low %v4338, %v4342
    %v5598 = vcombine.low %v4346, %v4350
    %v5599 = vcombine.low %v4354, %v4358
    %v5600 = vcombine.low %v4362, %v4366
    %v5602 = vunpack.c.l.s4 1966171168
    %v5603 = vunpack.c.0.s8 %v5602
    %v5604 = vlaneseq
    %v5605 = vshrl.u32 %v5604, 7
    %v5606 = vsub.s32 %v5603, %v5605
    %v5607 = vrot.slane %v5597, %v5606
    %v5609 = vunpack.c.l.s4 1966171168
    %v5610 = vunpack.c.0.s8 %v5609
    %v5611 = vlaneseq
    %v5612 = vshrl.u32 %v5611, 7
    %v5613 = vsub.s32 %v5610, %v5612
    %v5614 = vrot.slane %v5598, %v5613
    %v5616 = vunpack.c.l.s4 1966171168
    %v5617 = vunpack.c.0.s8 %v5616
    %v5618 = vlaneseq
    %v5619 = vshrl.u32 %v5618, 7
    %v5620 = vsub.s32 %v5617, %v5619
    %v5621 = vrot.slane %v5599, %v5620
    %v5623 = vunpack.c.l.s4 1966171168
    %v5624 = vunpack.c.0.s8 %v5623
    %v5625 = vlaneseq
    %v5626 = vshrl.u32 %v5625, 7
    %v5627 = vsub.s32 %v5624, %v5626
    %v5628 = vrot.slane %v5600, %v5627
    %v5629 = vcombine.low %v5607, %v5614
    %v5630 = vcombine.low %v5621, %v5628
    %v5632 = vunpack.c.l.s4 1966171168
    %v5633 = vunpack.c.0.s8 %v5632
    %v5634 = vlaneseq
    %v5635 = vshrl.u32 %v5634, 7
    %v5636 = vsub.s32 %v5633, %v5635
    %v5637 = vrot.slane %v5629, %v5636
    %v5639 = vunpack.c.l.s4 1966171168
    %v5640 = vunpack.c.0.s8 %v5639
    %v5641 = vlaneseq
    %v5642 = vshrl.u32 %v5641, 7
    %v5643 = vsub.s32 %v5640, %v5642
    %v5644 = vrot.slane %v5630, %v5643
    %v5645 = vcombine.low %v5637, %v5644
    %v5646 = vcombine.low %v4370, %v4374
    %v5647 = vcombine.low %v4378, %v4382
    %v5648 = vcombine.low %v4386, %v4390
    %v5649 = vcombine.low %v4394, %v4398
    %v5651 = vunpack.c.l.s4 1966171168
    %v5652 = vunpack.c.0.s8 %v5651
    %v5653 = vlaneseq
    %v5654 = vshrl.u32 %v5653, 7
    %v5655 = vsub.s32 %v5652, %v5654
    %v5656 = vrot.slane %v5646, %v5655
    %v5658 = vunpack.c.l.s4 1966171168
    %v5659 = vunpack.c.0.s8 %v5658
    %v5660 = vlaneseq
    %v5661 = vshrl.u32 %v5660, 7
    %v5662 = vsub.s32 %v5659, %v5661
    %v5663 = vrot.slane %v5647, %v5662
    %v5665 = vunpack.c.l.s4 1966171168
    %v5666 = vunpack.c.0.s8 %v5665
    %v5667 = vlaneseq
    %v5668 = vshrl.u32 %v5667, 7
    %v5669 = vsub.s32 %v5666, %v5668
    %v5670 = vrot.slane %v5648, %v5669
    %v5672 = vunpack.c.l.s4 1966171168
    %v5673 = vunpack.c.0.s8 %v5672
    %v5674 = vlaneseq
    %v5675 = vshrl.u32 %v5674, 7
    %v5676 = vsub.s32 %v5673, %v5675
    %v5677 = vrot.slane %v5649, %v5676
    %v5678 = vcombine.low %v5656, %v5663
    %v5679 = vcombine.low %v5670, %v5677
    %v5681 = vunpack.c.l.s4 1966171168
    %v5682 = vunpack.c.0.s8 %v5681
    %v5683 = vlaneseq
    %v5684 = vshrl.u32 %v5683, 7
    %v5685 = vsub.s32 %v5682, %v5684
    %v5686 = vrot.slane %v5678, %v5685
    %v5688 = vunpack.c.l.s4 1966171168
    %v5689 = vunpack.c.0.s8 %v5688
    %v5690 = vlaneseq
    %v5691 = vshrl.u32 %v5690, 7
    %v5692 = vsub.s32 %v5689, %v5691
    %v5693 = vrot.slane %v5679, %v5692
    %v5694 = vcombine.low %v5686, %v5693
    %v5695 = vcombine.low %v4402, %v4406
    %v5696 = vcombine.low %v4410, %v4414
    %v5697 = vcombine.low %v4418, %v4422
    %v5698 = vcombine.low %v4426, %v4430
    %v5700 = vunpack.c.l.s4 1966171168
    %v5701 = vunpack.c.0.s8 %v5700
    %v5702 = vlaneseq
    %v5703 = vshrl.u32 %v5702, 7
    %v5704 = vsub.s32 %v5701, %v5703
    %v5705 = vrot.slane %v5695, %v5704
    %v5707 = vunpack.c.l.s4 1966171168
    %v5708 = vunpack.c.0.s8 %v5707
    %v5709 = vlaneseq
    %v5710 = vshrl.u32 %v5709, 7
    %v5711 = vsub.s32 %v5708, %v5710
    %v5712 = vrot.slane %v5696, %v5711
    %v5714 = vunpack.c.l.s4 1966171168
    %v5715 = vunpack.c.0.s8 %v5714
    %v5716 = vlaneseq
    %v5717 = vshrl.u32 %v5716, 7
    %v5718 = vsub.s32 %v5715, %v5717
    %v5719 = vrot.slane %v5697, %v5718
    %v5721 = vunpack.c.l.s4 1966171168
    %v5722 = vunpack.c.0.s8 %v5721
    %v5723 = vlaneseq
    %v5724 = vshrl.u32 %v5723, 7
    %v5725 = vsub.s32 %v5722, %v5724
    %v5726 = vrot.slane %v5698, %v5725
    %v5727 = vcombine.low %v5705, %v5712
    %v5728 = vcombine.low %v5719, %v5726
    %v5730 = vunpack.c.l.s4 1966171168
    %v5731 = vunpack.c.0.s8 %v5730
    %v5732 = vlaneseq
    %v5733 = vshrl.u32 %v5732, 7
    %v5734 = vsub.s32 %v5731, %v5733
    %v5735 = vrot.slane %v5727, %v5734
    %v5737 = vunpack.c.l.s4 1966171168
    %v5738 = vunpack.c.0.s8 %v5737
    %v5739 = vlaneseq
    %v5740 = vshrl.u32 %v5739, 7
    %v5741 = vsub.s32 %v5738, %v5740
    %v5742 = vrot.slane %v5728, %v5741
    %v5743 = vcombine.low %v5735, %v5742
    %v5744 = vcombine.low %v4434, %v4438
    %v5745 = vcombine.low %v4442, %v4446
    %v5746 = vcombine.low %v4450, %v4454
    %v5747 = vcombine.low %v4458, %v4462
    %v5749 = vunpack.c.l.s4 1966171168
    %v5750 = vunpack.c.0.s8 %v5749
    %v5751 = vlaneseq
    %v5752 = vshrl.u32 %v5751, 7
    %v5753 = vsub.s32 %v5750, %v5752
    %v5754 = vrot.slane %v5744, %v5753
    %v5756 = vunpack.c.l.s4 1966171168
    %v5757 = vunpack.c.0.s8 %v5756
    %v5758 = vlaneseq
    %v5759 = vshrl.u32 %v5758, 7
    %v5760 = vsub.s32 %v5757, %v5759
    %v5761 = vrot.slane %v5745, %v5760
    %v5763 = vunpack.c.l.s4 1966171168
    %v5764 = vunpack.c.0.s8 %v5763
    %v5765 = vlaneseq
    %v5766 = vshrl.u32 %v5765, 7
    %v5767 = vsub.s32 %v5764, %v5766
    %v5768 = vrot.slane %v5746, %v5767
    %v5770 = vunpack.c.l.s4 1966171168
    %v5771 = vunpack.c.0.s8 %v5770
    %v5772 = vlaneseq
    %v5773 = vshrl.u32 %v5772, 7
    %v5774 = vsub.s32 %v5771, %v5773
    %v5775 = vrot.slane %v5747, %v5774
    %v5776 = vcombine.low %v5754, %v5761
    %v5777 = vcombine.low %v5768, %v5775
    %v5779 = vunpack.c.l.s4 1966171168
    %v5780 = vunpack.c.0.s8 %v5779
    %v5781 = vlaneseq
    %v5782 = vshrl.u32 %v5781, 7
    %v5783 = vsub.s32 %v5780, %v5782
    %v5784 = vrot.slane %v5776, %v5783
    %v5786 = vunpack.c.l.s4 1966171168
    %v5787 = vunpack.c.0.s8 %v5786
    %v5788 = vlaneseq
    %v5789 = vshrl.u32 %v5788, 7
    %v5790 = vsub.s32 %v5787, %v5789
    %v5791 = vrot.slane %v5777, %v5790
    %v5792 = vcombine.low %v5784, %v5791
    %v5793 = vcombine.low %v4466, %v4470
    %v5794 = vcombine.low %v4474, %v4478
    %v5795 = vcombine.low %v4482, %v4486
    %v5796 = vcombine.low %v4490, %v4494
    %v5798 = vunpack.c.l.s4 1966171168
    %v5799 = vunpack.c.0.s8 %v5798
    %v5800 = vlaneseq
    %v5801 = vshrl.u32 %v5800, 7
    %v5802 = vsub.s32 %v5799, %v5801
    %v5803 = vrot.slane %v5793, %v5802
    %v5805 = vunpack.c.l.s4 1966171168
    %v5806 = vunpack.c.0.s8 %v5805
    %v5807 = vlaneseq
    %v5808 = vshrl.u32 %v5807, 7
    %v5809 = vsub.s32 %v5806, %v5808
    %v5810 = vrot.slane %v5794, %v5809
    %v5812 = vunpack.c.l.s4 1966171168
    %v5813 = vunpack.c.0.s8 %v5812
    %v5814 = vlaneseq
    %v5815 = vshrl.u32 %v5814, 7
    %v5816 = vsub.s32 %v5813, %v5815
    %v5817 = vrot.slane %v5795, %v5816
    %v5819 = vunpack.c.l.s4 1966171168
    %v5820 = vunpack.c.0.s8 %v5819
    %v5821 = vlaneseq
    %v5822 = vshrl.u32 %v5821, 7
    %v5823 = vsub.s32 %v5820, %v5822
    %v5824 = vrot.slane %v5796, %v5823
    %v5825 = vcombine.low %v5803, %v5810
    %v5826 = vcombine.low %v5817, %v5824
    %v5828 = vunpack.c.l.s4 1966171168
    %v5829 = vunpack.c.0.s8 %v5828
    %v5830 = vlaneseq
    %v5831 = vshrl.u32 %v5830, 7
    %v5832 = vsub.s32 %v5829, %v5831
    %v5833 = vrot.slane %v5825, %v5832
    %v5835 = vunpack.c.l.s4 1966171168
    %v5836 = vunpack.c.0.s8 %v5835
    %v5837 = vlaneseq
    %v5838 = vshrl.u32 %v5837, 7
    %v5839 = vsub.s32 %v5836, %v5838
    %v5840 = vrot.slane %v5826, %v5839
    %v5841 = vcombine.low %v5833, %v5840
    %v5842 = vcombine.low %v4498, %v4502
    %v5843 = vcombine.low %v4506, %v4510
    %v5844 = vcombine.low %v4514, %v4518
    %v5845 = vcombine.low %v4522, %v4526
    %v5847 = vunpack.c.l.s4 1966171168
    %v5848 = vunpack.c.0.s8 %v5847
    %v5849 = vlaneseq
    %v5850 = vshrl.u32 %v5849, 7
    %v5851 = vsub.s32 %v5848, %v5850
    %v5852 = vrot.slane %v5842, %v5851
    %v5854 = vunpack.c.l.s4 1966171168
    %v5855 = vunpack.c.0.s8 %v5854
    %v5856 = vlaneseq
    %v5857 = vshrl.u32 %v5856, 7
    %v5858 = vsub.s32 %v5855, %v5857
    %v5859 = vrot.slane %v5843, %v5858
    %v5861 = vunpack.c.l.s4 1966171168
    %v5862 = vunpack.c.0.s8 %v5861
    %v5863 = vlaneseq
    %v5864 = vshrl.u32 %v5863, 7
    %v5865 = vsub.s32 %v5862, %v5864
    %v5866 = vrot.slane %v5844, %v5865
    %v5868 = vunpack.c.l.s4 1966171168
    %v5869 = vunpack.c.0.s8 %v5868
    %v5870 = vlaneseq
    %v5871 = vshrl.u32 %v5870, 7
    %v5872 = vsub.s32 %v5869, %v5871
    %v5873 = vrot.slane %v5845, %v5872
    %v5874 = vcombine.low %v5852, %v5859
    %v5875 = vcombine.low %v5866, %v5873
    %v5877 = vunpack.c.l.s4 1966171168
    %v5878 = vunpack.c.0.s8 %v5877
    %v5879 = vlaneseq
    %v5880 = vshrl.u32 %v5879, 7
    %v5881 = vsub.s32 %v5878, %v5880
    %v5882 = vrot.slane %v5874, %v5881
    %v5884 = vunpack.c.l.s4 1966171168
    %v5885 = vunpack.c.0.s8 %v5884
    %v5886 = vlaneseq
    %v5887 = vshrl.u32 %v5886, 7
    %v5888 = vsub.s32 %v5885, %v5887
    %v5889 = vrot.slane %v5875, %v5888
    %v5890 = vcombine.low %v5882, %v5889
    %v5891 = vcombine.low %v4530, %v4534
    %v5892 = vcombine.low %v4538, %v4542
    %v5893 = vcombine.low %v4546, %v4550
    %v5894 = vcombine.low %v4554, %v4558
    %v5896 = vunpack.c.l.s4 1966171168
    %v5897 = vunpack.c.0.s8 %v5896
    %v5898 = vlaneseq
    %v5899 = vshrl.u32 %v5898, 7
    %v5900 = vsub.s32 %v5897, %v5899
    %v5901 = vrot.slane %v5891, %v5900
    %v5903 = vunpack.c.l.s4 1966171168
    %v5904 = vunpack.c.0.s8 %v5903
    %v5905 = vlaneseq
    %v5906 = vshrl.u32 %v5905, 7
    %v5907 = vsub.s32 %v5904, %v5906
    %v5908 = vrot.slane %v5892, %v5907
    %v5910 = vunpack.c.l.s4 1966171168
    %v5911 = vunpack.c.0.s8 %v5910
    %v5912 = vlaneseq
    %v5913 = vshrl.u32 %v5912, 7
    %v5914 = vsub.s32 %v5911, %v5913
    %v5915 = vrot.slane %v5893, %v5914
    %v5917 = vunpack.c.l.s4 1966171168
    %v5918 = vunpack.c.0.s8 %v5917
    %v5919 = vlaneseq
    %v5920 = vshrl.u32 %v5919, 7
    %v5921 = vsub.s32 %v5918, %v5920
    %v5922 = vrot.slane %v5894, %v5921
    %v5923 = vcombine.low %v5901, %v5908
    %v5924 = vcombine.low %v5915, %v5922
    %v5926 = vunpack.c.l.s4 1966171168
    %v5927 = vunpack.c.0.s8 %v5926
    %v5928 = vlaneseq
    %v5929 = vshrl.u32 %v5928, 7
    %v5930 = vsub.s32 %v5927, %v5929
    %v5931 = vrot.slane %v5923, %v5930
    %v5933 = vunpack.c.l.s4 1966171168
    %v5934 = vunpack.c.0.s8 %v5933
    %v5935 = vlaneseq
    %v5936 = vshrl.u32 %v5935, 7
    %v5937 = vsub.s32 %v5934, %v5936
    %v5938 = vrot.slane %v5924, %v5937
    %v5939 = vcombine.low %v5931, %v5938
    %v5940 = vcombine.low %v4562, %v4566
    %v5941 = vcombine.low %v4570, %v4574
    %v5942 = vcombine.low %v4578, %v4582
    %v5943 = vcombine.low %v4586, %v4590
    %v5945 = vunpack.c.l.s4 1966171168
    %v5946 = vunpack.c.0.s8 %v5945
    %v5947 = vlaneseq
    %v5948 = vshrl.u32 %v5947, 7
    %v5949 = vsub.s32 %v5946, %v5948
    %v5950 = vrot.slane %v5940, %v5949
    %v5952 = vunpack.c.l.s4 1966171168
    %v5953 = vunpack.c.0.s8 %v5952
    %v5954 = vlaneseq
    %v5955 = vshrl.u32 %v5954, 7
    %v5956 = vsub.s32 %v5953, %v5955
    %v5957 = vrot.slane %v5941, %v5956
    %v5959 = vunpack.c.l.s4 1966171168
    %v5960 = vunpack.c.0.s8 %v5959
    %v5961 = vlaneseq
    %v5962 = vshrl.u32 %v5961, 7
    %v5963 = vsub.s32 %v5960, %v5962
    %v5964 = vrot.slane %v5942, %v5963
    %v5966 = vunpack.c.l.s4 1966171168
    %v5967 = vunpack.c.0.s8 %v5966
    %v5968 = vlaneseq
    %v5969 = vshrl.u32 %v5968, 7
    %v5970 = vsub.s32 %v5967, %v5969
    %v5971 = vrot.slane %v5943, %v5970
    %v5972 = vcombine.low %v5950, %v5957
    %v5973 = vcombine.low %v5964, %v5971
    %v5975 = vunpack.c.l.s4 1966171168
    %v5976 = vunpack.c.0.s8 %v5975
    %v5977 = vlaneseq
    %v5978 = vshrl.u32 %v5977, 7
    %v5979 = vsub.s32 %v5976, %v5978
    %v5980 = vrot.slane %v5972, %v5979
    %v5982 = vunpack.c.l.s4 1966171168
    %v5983 = vunpack.c.0.s8 %v5982
    %v5984 = vlaneseq
    %v5985 = vshrl.u32 %v5984, 7
    %v5986 = vsub.s32 %v5983, %v5985
    %v5987 = vrot.slane %v5973, %v5986
    %v5988 = vcombine.low %v5980, %v5987
    %v5989 = vcombine.low %v4594, %v4598
    %v5990 = vcombine.low %v4602, %v4606
    %v5991 = vcombine.low %v4610, %v4614
    %v5992 = vcombine.low %v4618, %v4622
    %v5994 = vunpack.c.l.s4 1966171168
    %v5995 = vunpack.c.0.s8 %v5994
    %v5996 = vlaneseq
    %v5997 = vshrl.u32 %v5996, 7
    %v5998 = vsub.s32 %v5995, %v5997
    %v5999 = vrot.slane %v5989, %v5998
    %v6001 = vunpack.c.l.s4 1966171168
    %v6002 = vunpack.c.0.s8 %v6001
    %v6003 = vlaneseq
    %v6004 = vshrl.u32 %v6003, 7
    %v6005 = vsub.s32 %v6002, %v6004
    %v6006 = vrot.slane %v5990, %v6005
    %v6008 = vunpack.c.l.s4 1966171168
    %v6009 = vunpack.c.0.s8 %v6008
    %v6010 = vlaneseq
    %v6011 = vshrl.u32 %v6010, 7
    %v6012 = vsub.s32 %v6009, %v6011
    %v6013 = vrot.slane %v5991, %v6012
    %v6015 = vunpack.c.l.s4 1966171168
    %v6016 = vunpack.c.0.s8 %v6015
    %v6017 = vlaneseq
    %v6018 = vshrl.u32 %v6017, 7
    %v6019 = vsub.s32 %v6016, %v6018
    %v6020 = vrot.slane %v5992, %v6019
    %v6021 = vcombine.low %v5999, %v6006
    %v6022 = vcombine.low %v6013, %v6020
    %v6024 = vunpack.c.l.s4 1966171168
    %v6025 = vunpack.c.0.s8 %v6024
    %v6026 = vlaneseq
    %v6027 = vshrl.u32 %v6026, 7
    %v6028 = vsub.s32 %v6025, %v6027
    %v6029 = vrot.slane %v6021, %v6028
    %v6031 = vunpack.c.l.s4 1966171168
    %v6032 = vunpack.c.0.s8 %v6031
    %v6033 = vlaneseq
    %v6034 = vshrl.u32 %v6033, 7
    %v6035 = vsub.s32 %v6032, %v6034
    %v6036 = vrot.slane %v6022, %v6035
    %v6037 = vcombine.low %v6029, %v6036
    %v6038 = vcombine.low %v4626, %v4630
    %v6039 = vcombine.low %v4634, %v4638
    %v6040 = vcombine.low %v4642, %v4646
    %v6041 = vcombine.low %v4650, %v4654
    %v6043 = vunpack.c.l.s4 1966171168
    %v6044 = vunpack.c.0.s8 %v6043
    %v6045 = vlaneseq
    %v6046 = vshrl.u32 %v6045, 7
    %v6047 = vsub.s32 %v6044, %v6046
    %v6048 = vrot.slane %v6038, %v6047
    %v6050 = vunpack.c.l.s4 1966171168
    %v6051 = vunpack.c.0.s8 %v6050
    %v6052 = vlaneseq
    %v6053 = vshrl.u32 %v6052, 7
    %v6054 = vsub.s32 %v6051, %v6053
    %v6055 = vrot.slane %v6039, %v6054
    %v6057 = vunpack.c.l.s4 1966171168
    %v6058 = vunpack.c.0.s8 %v6057
    %v6059 = vlaneseq
    %v6060 = vshrl.u32 %v6059, 7
    %v6061 = vsub.s32 %v6058, %v6060
    %v6062 = vrot.slane %v6040, %v6061
    %v6064 = vunpack.c.l.s4 1966171168
    %v6065 = vunpack.c.0.s8 %v6064
    %v6066 = vlaneseq
    %v6067 = vshrl.u32 %v6066, 7
    %v6068 = vsub.s32 %v6065, %v6067
    %v6069 = vrot.slane %v6041, %v6068
    %v6070 = vcombine.low %v6048, %v6055
    %v6071 = vcombine.low %v6062, %v6069
    %v6073 = vunpack.c.l.s4 1966171168
    %v6074 = vunpack.c.0.s8 %v6073
    %v6075 = vlaneseq
    %v6076 = vshrl.u32 %v6075, 7
    %v6077 = vsub.s32 %v6074, %v6076
    %v6078 = vrot.slane %v6070, %v6077
    %v6080 = vunpack.c.l.s4 1966171168
    %v6081 = vunpack.c.0.s8 %v6080
    %v6082 = vlaneseq
    %v6083 = vshrl.u32 %v6082, 7
    %v6084 = vsub.s32 %v6081, %v6083
    %v6085 = vrot.slane %v6071, %v6084
    %v6086 = vcombine.low %v6078, %v6085
    %v6087 = vcombine.low %v4658, %v4662
    %v6088 = vcombine.low %v4666, %v4670
    %v6089 = vcombine.low %v4674, %v4678
    %v6090 = vcombine.low %v4682, %v4686
    %v6092 = vunpack.c.l.s4 1966171168
    %v6093 = vunpack.c.0.s8 %v6092
    %v6094 = vlaneseq
    %v6095 = vshrl.u32 %v6094, 7
    %v6096 = vsub.s32 %v6093, %v6095
    %v6097 = vrot.slane %v6087, %v6096
    %v6099 = vunpack.c.l.s4 1966171168
    %v6100 = vunpack.c.0.s8 %v6099
    %v6101 = vlaneseq
    %v6102 = vshrl.u32 %v6101, 7
    %v6103 = vsub.s32 %v6100, %v6102
    %v6104 = vrot.slane %v6088, %v6103
    %v6106 = vunpack.c.l.s4 1966171168
    %v6107 = vunpack.c.0.s8 %v6106
    %v6108 = vlaneseq
    %v6109 = vshrl.u32 %v6108, 7
    %v6110 = vsub.s32 %v6107, %v6109
    %v6111 = vrot.slane %v6089, %v6110
    %v6113 = vunpack.c.l.s4 1966171168
    %v6114 = vunpack.c.0.s8 %v6113
    %v6115 = vlaneseq
    %v6116 = vshrl.u32 %v6115, 7
    %v6117 = vsub.s32 %v6114, %v6116
    %v6118 = vrot.slane %v6090, %v6117
    %v6119 = vcombine.low %v6097, %v6104
    %v6120 = vcombine.low %v6111, %v6118
    %v6122 = vunpack.c.l.s4 1966171168
    %v6123 = vunpack.c.0.s8 %v6122
    %v6124 = vlaneseq
    %v6125 = vshrl.u32 %v6124, 7
    %v6126 = vsub.s32 %v6123, %v6125
    %v6127 = vrot.slane %v6119, %v6126
    %v6129 = vunpack.c.l.s4 1966171168
    %v6130 = vunpack.c.0.s8 %v6129
    %v6131 = vlaneseq
    %v6132 = vshrl.u32 %v6131, 7
    %v6133 = vsub.s32 %v6130, %v6132
    %v6134 = vrot.slane %v6120, %v6133
    %v6135 = vcombine.low %v6127, %v6134
    %v6136 = vcombine.low %v4690, %v4694
    %v6137 = vcombine.low %v4698, %v4702
    %v6138 = vcombine.low %v4706, %v4710
    %v6139 = vcombine.low %v4714, %v4718
    %v6141 = vunpack.c.l.s4 1966171168
    %v6142 = vunpack.c.0.s8 %v6141
    %v6143 = vlaneseq
    %v6144 = vshrl.u32 %v6143, 7
    %v6145 = vsub.s32 %v6142, %v6144
    %v6146 = vrot.slane %v6136, %v6145
    %v6148 = vunpack.c.l.s4 1966171168
    %v6149 = vunpack.c.0.s8 %v6148
    %v6150 = vlaneseq
    %v6151 = vshrl.u32 %v6150, 7
    %v6152 = vsub.s32 %v6149, %v6151
    %v6153 = vrot.slane %v6137, %v6152
    %v6155 = vunpack.c.l.s4 1966171168
    %v6156 = vunpack.c.0.s8 %v6155
    %v6157 = vlaneseq
    %v6158 = vshrl.u32 %v6157, 7
    %v6159 = vsub.s32 %v6156, %v6158
    %v6160 = vrot.slane %v6138, %v6159
    %v6162 = vunpack.c.l.s4 1966171168
    %v6163 = vunpack.c.0.s8 %v6162
    %v6164 = vlaneseq
    %v6165 = vshrl.u32 %v6164, 7
    %v6166 = vsub.s32 %v6163, %v6165
    %v6167 = vrot.slane %v6139, %v6166
    %v6168 = vcombine.low %v6146, %v6153
    %v6169 = vcombine.low %v6160, %v6167
    %v6171 = vunpack.c.l.s4 1966171168
    %v6172 = vunpack.c.0.s8 %v6171
    %v6173 = vlaneseq
    %v6174 = vshrl.u32 %v6173, 7
    %v6175 = vsub.s32 %v6172, %v6174
    %v6176 = vrot.slane %v6168, %v6175
    %v6178 = vunpack.c.l.s4 1966171168
    %v6179 = vunpack.c.0.s8 %v6178
    %v6180 = vlaneseq
    %v6181 = vshrl.u32 %v6180, 7
    %v6182 = vsub.s32 %v6179, %v6181
    %v6183 = vrot.slane %v6169, %v6182
    %v6184 = vcombine.low %v6176, %v6183
    %v6185 = vcombine.low %v4722, %v4726
    %v6186 = vcombine.low %v4730, %v4734
    %v6187 = vcombine.low %v4738, %v4742
    %v6188 = vcombine.low %v4746, %v4750
    %v6190 = vunpack.c.l.s4 1966171168
    %v6191 = vunpack.c.0.s8 %v6190
    %v6192 = vlaneseq
    %v6193 = vshrl.u32 %v6192, 7
    %v6194 = vsub.s32 %v6191, %v6193
    %v6195 = vrot.slane %v6185, %v6194
    %v6197 = vunpack.c.l.s4 1966171168
    %v6198 = vunpack.c.0.s8 %v6197
    %v6199 = vlaneseq
    %v6200 = vshrl.u32 %v6199, 7
    %v6201 = vsub.s32 %v6198, %v6200
    %v6202 = vrot.slane %v6186, %v6201
    %v6204 = vunpack.c.l.s4 1966171168
    %v6205 = vunpack.c.0.s8 %v6204
    %v6206 = vlaneseq
    %v6207 = vshrl.u32 %v6206, 7
    %v6208 = vsub.s32 %v6205, %v6207
    %v6209 = vrot.slane %v6187, %v6208
    %v6211 = vunpack.c.l.s4 1966171168
    %v6212 = vunpack.c.0.s8 %v6211
    %v6213 = vlaneseq
    %v6214 = vshrl.u32 %v6213, 7
    %v6215 = vsub.s32 %v6212, %v6214
    %v6216 = vrot.slane %v6188, %v6215
    %v6217 = vcombine.low %v6195, %v6202
    %v6218 = vcombine.low %v6209, %v6216
    %v6220 = vunpack.c.l.s4 1966171168
    %v6221 = vunpack.c.0.s8 %v6220
    %v6222 = vlaneseq
    %v6223 = vshrl.u32 %v6222, 7
    %v6224 = vsub.s32 %v6221, %v6223
    %v6225 = vrot.slane %v6217, %v6224
    %v6227 = vunpack.c.l.s4 1966171168
    %v6228 = vunpack.c.0.s8 %v6227
    %v6229 = vlaneseq
    %v6230 = vshrl.u32 %v6229, 7
    %v6231 = vsub.s32 %v6228, %v6230
    %v6232 = vrot.slane %v6218, %v6231
    %v6233 = vcombine.low %v6225, %v6232
    %v6234 = vcombine.low %v4754, %v4758
    %v6235 = vcombine.low %v4762, %v4766
    %v6236 = vcombine.low %v4770, %v4774
    %v6237 = vcombine.low %v4778, %v4782
    %v6239 = vunpack.c.l.s4 1966171168
    %v6240 = vunpack.c.0.s8 %v6239
    %v6241 = vlaneseq
    %v6242 = vshrl.u32 %v6241, 7
    %v6243 = vsub.s32 %v6240, %v6242
    %v6244 = vrot.slane %v6234, %v6243
    %v6246 = vunpack.c.l.s4 1966171168
    %v6247 = vunpack.c.0.s8 %v6246
    %v6248 = vlaneseq
    %v6249 = vshrl.u32 %v6248, 7
    %v6250 = vsub.s32 %v6247, %v6249
    %v6251 = vrot.slane %v6235, %v6250
    %v6253 = vunpack.c.l.s4 1966171168
    %v6254 = vunpack.c.0.s8 %v6253
    %v6255 = vlaneseq
    %v6256 = vshrl.u32 %v6255, 7
    %v6257 = vsub.s32 %v6254, %v6256
    %v6258 = vrot.slane %v6236, %v6257
    %v6260 = vunpack.c.l.s4 1966171168
    %v6261 = vunpack.c.0.s8 %v6260
    %v6262 = vlaneseq
    %v6263 = vshrl.u32 %v6262, 7
    %v6264 = vsub.s32 %v6261, %v6263
    %v6265 = vrot.slane %v6237, %v6264
    %v6266 = vcombine.low %v6244, %v6251
    %v6267 = vcombine.low %v6258, %v6265
    %v6269 = vunpack.c.l.s4 1966171168
    %v6270 = vunpack.c.0.s8 %v6269
    %v6271 = vlaneseq
    %v6272 = vshrl.u32 %v6271, 7
    %v6273 = vsub.s32 %v6270, %v6272
    %v6274 = vrot.slane %v6266, %v6273
    %v6276 = vunpack.c.l.s4 1966171168
    %v6277 = vunpack.c.0.s8 %v6276
    %v6278 = vlaneseq
    %v6279 = vshrl.u32 %v6278, 7
    %v6280 = vsub.s32 %v6277, %v6279
    %v6281 = vrot.slane %v6267, %v6280
    %v6282 = vcombine.low %v6274, %v6281
    %v6283 = vcombine.low %v4786, %v4790
    %v6284 = vcombine.low %v4794, %v4798
    %v6285 = vcombine.low %v4802, %v4806
    %v6286 = vcombine.low %v4810, %v4814
    %v6288 = vunpack.c.l.s4 1966171168
    %v6289 = vunpack.c.0.s8 %v6288
    %v6290 = vlaneseq
    %v6291 = vshrl.u32 %v6290, 7
    %v6292 = vsub.s32 %v6289, %v6291
    %v6293 = vrot.slane %v6283, %v6292
    %v6295 = vunpack.c.l.s4 1966171168
    %v6296 = vunpack.c.0.s8 %v6295
    %v6297 = vlaneseq
    %v6298 = vshrl.u32 %v6297, 7
    %v6299 = vsub.s32 %v6296, %v6298
    %v6300 = vrot.slane %v6284, %v6299
    %v6302 = vunpack.c.l.s4 1966171168
    %v6303 = vunpack.c.0.s8 %v6302
    %v6304 = vlaneseq
    %v6305 = vshrl.u32 %v6304, 7
    %v6306 = vsub.s32 %v6303, %v6305
    %v6307 = vrot.slane %v6285, %v6306
    %v6309 = vunpack.c.l.s4 1966171168
    %v6310 = vunpack.c.0.s8 %v6309
    %v6311 = vlaneseq
    %v6312 = vshrl.u32 %v6311, 7
    %v6313 = vsub.s32 %v6310, %v6312
    %v6314 = vrot.slane %v6286, %v6313
    %v6315 = vcombine.low %v6293, %v6300
    %v6316 = vcombine.low %v6307, %v6314
    %v6318 = vunpack.c.l.s4 1966171168
    %v6319 = vunpack.c.0.s8 %v6318
    %v6320 = vlaneseq
    %v6321 = vshrl.u32 %v6320, 7
    %v6322 = vsub.s32 %v6319, %v6321
    %v6323 = vrot.slane %v6315, %v6322
    %v6325 = vunpack.c.l.s4 1966171168
    %v6326 = vunpack.c.0.s8 %v6325
    %v6327 = vlaneseq
    %v6328 = vshrl.u32 %v6327, 7
    %v6329 = vsub.s32 %v6326, %v6328
    %v6330 = vrot.slane %v6316, %v6329
    %v6331 = vcombine.low %v6323, %v6330
    %v6332 = vcombine.low %v4818, %v4822
    %v6333 = vcombine.low %v4826, %v4830
    %v6334 = vcombine.low %v4834, %v4838
    %v6335 = vcombine.low %v4842, %v4846
    %v6337 = vunpack.c.l.s4 1966171168
    %v6338 = vunpack.c.0.s8 %v6337
    %v6339 = vlaneseq
    %v6340 = vshrl.u32 %v6339, 7
    %v6341 = vsub.s32 %v6338, %v6340
    %v6342 = vrot.slane %v6332, %v6341
    %v6344 = vunpack.c.l.s4 1966171168
    %v6345 = vunpack.c.0.s8 %v6344
    %v6346 = vlaneseq
    %v6347 = vshrl.u32 %v6346, 7
    %v6348 = vsub.s32 %v6345, %v6347
    %v6349 = vrot.slane %v6333, %v6348
    %v6351 = vunpack.c.l.s4 1966171168
    %v6352 = vunpack.c.0.s8 %v6351
    %v6353 = vlaneseq
    %v6354 = vshrl.u32 %v6353, 7
    %v6355 = vsub.s32 %v6352, %v6354
    %v6356 = vrot.slane %v6334, %v6355
    %v6358 = vunpack.c.l.s4 1966171168
    %v6359 = vunpack.c.0.s8 %v6358
    %v6360 = vlaneseq
    %v6361 = vshrl.u32 %v6360, 7
    %v6362 = vsub.s32 %v6359, %v6361
    %v6363 = vrot.slane %v6335, %v6362
    %v6364 = vcombine.low %v6342, %v6349
    %v6365 = vcombine.low %v6356, %v6363
    %v6367 = vunpack.c.l.s4 1966171168
    %v6368 = vunpack.c.0.s8 %v6367
    %v6369 = vlaneseq
    %v6370 = vshrl.u32 %v6369, 7
    %v6371 = vsub.s32 %v6368, %v6370
    %v6372 = vrot.slane %v6364, %v6371
    %v6374 = vunpack.c.l.s4 1966171168
    %v6375 = vunpack.c.0.s8 %v6374
    %v6376 = vlaneseq
    %v6377 = vshrl.u32 %v6376, 7
    %v6378 = vsub.s32 %v6375, %v6377
    %v6379 = vrot.slane %v6365, %v6378
    %v6380 = vcombine.low %v6372, %v6379
    %v6381 = vcombine.low %v4850, %v4854
    %v6382 = vcombine.low %v4858, %v4862
    %v6383 = vcombine.low %v4866, %v4870
    %v6384 = vcombine.low %v4874, %v4878
    %v6386 = vunpack.c.l.s4 1966171168
    %v6387 = vunpack.c.0.s8 %v6386
    %v6388 = vlaneseq
    %v6389 = vshrl.u32 %v6388, 7
    %v6390 = vsub.s32 %v6387, %v6389
    %v6391 = vrot.slane %v6381, %v6390
    %v6393 = vunpack.c.l.s4 1966171168
    %v6394 = vunpack.c.0.s8 %v6393
    %v6395 = vlaneseq
    %v6396 = vshrl.u32 %v6395, 7
    %v6397 = vsub.s32 %v6394, %v6396
    %v6398 = vrot.slane %v6382, %v6397
    %v6400 = vunpack.c.l.s4 1966171168
    %v6401 = vunpack.c.0.s8 %v6400
    %v6402 = vlaneseq
    %v6403 = vshrl.u32 %v6402, 7
    %v6404 = vsub.s32 %v6401, %v6403
    %v6405 = vrot.slane %v6383, %v6404
    %v6407 = vunpack.c.l.s4 1966171168
    %v6408 = vunpack.c.0.s8 %v6407
    %v6409 = vlaneseq
    %v6410 = vshrl.u32 %v6409, 7
    %v6411 = vsub.s32 %v6408, %v6410
    %v6412 = vrot.slane %v6384, %v6411
    %v6413 = vcombine.low %v6391, %v6398
    %v6414 = vcombine.low %v6405, %v6412
    %v6416 = vunpack.c.l.s4 1966171168
    %v6417 = vunpack.c.0.s8 %v6416
    %v6418 = vlaneseq
    %v6419 = vshrl.u32 %v6418, 7
    %v6420 = vsub.s32 %v6417, %v6419
    %v6421 = vrot.slane %v6413, %v6420
    %v6423 = vunpack.c.l.s4 1966171168
    %v6424 = vunpack.c.0.s8 %v6423
    %v6425 = vlaneseq
    %v6426 = vshrl.u32 %v6425, 7
    %v6427 = vsub.s32 %v6424, %v6426
    %v6428 = vrot.slane %v6414, %v6427
    %v6429 = vcombine.low %v6421, %v6428
    %v6430 = vcombine.low %v4882, %v4886
    %v6431 = vcombine.low %v4890, %v4894
    %v6432 = vcombine.low %v4898, %v4902
    %v6433 = vcombine.low %v4906, %v4910
    %v6435 = vunpack.c.l.s4 1966171168
    %v6436 = vunpack.c.0.s8 %v6435
    %v6437 = vlaneseq
    %v6438 = vshrl.u32 %v6437, 7
    %v6439 = vsub.s32 %v6436, %v6438
    %v6440 = vrot.slane %v6430, %v6439
    %v6442 = vunpack.c.l.s4 1966171168
    %v6443 = vunpack.c.0.s8 %v6442
    %v6444 = vlaneseq
    %v6445 = vshrl.u32 %v6444, 7
    %v6446 = vsub.s32 %v6443, %v6445
    %v6447 = vrot.slane %v6431, %v6446
    %v6449 = vunpack.c.l.s4 1966171168
    %v6450 = vunpack.c.0.s8 %v6449
    %v6451 = vlaneseq
    %v6452 = vshrl.u32 %v6451, 7
    %v6453 = vsub.s32 %v6450, %v6452
    %v6454 = vrot.slane %v6432, %v6453
    %v6456 = vunpack.c.l.s4 1966171168
    %v6457 = vunpack.c.0.s8 %v6456
    %v6458 = vlaneseq
    %v6459 = vshrl.u32 %v6458, 7
    %v6460 = vsub.s32 %v6457, %v6459
    %v6461 = vrot.slane %v6433, %v6460
    %v6462 = vcombine.low %v6440, %v6447
    %v6463 = vcombine.low %v6454, %v6461
    %v6465 = vunpack.c.l.s4 1966171168
    %v6466 = vunpack.c.0.s8 %v6465
    %v6467 = vlaneseq
    %v6468 = vshrl.u32 %v6467, 7
    %v6469 = vsub.s32 %v6466, %v6468
    %v6470 = vrot.slane %v6462, %v6469
    %v6472 = vunpack.c.l.s4 1966171168
    %v6473 = vunpack.c.0.s8 %v6472
    %v6474 = vlaneseq
    %v6475 = vshrl.u32 %v6474, 7
    %v6476 = vsub.s32 %v6473, %v6475
    %v6477 = vrot.slane %v6463, %v6476
    %v6478 = vcombine.low %v6470, %v6477
    %6479 = vset.pattern.permute.xlu0 0
    %6480 = vperm.xlu0 %6479, %v4959
    %v6481 = vpop.permute.xlu0 %6480
    %6482 = vset.pattern.permute.xlu0 0
    %6483 = vperm.xlu0 %6482, %v5008
    %v6484 = vpop.permute.xlu0 %6483
    %6485 = vset.pattern.permute.xlu0 0
    %6486 = vperm.xlu0 %6485, %v5057
    %v6487 = vpop.permute.xlu0 %6486
    %6488 = vset.pattern.permute.xlu0 0
    %6489 = vperm.xlu0 %6488, %v5106
    %v6490 = vpop.permute.xlu0 %6489
    %6491 = vset.pattern.permute.xlu0 0
    %6492 = vperm.xlu0 %6491, %v5155
    %v6493 = vpop.permute.xlu0 %6492
    %6494 = vset.pattern.permute.xlu0 0
    %6495 = vperm.xlu0 %6494, %v5204
    %v6496 = vpop.permute.xlu0 %6495
    %6497 = vset.pattern.permute.xlu0 0
    %6498 = vperm.xlu0 %6497, %v5253
    %v6499 = vpop.permute.xlu0 %6498
    %6500 = vset.pattern.permute.xlu0 0
    %6501 = vperm.xlu0 %6500, %v5302
    %v6502 = vpop.permute.xlu0 %6501
    %6503 = vset.pattern.permute.xlu0 0
    %6504 = vperm.xlu0 %6503, %v5351
    %v6505 = vpop.permute.xlu0 %6504
    %6506 = vset.pattern.permute.xlu0 0
    %6507 = vperm.xlu0 %6506, %v5400
    %v6508 = vpop.permute.xlu0 %6507
    %6509 = vset.pattern.permute.xlu0 0
    %6510 = vperm.xlu0 %6509, %v5449
    %v6511 = vpop.permute.xlu0 %6510
    %6512 = vset.pattern.permute.xlu0 0
    %6513 = vperm.xlu0 %6512, %v5498
    %v6514 = vpop.permute.xlu0 %6513
    %6515 = vset.pattern.permute.xlu0 0
    %6516 = vperm.xlu0 %6515, %v5547
    %v6517 = vpop.permute.xlu0 %6516
    %6518 = vset.pattern.permute.xlu0 0
    %6519 = vperm.xlu0 %6518, %v5596
    %v6520 = vpop.permute.xlu0 %6519
    %6521 = vset.pattern.permute.xlu0 0
    %6522 = vperm.xlu0 %6521, %v5645
    %v6523 = vpop.permute.xlu0 %6522
    %6524 = vset.pattern.permute.xlu0 0
    %6525 = vperm.xlu0 %6524, %v5694
    %v6526 = vpop.permute.xlu0 %6525
    %6527 = vset.pattern.permute.xlu0 0
    %6528 = vperm.xlu0 %6527, %v5743
    %v6529 = vpop.permute.xlu0 %6528
    %6530 = vset.pattern.permute.xlu0 0
    %6531 = vperm.xlu0 %6530, %v5792
    %v6532 = vpop.permute.xlu0 %6531
    %6533 = vset.pattern.permute.xlu0 0
    %6534 = vperm.xlu0 %6533, %v5841
    %v6535 = vpop.permute.xlu0 %6534
    %6536 = vset.pattern.permute.xlu0 0
    %6537 = vperm.xlu0 %6536, %v5890
    %v6538 = vpop.permute.xlu0 %6537
    %6539 = vset.pattern.permute.xlu0 0
    %6540 = vperm.xlu0 %6539, %v5939
    %v6541 = vpop.permute.xlu0 %6540
    %6542 = vset.pattern.permute.xlu0 0
    %6543 = vperm.xlu0 %6542, %v5988
    %v6544 = vpop.permute.xlu0 %6543
    %6545 = vset.pattern.permute.xlu0 0
    %6546 = vperm.xlu0 %6545, %v6037
    %v6547 = vpop.permute.xlu0 %6546
    %6548 = vset.pattern.permute.xlu0 0
    %6549 = vperm.xlu0 %6548, %v6086
    %v6550 = vpop.permute.xlu0 %6549
    %6551 = vset.pattern.permute.xlu0 0
    %6552 = vperm.xlu0 %6551, %v6135
    %v6553 = vpop.permute.xlu0 %6552
    %6554 = vset.pattern.permute.xlu0 0
    %6555 = vperm.xlu0 %6554, %v6184
    %v6556 = vpop.permute.xlu0 %6555
    %6557 = vset.pattern.permute.xlu0 0
    %6558 = vperm.xlu0 %6557, %v6233
    %v6559 = vpop.permute.xlu0 %6558
    %6560 = vset.pattern.permute.xlu0 0
    %6561 = vperm.xlu0 %6560, %v6282
    %v6562 = vpop.permute.xlu0 %6561
    %6563 = vset.pattern.permute.xlu0 0
    %6564 = vperm.xlu0 %6563, %v6331
    %v6565 = vpop.permute.xlu0 %6564
    %6566 = vset.pattern.permute.xlu0 0
    %6567 = vperm.xlu0 %6566, %v6380
    %v6568 = vpop.permute.xlu0 %6567
    %6569 = vset.pattern.permute.xlu0 0
    %6570 = vperm.xlu0 %6569, %v6429
    %v6571 = vpop.permute.xlu0 %6570
    %6572 = vset.pattern.permute.xlu0 0
    %6573 = vperm.xlu0 %6572, %v6478
    %v6574 = vpop.permute.xlu0 %6573
    %v6575 = vlaneseq
    %v6576 = vand.u32 %v6575, 127
    %v6577 = vlaneseq
    %v6578 = vshrl.u32 %v6577, 7
    %v6579 = vsub.s32 %v6576, %v6578
    %v6580 = vrot.slane %v6481, %v6579
    %v6581 = vadd.s32 %v6576, 4294967288
    %v6582 = vlaneseq
    %v6583 = vshrl.u32 %v6582, 7
    %v6584 = vsub.s32 %v6581, %v6583
    %v6585 = vrot.slane %v6484, %v6584
    %vm6586 = vcmask 130112
    %v6587 = vsel %vm6586, %v6585, %v6580
    %v6588 = vadd.s32 %v6576, 4294967280
    %v6589 = vlaneseq
    %v6590 = vshrl.u32 %v6589, 7
    %v6591 = vsub.s32 %v6588, %v6590
    %v6592 = vrot.slane %v6487, %v6591
    %vm6593 = vcmask 195712
    %v6594 = vsel %vm6593, %v6592, %v6587
    %v6595 = vadd.s32 %v6576, 4294967272
    %v6596 = vlaneseq
    %v6597 = vshrl.u32 %v6596, 7
    %v6598 = vsub.s32 %v6595, %v6597
    %v6599 = vrot.slane %v6490, %v6598
    %vm6600 = vcmask 261312
    %v6601 = vsel %vm6600, %v6599, %v6594
    %v6602 = vadd.s32 %v6576, 4294967264
    %v6603 = vlaneseq
    %v6604 = vshrl.u32 %v6603, 7
    %v6605 = vsub.s32 %v6602, %v6604
    %v6606 = vrot.slane %v6493, %v6605
    %vm6607 = vcmask 326912
    %v6608 = vsel %vm6607, %v6606, %v6601
    %v6609 = vadd.s32 %v6576, 4294967256
    %v6610 = vlaneseq
    %v6611 = vshrl.u32 %v6610, 7
    %v6612 = vsub.s32 %v6609, %v6611
    %v6613 = vrot.slane %v6496, %v6612
    %vm6614 = vcmask 392512
    %v6615 = vsel %vm6614, %v6613, %v6608
    %v6616 = vadd.s32 %v6576, 4294967248
    %v6617 = vlaneseq
    %v6618 = vshrl.u32 %v6617, 7
    %v6619 = vsub.s32 %v6616, %v6618
    %v6620 = vrot.slane %v6499, %v6619
    %vm6621 = vcmask 458112
    %v6622 = vsel %vm6621, %v6620, %v6615
    %v6623 = vadd.s32 %v6576, 4294967240
    %v6624 = vlaneseq
    %v6625 = vshrl.u32 %v6624, 7
    %v6626 = vsub.s32 %v6623, %v6625
    %v6627 = vrot.slane %v6502, %v6626
    %vm6628 = vcmask 523712
    %v6629 = vsel %vm6628, %v6627, %v6622
    %v6630 = vadd.s32 %v6576, 4294967232
    %v6631 = vlaneseq
    %v6632 = vshrl.u32 %v6631, 7
    %v6633 = vsub.s32 %v6630, %v6632
    %v6634 = vrot.slane %v6505, %v6633
    %vm6635 = vcmask 589312
    %v6636 = vsel %vm6635, %v6634, %v6629
    %v6637 = vadd.s32 %v6576, 4294967224
    %v6638 = vlaneseq
    %v6639 = vshrl.u32 %v6638, 7
    %v6640 = vsub.s32 %v6637, %v6639
    %v6641 = vrot.slane %v6508, %v6640
    %vm6642 = vcmask 654912
    %v6643 = vsel %vm6642, %v6641, %v6636
    %v6644 = vadd.s32 %v6576, 4294967216
    %v6645 = vlaneseq
    %v6646 = vshrl.u32 %v6645, 7
    %v6647 = vsub.s32 %v6644, %v6646
    %v6648 = vrot.slane %v6511, %v6647
    %vm6649 = vcmask 720512
    %v6650 = vsel %vm6649, %v6648, %v6643
    %v6651 = vadd.s32 %v6576, 4294967208
    %v6652 = vlaneseq
    %v6653 = vshrl.u32 %v6652, 7
    %v6654 = vsub.s32 %v6651, %v6653
    %v6655 = vrot.slane %v6514, %v6654
    %vm6656 = vcmask 786112
    %v6657 = vsel %vm6656, %v6655, %v6650
    %v6658 = vadd.s32 %v6576, 4294967200
    %v6659 = vlaneseq
    %v6660 = vshrl.u32 %v6659, 7
    %v6661 = vsub.s32 %v6658, %v6660
    %v6662 = vrot.slane %v6517, %v6661
    %vm6663 = vcmask 851712
    %v6664 = vsel %vm6663, %v6662, %v6657
    %v6665 = vadd.s32 %v6576, 4294967192
    %v6666 = vlaneseq
    %v6667 = vshrl.u32 %v6666, 7
    %v6668 = vsub.s32 %v6665, %v6667
    %v6669 = vrot.slane %v6520, %v6668
    %vm6670 = vcmask 917312
    %v6671 = vsel %vm6670, %v6669, %v6664
    %v6672 = vadd.s32 %v6576, 4294967184
    %v6673 = vlaneseq
    %v6674 = vshrl.u32 %v6673, 7
    %v6675 = vsub.s32 %v6672, %v6674
    %v6676 = vrot.slane %v6523, %v6675
    %vm6677 = vcmask 982912
    %v6678 = vsel %vm6677, %v6676, %v6671
    %v6679 = vadd.s32 %v6576, 4294967176
    %v6680 = vlaneseq
    %v6681 = vshrl.u32 %v6680, 7
    %v6682 = vsub.s32 %v6679, %v6681
    %v6683 = vrot.slane %v6526, %v6682
    %vm6684 = vcmask 1048512
    %v6685 = vsel %vm6684, %v6683, %v6678
    %v6686 = vlaneseq
    %v6687 = vshrl.u32 %v6686, 7
    %v6688 = vsub.s32 %v6576, %v6687
    %v6689 = vrot.slane %v6529, %v6688
    %v6690 = vlaneseq
    %v6691 = vshrl.u32 %v6690, 7
    %v6692 = vsub.s32 %v6581, %v6691
    %v6693 = vrot.slane %v6532, %v6692
    %v6694 = vsel %vm6586, %v6693, %v6689
    %v6695 = vlaneseq
    %v6696 = vshrl.u32 %v6695, 7
    %v6697 = vsub.s32 %v6588, %v6696
    %v6698 = vrot.slane %v6535, %v6697
    %v6699 = vsel %vm6593, %v6698, %v6694
    %v6700 = vlaneseq
    %v6701 = vshrl.u32 %v6700, 7
    %v6702 = vsub.s32 %v6595, %v6701
    %v6703 = vrot.slane %v6538, %v6702
    %v6704 = vsel %vm6600, %v6703, %v6699
    %v6705 = vlaneseq
    %v6706 = vshrl.u32 %v6705, 7
    %v6707 = vsub.s32 %v6602, %v6706
    %v6708 = vrot.slane %v6541, %v6707
    %v6709 = vsel %vm6607, %v6708, %v6704
    %v6710 = vlaneseq
    %v6711 = vshrl.u32 %v6710, 7
    %v6712 = vsub.s32 %v6609, %v6711
    %v6713 = vrot.slane %v6544, %v6712
    %v6714 = vsel %vm6614, %v6713, %v6709
    %v6715 = vlaneseq
    %v6716 = vshrl.u32 %v6715, 7
    %v6717 = vsub.s32 %v6616, %v6716
    %v6718 = vrot.slane %v6547, %v6717
    %v6719 = vsel %vm6621, %v6718, %v6714
    %v6720 = vlaneseq
    %v6721 = vshrl.u32 %v6720, 7
    %v6722 = vsub.s32 %v6623, %v6721
    %v6723 = vrot.slane %v6550, %v6722
    %v6724 = vsel %vm6628, %v6723, %v6719
    %v6725 = vlaneseq
    %v6726 = vshrl.u32 %v6725, 7
    %v6727 = vsub.s32 %v6630, %v6726
    %v6728 = vrot.slane %v6553, %v6727
    %v6729 = vsel %vm6635, %v6728, %v6724
    %v6730 = vlaneseq
    %v6731 = vshrl.u32 %v6730, 7
    %v6732 = vsub.s32 %v6637, %v6731
    %v6733 = vrot.slane %v6556, %v6732
    %v6734 = vsel %vm6642, %v6733, %v6729
    %v6735 = vlaneseq
    %v6736 = vshrl.u32 %v6735, 7
    %v6737 = vsub.s32 %v6644, %v6736
    %v6738 = vrot.slane %v6559, %v6737
    %v6739 = vsel %vm6649, %v6738, %v6734
    %v6740 = vlaneseq
    %v6741 = vshrl.u32 %v6740, 7
    %v6742 = vsub.s32 %v6651, %v6741
    %v6743 = vrot.slane %v6562, %v6742
    %v6744 = vsel %vm6656, %v6743, %v6739
    %v6745 = vlaneseq
    %v6746 = vshrl.u32 %v6745, 7
    %v6747 = vsub.s32 %v6658, %v6746
    %v6748 = vrot.slane %v6565, %v6747
    %v6749 = vsel %vm6663, %v6748, %v6744
    %v6750 = vlaneseq
    %v6751 = vshrl.u32 %v6750, 7
    %v6752 = vsub.s32 %v6665, %v6751
    %v6753 = vrot.slane %v6568, %v6752
    %v6754 = vsel %vm6670, %v6753, %v6749
    %v6755 = vlaneseq
    %v6756 = vshrl.u32 %v6755, 7
    %v6757 = vsub.s32 %v6672, %v6756
    %v6758 = vrot.slane %v6571, %v6757
    %v6759 = vsel %vm6677, %v6758, %v6754
    %v6760 = vlaneseq
    %v6761 = vshrl.u32 %v6760, 7
    %v6762 = vsub.s32 %v6679, %v6761
    %v6763 = vrot.slane %v6574, %v6762
    %v6764 = vsel %vm6684, %v6763, %v6759
    %v6765 = vcombine.low %v6685, %v6764
    %v6767 = vunpack.c.l.s4 1966171168
    %v6768 = vunpack.c.0.s8 %v6767
    %v6769 = vlaneseq
    %v6770 = vshrl.u32 %v6769, 7
    %v6771 = vsub.s32 %v6768, %v6770
    %v6772 = vrot.slane %v6765, %v6771
    %v6774 = vunpack.c.l.s4 1966171168
    %v6775 = vunpack.c.0.s8 %v6774
    %v6776 = vlaneseq
    %v6777 = vshrl.u32 %v6776, 7
    %v6778 = vsub.s32 %v6775, %v6777
    %v6779 = vrot.slane %v6772, %v6778
    %v6781 = vlaneseq
    %vm6782 = vcmp.ge.s32.totalorder %v6781, 0
    %vm6783 = vcmp.lt.s32.totalorder %v6781, 256
    %vm6784 = vmand %vm6782, %vm6783
    %6785 = vst.msk [vmem:[#allocation11] sm:$0x3] %vm6784, %v6779
    // Predicated region
    $region54: #{tpu_custom_call.1} parent=1 // pred_check
      _
    $region55: #{tpu_custom_call.1} parent=1 // pred_check_branch
      %6787 = sbr.rel (0) target = $region57
    $region56: #{tpu_custom_call.1} parent=1 // pred_region
      %s6789 = ssub.s32 32, 32
      %6790 = vsyncadd [#allocation5], %s6789
      %s6792 = sshll.u32 [#allocation11], 4
      %s6793 = int_to_ptr.vmem [resolvable:$true] %s6792
      %6795 = dma.vmem_to_hbm [thread:$0]  %s6793, 32, %s9, [#allocation5]
    $region57: #{tpu_custom_call.1} parent=1 // pred_fallthru
      _
    // Predicated region
    $region58: #{tpu_custom_call.1} parent=1 // pred_check
      _
    $region59: #{tpu_custom_call.1} parent=1 // pred_check_branch
      %6797 = sbr.rel (0) target = $region61
    $region60: #{tpu_custom_call.1} parent=1 // pred_region
      %6798 = dma.done [#allocation5], 32
    $region61: #{tpu_custom_call.1} parent=1 // pred_fallthru
      _
    %6799 = vsyncpa [#allocation4], 1
    %6800 = vsyncpa [#allocation7], 1
    %6801 = vsyncpa [#allocation10], 1
    %6802 = vsyncpa [#allocation5], 1

</llo_original>
